<compile_context>
chip_gen: v7x
topology: tpu7x:2x2x1
jax: 0.10.0
libtpu: 0.0.40
codegen_flags: <defaults>
</compile_context>

<pallas_src>
import jax
import jax.numpy as jnp
import numpy as np
from jax.experimental import pallas as pl
from jax.experimental.pallas import tpu as pltpu


# --------------------------------------------------------------------------
# Fused kernel: one grid step == one image, end to end.
# --------------------------------------------------------------------------
def cnn_fused_kernel(x_ref,
                     s1_ref, t1e_ref, t1o_ref, p1_ref, b1_ref,
                     s2_ref, t2e_ref, t2o_ref, p2_ref, b2_ref,
                     s3_ref, t3_ref, b3_ref,
                     wf1_ref, bf1_ref, wf2_ref, bf2_ref,
                     out_ref):
    f32 = jnp.float32

    def conv_relu_pool(a, s_ref, te_ref, to_ref, p_ref, b_ref):
        # a: (H, W*Cin).  Conv(3x3, stride 2) + bias + ReLU + MaxPool(2x2, s=2).
        ho = s_ref.shape[1]
        n_out = te_ref.shape[2]                      # Wp * Cout (lane-dense)
        acc_e = jnp.zeros((ho, n_out), f32)
        acc_o = jnp.zeros((ho, n_out), f32)
        for ki in range(3):                          # static unroll
            r = jnp.dot(s_ref[ki], a, preferred_element_type=f32)   # row select (stride 2)
            acc_e = acc_e + jnp.dot(r, te_ref[ki], preferred_element_type=f32)
            acc_o = acc_o + jnp.dot(r, to_ref[ki], preferred_element_type=f32)
        b = b_ref[...]
        # bias + ReLU, then horizontal pool (max over even/odd conv columns).
        m = jnp.maximum(jnp.maximum(acc_e + b, 0.0), jnp.maximum(acc_o + b, 0.0))
        # vertical pool: one-hot row-pair selection + elementwise max.
        return jnp.maximum(jnp.dot(p_ref[0], m, preferred_element_type=f32),
                           jnp.dot(p_ref[1], m, preferred_element_type=f32))

    a = x_ref[0]                                                       # (64, 64) = (H, W*Cin)
    a = conv_relu_pool(a, s1_ref, t1e_ref, t1o_ref, p1_ref, b1_ref)    # (15, 15*16)
    a = conv_relu_pool(a, s2_ref, t2e_ref, t2o_ref, p2_ref, b2_ref)    # (3, 3*32)

    # conv3 (stride 2, no pool) + ReLU; Dropout(0.3) == identity in eval mode.
    acc = jnp.zeros((1, t3_ref.shape[2]), f32)
    for ki in range(3):
        r = jnp.dot(s3_ref[ki], a, preferred_element_type=f32)         # (1, 96)
        acc = acc + jnp.dot(r, t3_ref[ki], preferred_element_type=f32)
    feats = jnp.maximum(acc + b3_ref[...], 0.0)                        # (1, 64) == torch flatten order

    # Linear(64->128) + ReLU + (Dropout identity) + Linear(128->4) + Softmax.
    h = jnp.maximum(jnp.dot(feats, wf1_ref[...], preferred_element_type=f32)
                    + bf1_ref[...], 0.0)
    logits = jnp.dot(h, wf2_ref[...], preferred_element_type=f32) + bf2_ref[...]
    z = jnp.exp(logits - jnp.max(logits, axis=-1, keepdims=True))
    inv = pl.reciprocal(jnp.sum(z, axis=-1, keepdims=True), approx=True)
    out_ref[0] = z * inv


# --------------------------------------------------------------------------
# Host-side, one-time weight repacking (numpy; done outside jit).
# --------------------------------------------------------------------------
def _sel(rows_out, cols_in, offset, stride):
    m = np.zeros((rows_out, cols_in), np.float32)
    m[np.arange(rows_out), stride * np.arange(rows_out) + offset] = 1.0
    return m


def _row_select(ho, h):            # (3, Ho, H): S[ki][i, 2i+ki] = 1
    return np.stack([_sel(ho, h, ki, 2) for ki in range(3)])


def _pool_select(hp, ho):          # (2, Hp, Ho): P[s][ip, 2ip+s] = 1
    return np.stack([_sel(hp, ho, s, 2) for s in range(2)])


def _col_weight(wgt, w_spatial, out_cols, stride=2):
    # wgt: (Cout, Cin, 3, 3) -> (3, W*Cin, len(out_cols)*Cout); column block
    # `slot` (conv output column j = out_cols[slot]) sums the kernel taps placed
    # at input columns w = stride*j + kj.
    cout, cin, kh, kw = wgt.shape
    T = np.zeros((kh, w_spatial * cin, len(out_cols) * cout), np.float32)
    for ki in range(kh):
        for slot, j in enumerate(out_cols):
            for kj in range(kw):
                w = stride * j + kj
                if w < w_spatial:
                    T[ki, w * cin:(w + 1) * cin,
                      slot * cout:(slot + 1) * cout] += wgt[:, :, ki, kj].T
    return T


def prepare_params(params, img_hw=(64, 64)):
    """Repack conv weights into row-select / Toeplitz-column matrices (one-time)."""
    H, W = img_hw
    w1 = np.asarray(params["w1"], np.float32); b1 = np.asarray(params["b1"], np.float32)
    w2 = np.asarray(params["w2"], np.float32); b2 = np.asarray(params["b2"], np.float32)
    w3 = np.asarray(params["w3"], np.float32); b3 = np.asarray(params["b3"], np.float32)

    ho1, wo1 = (H - 3) // 2 + 1, (W - 3) // 2 + 1        # 31, 31
    hp1, wp1 = ho1 // 2, wo1 // 2                        # 15, 15
    ho2, wo2 = (hp1 - 3) // 2 + 1, (wp1 - 3) // 2 + 1    # 7, 7
    hp2, wp2 = ho2 // 2, wo2 // 2                        # 3, 3
    ho3, wo3 = (hp2 - 3) // 2 + 1, (wp2 - 3) // 2 + 1    # 1, 1
    assert ho3 == 1 and wo3 == 1, "flatten layout assumes 1x1 conv3 output (64x64 input)"
    assert params["wf1"].shape[0] == w3.shape[0] * ho3 * wo3

    prep = dict(
        s1=_row_select(ho1, H),
        t1e=_col_weight(w1, W, [2 * j for j in range(wp1)]),
        t1o=_col_weight(w1, W, [2 * j + 1 for j in range(wp1)]),
        p1=_pool_select(hp1, ho1),
        b1=np.tile(b1, wp1).reshape(1, -1),
        s2=_row_select(ho2, hp1),
        t2e=_col_weight(w2, wp1, [2 * j for j in range(wp2)]),
        t2o=_col_weight(w2, wp1, [2 * j + 1 for j in range(wp2)]),
        p2=_pool_select(hp2, ho2),
        b2=np.tile(b2, wp2).reshape(1, -1),
        s3=_row_select(ho3, hp2),
        t3=_col_weight(w3, wp2, list(range(wo3))),
        b3=np.tile(b3, wo3).reshape(1, -1),
        wf1=np.asarray(params["wf1"], np.float32),
        bf1=np.asarray(params["bf1"], np.float32).reshape(1, -1),
        wf2=np.asarray(params["wf2"], np.float32),
        bf2=np.asarray(params["bf2"], np.float32).reshape(1, -1),
    )
    return {k: jnp.asarray(v) for k, v in prep.items()}


# --------------------------------------------------------------------------
# Wrapper: single pallas_call over grid=(batch,).
# --------------------------------------------------------------------------
def cnn_forward(x_nchw, prep):
    B, C, H, W = x_nchw.shape
    # only wrapper op on activations: NCHW -> (B, H, W*Cin); for Cin=1 it is a pure reshape.
    x_hw = jnp.transpose(x_nchw, (0, 2, 3, 1)).reshape(B, H, W * C)
    n_cls = prep["bf2"].shape[-1]

    operands = (x_hw,
                prep["s1"], prep["t1e"], prep["t1o"], prep["p1"], prep["b1"],
                prep["s2"], prep["t2e"], prep["t2o"], prep["p2"], prep["b2"],
                prep["s3"], prep["t3"], prep["b3"],
                prep["wf1"], prep["bf1"], prep["wf2"], prep["bf2"])

    def const_spec(a):
        return pl.BlockSpec(a.shape, lambda b, nd=a.ndim: (0,) * nd)

    in_specs = ([pl.BlockSpec((1, H, W * C), lambda b: (b, 0, 0))]
                + [const_spec(a) for a in operands[1:]])

    out = pl.pallas_call(
        cnn_fused_kernel,
        out_shape=jax.ShapeDtypeStruct((B, 1, n_cls), jnp.float32),
        grid=(B,),
        in_specs=in_specs,
        out_specs=pl.BlockSpec((1, 1, n_cls), lambda b: (b, 0, 0)),
        compiler_params=pltpu.CompilerParams(dimension_semantics=("parallel",)),
    )(*operands)
    return out.reshape(B, n_cls)


# --------------------------------------------------------------------------
# Params + pure-JAX reference (for a numerical sanity check).
# --------------------------------------------------------------------------
def init_params(key):
    ks = jax.random.split(key, 10)
    s = 0.2
    return {
        "w1": jax.random.normal(ks[0], (16, 1, 3, 3), jnp.float32) * s,
        "b1": jax.random.normal(ks[1], (16,), jnp.float32) * s,
        "w2": jax.random.normal(ks[2], (32, 16, 3, 3), jnp.float32) * s,
        "b2": jax.random.normal(ks[3], (32,), jnp.float32) * s,
        "w3": jax.random.normal(ks[4], (64, 32, 3, 3), jnp.float32) * s,
        "b3": jax.random.normal(ks[5], (64,), jnp.float32) * s,
        # FC weights stored already transposed for x @ W: (in, out)
        "wf1": jax.random.normal(ks[6], (64, 128), jnp.float32) * s,
        "bf1": jax.random.normal(ks[7], (128,), jnp.float32) * s,
        "wf2": jax.random.normal(ks[8], (128, 4), jnp.float32) * s,
        "bf2": jax.random.normal(ks[9], (4,), jnp.float32) * s,
    }


def cnn_reference(x, params):
    hp = jax.lax.Precision.HIGHEST

    def conv(v, w, b):
        y = jax.lax.conv_general_dilated(
            v, w, window_strides=(2, 2), padding="VALID",
            dimension_numbers=("NCHW", "OIHW", "NCHW"), precision=hp)
        return y + b.reshape(1, -1, 1, 1)

    def pool(v):
        return jax.lax.reduce_window(v, -jnp.inf, jax.lax.max,
                                     (1, 1, 2, 2), (1, 1, 2, 2), "VALID")

    v = pool(jnp.maximum(conv(x, params["w1"], params["b1"]), 0.0))
    v = pool(jnp.maximum(conv(v, params["w2"], params["b2"]), 0.0))
    v = jnp.maximum(conv(v, params["w3"], params["b3"]), 0.0)
    f = v.reshape(v.shape[0], -1)
    h = jnp.maximum(jnp.dot(f, params["wf1"], precision=hp) + params["bf1"], 0.0)
    logits = jnp.dot(h, params["wf2"], precision=hp) + params["bf2"]
    return jax.nn.softmax(logits, axis=1)


if __name__ == "__main__":
    key = jax.random.PRNGKey(0)
    k_in, k_p = jax.random.split(key)
    # 64x64 input -> conv1: 31 -> pool: 15 -> conv2: 7 -> pool: 3 -> conv3: 1
    # flatten = 64 features (this fixes the LazyLinear in_features = 64)
    x = jax.random.normal(k_in, (2, 1, 64, 64), jnp.float32)
    params = init_params(k_p)

    prep = prepare_params(params, img_hw=(64, 64))   # one-time weight repacking, outside jit

    preds = jax.block_until_ready(jax.jit(cnn_forward)(x, prep))

    assert preds.shape == (2, 4)
    assert bool(jnp.all(jnp.abs(jnp.sum(preds, axis=1) - 1.0) < 5e-3))
    ref = jax.block_until_ready(jax.jit(cnn_reference)(x, params))
    assert bool(jnp.allclose(preds, ref, atol=5e-3)), (preds, ref)
    print("KERNEL_OK")
</pallas_src>

<mosaic_0001>
module attributes {stable_mosaic.version = 11 : i64} {
  func.func @cnn_fused_kernel(%arg0: i32, %arg1: memref<1x64x64xf32, #tpu.memory_space<vmem>>, %arg2: memref<3x31x64xf32, #tpu.memory_space<vmem>>, %arg3: memref<3x64x240xf32, #tpu.memory_space<vmem>>, %arg4: memref<3x64x240xf32, #tpu.memory_space<vmem>>, %arg5: memref<2x15x31xf32, #tpu.memory_space<vmem>>, %arg6: memref<1x240xf32, #tpu.memory_space<vmem>>, %arg7: memref<3x7x15xf32, #tpu.memory_space<vmem>>, %arg8: memref<3x240x96xf32, #tpu.memory_space<vmem>>, %arg9: memref<3x240x96xf32, #tpu.memory_space<vmem>>, %arg10: memref<2x3x7xf32, #tpu.memory_space<vmem>>, %arg11: memref<1x96xf32, #tpu.memory_space<vmem>>, %arg12: memref<3x1x3xf32, #tpu.memory_space<vmem>>, %arg13: memref<3x96x64xf32, #tpu.memory_space<vmem>>, %arg14: memref<1x64xf32, #tpu.memory_space<vmem>>, %arg15: memref<64x128xf32, #tpu.memory_space<vmem>>, %arg16: memref<1x128xf32, #tpu.memory_space<vmem>>, %arg17: memref<128x4xf32, #tpu.memory_space<vmem>>, %arg18: memref<1x4xf32, #tpu.memory_space<vmem>>, %arg19: memref<1x1x4xf32, #tpu.memory_space<vmem>>) attributes {dimension_semantics = [#tpu.dimension_semantics<parallel>], iteration_bounds = array<i64: 2>, scalar_prefetch = 0 : i64, scratch_operands = 0 : i64, tpu.core_type = #tpu.core_type<tc>, window_params = [{transform_indices = @transform_0, window_bounds = array<i64: 1, 64, 64>}, {pipeline_mode = #tpu.pipeline_mode<synchronous>, transform_indices = @transform_1, window_bounds = array<i64: 3, 31, 64>}, {pipeline_mode = #tpu.pipeline_mode<synchronous>, transform_indices = @transform_2, window_bounds = array<i64: 3, 64, 240>}, {pipeline_mode = #tpu.pipeline_mode<synchronous>, transform_indices = @transform_3, window_bounds = array<i64: 3, 64, 240>}, {pipeline_mode = #tpu.pipeline_mode<synchronous>, transform_indices = @transform_4, window_bounds = array<i64: 2, 15, 31>}, {pipeline_mode = #tpu.pipeline_mode<synchronous>, transform_indices = @transform_5, window_bounds = array<i64: 1, 240>}, {pipeline_mode = #tpu.pipeline_mode<synchronous>, transform_indices = @transform_6, window_bounds = array<i64: 3, 7, 15>}, {pipeline_mode = #tpu.pipeline_mode<synchronous>, transform_indices = @transform_7, window_bounds = array<i64: 3, 240, 96>}, {pipeline_mode = #tpu.pipeline_mode<synchronous>, transform_indices = @transform_8, window_bounds = array<i64: 3, 240, 96>}, {pipeline_mode = #tpu.pipeline_mode<synchronous>, transform_indices = @transform_9, window_bounds = array<i64: 2, 3, 7>}, {pipeline_mode = #tpu.pipeline_mode<synchronous>, transform_indices = @transform_10, window_bounds = array<i64: 1, 96>}, {pipeline_mode = #tpu.pipeline_mode<synchronous>, transform_indices = @transform_11, window_bounds = array<i64: 3, 1, 3>}, {pipeline_mode = #tpu.pipeline_mode<synchronous>, transform_indices = @transform_12, window_bounds = array<i64: 3, 96, 64>}, {pipeline_mode = #tpu.pipeline_mode<synchronous>, transform_indices = @transform_13, window_bounds = array<i64: 1, 64>}, {pipeline_mode = #tpu.pipeline_mode<synchronous>, transform_indices = @transform_14, window_bounds = array<i64: 64, 128>}, {pipeline_mode = #tpu.pipeline_mode<synchronous>, transform_indices = @transform_15, window_bounds = array<i64: 1, 128>}, {pipeline_mode = #tpu.pipeline_mode<synchronous>, transform_indices = @transform_16, window_bounds = array<i64: 128, 4>}, {pipeline_mode = #tpu.pipeline_mode<synchronous>, transform_indices = @transform_17, window_bounds = array<i64: 1, 4>}, {transform_indices = @transform_18, window_bounds = array<i64: 1, 1, 4>}]} {
    %c0 = arith.constant 0 : index
    %c0_0 = arith.constant 0 : index
    %c0_1 = arith.constant 0 : index
    %0 = vector.load %arg1[%c0, %c0_0, %c0_1] : memref<1x64x64xf32, #tpu.memory_space<vmem>>, vector<1x64x64xf32>
    %1 = vector.shape_cast %0 : vector<1x64x64xf32> to vector<64x64xf32>
    %cst = arith.constant 0.000000e+00 : f32
    %2 = vector.broadcast %cst : f32 to vector<31x240xf32>
    %cst_2 = arith.constant 0.000000e+00 : f32
    %3 = vector.broadcast %cst_2 : f32 to vector<31x240xf32>
    %c0_3 = arith.constant 0 : index
    %c0_4 = arith.constant 0 : index
    %c0_5 = arith.constant 0 : index
    %4 = vector.load %arg2[%c0_3, %c0_4, %c0_5] : memref<3x31x64xf32, #tpu.memory_space<vmem>>, vector<1x31x64xf32>
    %5 = vector.shape_cast %4 : vector<1x31x64xf32> to vector<31x64xf32>
    %cst_6 = arith.constant dense<0.000000e+00> : vector<31x64xf32>
    %6 = tpu.matmul %5, %1, %cst_6 {dimension_numbers = #tpu.dot_dimension_numbers<[1], [0], [0], [1], [0, 0, 1, 1], [], []>} : vector<31x64xf32>, vector<64x64xf32>, vector<31x64xf32> -> vector<31x64xf32>
    %c0_7 = arith.constant 0 : index
    %c0_8 = arith.constant 0 : index
    %c0_9 = arith.constant 0 : index
    %7 = vector.load %arg3[%c0_7, %c0_8, %c0_9] : memref<3x64x240xf32, #tpu.memory_space<vmem>>, vector<1x64x240xf32>
    %8 = vector.shape_cast %7 : vector<1x64x240xf32> to vector<64x240xf32>
    %cst_10 = arith.constant dense<0.000000e+00> : vector<31x240xf32>
    %9 = tpu.matmul %6, %8, %cst_10 {dimension_numbers = #tpu.dot_dimension_numbers<[1], [0], [0], [1], [0, 0, 1, 1], [], []>} : vector<31x64xf32>, vector<64x240xf32>, vector<31x240xf32> -> vector<31x240xf32>
    %10 = arith.addf %2, %9 : vector<31x240xf32>
    %c0_11 = arith.constant 0 : index
    %c0_12 = arith.constant 0 : index
    %c0_13 = arith.constant 0 : index
    %11 = vector.load %arg4[%c0_11, %c0_12, %c0_13] : memref<3x64x240xf32, #tpu.memory_space<vmem>>, vector<1x64x240xf32>
    %12 = vector.shape_cast %11 : vector<1x64x240xf32> to vector<64x240xf32>
    %cst_14 = arith.constant dense<0.000000e+00> : vector<31x240xf32>
    %13 = tpu.matmul %6, %12, %cst_14 {dimension_numbers = #tpu.dot_dimension_numbers<[1], [0], [0], [1], [0, 0, 1, 1], [], []>} : vector<31x64xf32>, vector<64x240xf32>, vector<31x240xf32> -> vector<31x240xf32>
    %14 = arith.addf %3, %13 : vector<31x240xf32>
    %c1 = arith.constant 1 : index
    %c0_15 = arith.constant 0 : index
    %c0_16 = arith.constant 0 : index
    %15 = vector.load %arg2[%c1, %c0_15, %c0_16] : memref<3x31x64xf32, #tpu.memory_space<vmem>>, vector<1x31x64xf32>
    %16 = vector.shape_cast %15 : vector<1x31x64xf32> to vector<31x64xf32>
    %cst_17 = arith.constant dense<0.000000e+00> : vector<31x64xf32>
    %17 = tpu.matmul %16, %1, %cst_17 {dimension_numbers = #tpu.dot_dimension_numbers<[1], [0], [0], [1], [0, 0, 1, 1], [], []>} : vector<31x64xf32>, vector<64x64xf32>, vector<31x64xf32> -> vector<31x64xf32>
    %c1_18 = arith.constant 1 : index
    %c0_19 = arith.constant 0 : index
    %c0_20 = arith.constant 0 : index
    %18 = vector.load %arg3[%c1_18, %c0_19, %c0_20] : memref<3x64x240xf32, #tpu.memory_space<vmem>>, vector<1x64x240xf32>
    %19 = vector.shape_cast %18 : vector<1x64x240xf32> to vector<64x240xf32>
    %cst_21 = arith.constant dense<0.000000e+00> : vector<31x240xf32>
    %20 = tpu.matmul %17, %19, %cst_21 {dimension_numbers = #tpu.dot_dimension_numbers<[1], [0], [0], [1], [0, 0, 1, 1], [], []>} : vector<31x64xf32>, vector<64x240xf32>, vector<31x240xf32> -> vector<31x240xf32>
    %21 = arith.addf %10, %20 : vector<31x240xf32>
    %c1_22 = arith.constant 1 : index
    %c0_23 = arith.constant 0 : index
    %c0_24 = arith.constant 0 : index
    %22 = vector.load %arg4[%c1_22, %c0_23, %c0_24] : memref<3x64x240xf32, #tpu.memory_space<vmem>>, vector<1x64x240xf32>
    %23 = vector.shape_cast %22 : vector<1x64x240xf32> to vector<64x240xf32>
    %cst_25 = arith.constant dense<0.000000e+00> : vector<31x240xf32>
    %24 = tpu.matmul %17, %23, %cst_25 {dimension_numbers = #tpu.dot_dimension_numbers<[1], [0], [0], [1], [0, 0, 1, 1], [], []>} : vector<31x64xf32>, vector<64x240xf32>, vector<31x240xf32> -> vector<31x240xf32>
    %25 = arith.addf %14, %24 : vector<31x240xf32>
    %c2 = arith.constant 2 : index
    %c0_26 = arith.constant 0 : index
    %c0_27 = arith.constant 0 : index
    %26 = vector.load %arg2[%c2, %c0_26, %c0_27] : memref<3x31x64xf32, #tpu.memory_space<vmem>>, vector<1x31x64xf32>
    %27 = vector.shape_cast %26 : vector<1x31x64xf32> to vector<31x64xf32>
    %cst_28 = arith.constant dense<0.000000e+00> : vector<31x64xf32>
    %28 = tpu.matmul %27, %1, %cst_28 {dimension_numbers = #tpu.dot_dimension_numbers<[1], [0], [0], [1], [0, 0, 1, 1], [], []>} : vector<31x64xf32>, vector<64x64xf32>, vector<31x64xf32> -> vector<31x64xf32>
    %c2_29 = arith.constant 2 : index
    %c0_30 = arith.constant 0 : index
    %c0_31 = arith.constant 0 : index
    %29 = vector.load %arg3[%c2_29, %c0_30, %c0_31] : memref<3x64x240xf32, #tpu.memory_space<vmem>>, vector<1x64x240xf32>
    %30 = vector.shape_cast %29 : vector<1x64x240xf32> to vector<64x240xf32>
    %cst_32 = arith.constant dense<0.000000e+00> : vector<31x240xf32>
    %31 = tpu.matmul %28, %30, %cst_32 {dimension_numbers = #tpu.dot_dimension_numbers<[1], [0], [0], [1], [0, 0, 1, 1], [], []>} : vector<31x64xf32>, vector<64x240xf32>, vector<31x240xf32> -> vector<31x240xf32>
    %32 = arith.addf %21, %31 : vector<31x240xf32>
    %c2_33 = arith.constant 2 : index
    %c0_34 = arith.constant 0 : index
    %c0_35 = arith.constant 0 : index
    %33 = vector.load %arg4[%c2_33, %c0_34, %c0_35] : memref<3x64x240xf32, #tpu.memory_space<vmem>>, vector<1x64x240xf32>
    %34 = vector.shape_cast %33 : vector<1x64x240xf32> to vector<64x240xf32>
    %cst_36 = arith.constant dense<0.000000e+00> : vector<31x240xf32>
    %35 = tpu.matmul %28, %34, %cst_36 {dimension_numbers = #tpu.dot_dimension_numbers<[1], [0], [0], [1], [0, 0, 1, 1], [], []>} : vector<31x64xf32>, vector<64x240xf32>, vector<31x240xf32> -> vector<31x240xf32>
    %36 = arith.addf %25, %35 : vector<31x240xf32>
    %c0_37 = arith.constant 0 : index
    %c0_38 = arith.constant 0 : index
    %37 = vector.load %arg6[%c0_37, %c0_38] : memref<1x240xf32, #tpu.memory_space<vmem>>, vector<1x240xf32>
    %38 = vector.broadcast %37 : vector<1x240xf32> to vector<31x240xf32>
    %39 = arith.addf %32, %38 : vector<31x240xf32>
    %cst_39 = arith.constant 0.000000e+00 : f32
    %40 = vector.broadcast %cst_39 : f32 to vector<31x240xf32>
    %41 = arith.maximumf %39, %40 : vector<31x240xf32>
    %42 = vector.broadcast %37 : vector<1x240xf32> to vector<31x240xf32>
    %43 = arith.addf %36, %42 : vector<31x240xf32>
    %cst_40 = arith.constant 0.000000e+00 : f32
    %44 = vector.broadcast %cst_40 : f32 to vector<31x240xf32>
    %45 = arith.maximumf %43, %44 : vector<31x240xf32>
    %46 = arith.maximumf %41, %45 : vector<31x240xf32>
    %c0_41 = arith.constant 0 : index
    %c0_42 = arith.constant 0 : index
    %c0_43 = arith.constant 0 : index
    %47 = vector.load %arg5[%c0_41, %c0_42, %c0_43] : memref<2x15x31xf32, #tpu.memory_space<vmem>>, vector<1x15x31xf32>
    %48 = vector.shape_cast %47 : vector<1x15x31xf32> to vector<15x31xf32>
    %cst_44 = arith.constant dense<0.000000e+00> : vector<15x240xf32>
    %49 = tpu.matmul %48, %46, %cst_44 {dimension_numbers = #tpu.dot_dimension_numbers<[1], [0], [0], [1], [0, 0, 1, 1], [], []>} : vector<15x31xf32>, vector<31x240xf32>, vector<15x240xf32> -> vector<15x240xf32>
    %c1_45 = arith.constant 1 : index
    %c0_46 = arith.constant 0 : index
    %c0_47 = arith.constant 0 : index
    %50 = vector.load %arg5[%c1_45, %c0_46, %c0_47] : memref<2x15x31xf32, #tpu.memory_space<vmem>>, vector<1x15x31xf32>
    %51 = vector.shape_cast %50 : vector<1x15x31xf32> to vector<15x31xf32>
    %cst_48 = arith.constant dense<0.000000e+00> : vector<15x240xf32>
    %52 = tpu.matmul %51, %46, %cst_48 {dimension_numbers = #tpu.dot_dimension_numbers<[1], [0], [0], [1], [0, 0, 1, 1], [], []>} : vector<15x31xf32>, vector<31x240xf32>, vector<15x240xf32> -> vector<15x240xf32>
    %53 = arith.maximumf %49, %52 : vector<15x240xf32>
    %cst_49 = arith.constant 0.000000e+00 : f32
    %54 = vector.broadcast %cst_49 : f32 to vector<7x96xf32>
    %cst_50 = arith.constant 0.000000e+00 : f32
    %55 = vector.broadcast %cst_50 : f32 to vector<7x96xf32>
    %c0_51 = arith.constant 0 : index
    %c0_52 = arith.constant 0 : index
    %c0_53 = arith.constant 0 : index
    %56 = vector.load %arg7[%c0_51, %c0_52, %c0_53] : memref<3x7x15xf32, #tpu.memory_space<vmem>>, vector<1x7x15xf32>
    %57 = vector.shape_cast %56 : vector<1x7x15xf32> to vector<7x15xf32>
    %cst_54 = arith.constant dense<0.000000e+00> : vector<7x240xf32>
    %58 = tpu.matmul %57, %53, %cst_54 {dimension_numbers = #tpu.dot_dimension_numbers<[1], [0], [0], [1], [0, 0, 1, 1], [], []>} : vector<7x15xf32>, vector<15x240xf32>, vector<7x240xf32> -> vector<7x240xf32>
    %c0_55 = arith.constant 0 : index
    %c0_56 = arith.constant 0 : index
    %c0_57 = arith.constant 0 : index
    %59 = vector.load %arg8[%c0_55, %c0_56, %c0_57] : memref<3x240x96xf32, #tpu.memory_space<vmem>>, vector<1x240x96xf32>
    %60 = vector.shape_cast %59 : vector<1x240x96xf32> to vector<240x96xf32>
    %cst_58 = arith.constant dense<0.000000e+00> : vector<7x96xf32>
    %61 = tpu.matmul %58, %60, %cst_58 {dimension_numbers = #tpu.dot_dimension_numbers<[1], [0], [0], [1], [0, 0, 1, 1], [], []>} : vector<7x240xf32>, vector<240x96xf32>, vector<7x96xf32> -> vector<7x96xf32>
    %62 = arith.addf %54, %61 : vector<7x96xf32>
    %c0_59 = arith.constant 0 : index
    %c0_60 = arith.constant 0 : index
    %c0_61 = arith.constant 0 : index
    %63 = vector.load %arg9[%c0_59, %c0_60, %c0_61] : memref<3x240x96xf32, #tpu.memory_space<vmem>>, vector<1x240x96xf32>
    %64 = vector.shape_cast %63 : vector<1x240x96xf32> to vector<240x96xf32>
    %cst_62 = arith.constant dense<0.000000e+00> : vector<7x96xf32>
    %65 = tpu.matmul %58, %64, %cst_62 {dimension_numbers = #tpu.dot_dimension_numbers<[1], [0], [0], [1], [0, 0, 1, 1], [], []>} : vector<7x240xf32>, vector<240x96xf32>, vector<7x96xf32> -> vector<7x96xf32>
    %66 = arith.addf %55, %65 : vector<7x96xf32>
    %c1_63 = arith.constant 1 : index
    %c0_64 = arith.constant 0 : index
    %c0_65 = arith.constant 0 : index
    %67 = vector.load %arg7[%c1_63, %c0_64, %c0_65] : memref<3x7x15xf32, #tpu.memory_space<vmem>>, vector<1x7x15xf32>
    %68 = vector.shape_cast %67 : vector<1x7x15xf32> to vector<7x15xf32>
    %cst_66 = arith.constant dense<0.000000e+00> : vector<7x240xf32>
    %69 = tpu.matmul %68, %53, %cst_66 {dimension_numbers = #tpu.dot_dimension_numbers<[1], [0], [0], [1], [0, 0, 1, 1], [], []>} : vector<7x15xf32>, vector<15x240xf32>, vector<7x240xf32> -> vector<7x240xf32>
    %c1_67 = arith.constant 1 : index
    %c0_68 = arith.constant 0 : index
    %c0_69 = arith.constant 0 : index
    %70 = vector.load %arg8[%c1_67, %c0_68, %c0_69] : memref<3x240x96xf32, #tpu.memory_space<vmem>>, vector<1x240x96xf32>
    %71 = vector.shape_cast %70 : vector<1x240x96xf32> to vector<240x96xf32>
    %cst_70 = arith.constant dense<0.000000e+00> : vector<7x96xf32>
    %72 = tpu.matmul %69, %71, %cst_70 {dimension_numbers = #tpu.dot_dimension_numbers<[1], [0], [0], [1], [0, 0, 1, 1], [], []>} : vector<7x240xf32>, vector<240x96xf32>, vector<7x96xf32> -> vector<7x96xf32>
    %73 = arith.addf %62, %72 : vector<7x96xf32>
    %c1_71 = arith.constant 1 : index
    %c0_72 = arith.constant 0 : index
    %c0_73 = arith.constant 0 : index
    %74 = vector.load %arg9[%c1_71, %c0_72, %c0_73] : memref<3x240x96xf32, #tpu.memory_space<vmem>>, vector<1x240x96xf32>
    %75 = vector.shape_cast %74 : vector<1x240x96xf32> to vector<240x96xf32>
    %cst_74 = arith.constant dense<0.000000e+00> : vector<7x96xf32>
    %76 = tpu.matmul %69, %75, %cst_74 {dimension_numbers = #tpu.dot_dimension_numbers<[1], [0], [0], [1], [0, 0, 1, 1], [], []>} : vector<7x240xf32>, vector<240x96xf32>, vector<7x96xf32> -> vector<7x96xf32>
    %77 = arith.addf %66, %76 : vector<7x96xf32>
    %c2_75 = arith.constant 2 : index
    %c0_76 = arith.constant 0 : index
    %c0_77 = arith.constant 0 : index
    %78 = vector.load %arg7[%c2_75, %c0_76, %c0_77] : memref<3x7x15xf32, #tpu.memory_space<vmem>>, vector<1x7x15xf32>
    %79 = vector.shape_cast %78 : vector<1x7x15xf32> to vector<7x15xf32>
    %cst_78 = arith.constant dense<0.000000e+00> : vector<7x240xf32>
    %80 = tpu.matmul %79, %53, %cst_78 {dimension_numbers = #tpu.dot_dimension_numbers<[1], [0], [0], [1], [0, 0, 1, 1], [], []>} : vector<7x15xf32>, vector<15x240xf32>, vector<7x240xf32> -> vector<7x240xf32>
    %c2_79 = arith.constant 2 : index
    %c0_80 = arith.constant 0 : index
    %c0_81 = arith.constant 0 : index
    %81 = vector.load %arg8[%c2_79, %c0_80, %c0_81] : memref<3x240x96xf32, #tpu.memory_space<vmem>>, vector<1x240x96xf32>
    %82 = vector.shape_cast %81 : vector<1x240x96xf32> to vector<240x96xf32>
    %cst_82 = arith.constant dense<0.000000e+00> : vector<7x96xf32>
    %83 = tpu.matmul %80, %82, %cst_82 {dimension_numbers = #tpu.dot_dimension_numbers<[1], [0], [0], [1], [0, 0, 1, 1], [], []>} : vector<7x240xf32>, vector<240x96xf32>, vector<7x96xf32> -> vector<7x96xf32>
    %84 = arith.addf %73, %83 : vector<7x96xf32>
    %c2_83 = arith.constant 2 : index
    %c0_84 = arith.constant 0 : index
    %c0_85 = arith.constant 0 : index
    %85 = vector.load %arg9[%c2_83, %c0_84, %c0_85] : memref<3x240x96xf32, #tpu.memory_space<vmem>>, vector<1x240x96xf32>
    %86 = vector.shape_cast %85 : vector<1x240x96xf32> to vector<240x96xf32>
    %cst_86 = arith.constant dense<0.000000e+00> : vector<7x96xf32>
    %87 = tpu.matmul %80, %86, %cst_86 {dimension_numbers = #tpu.dot_dimension_numbers<[1], [0], [0], [1], [0, 0, 1, 1], [], []>} : vector<7x240xf32>, vector<240x96xf32>, vector<7x96xf32> -> vector<7x96xf32>
    %88 = arith.addf %77, %87 : vector<7x96xf32>
    %c0_87 = arith.constant 0 : index
    %c0_88 = arith.constant 0 : index
    %89 = vector.load %arg11[%c0_87, %c0_88] : memref<1x96xf32, #tpu.memory_space<vmem>>, vector<1x96xf32>
    %90 = vector.broadcast %89 : vector<1x96xf32> to vector<7x96xf32>
    %91 = arith.addf %84, %90 : vector<7x96xf32>
    %cst_89 = arith.constant 0.000000e+00 : f32
    %92 = vector.broadcast %cst_89 : f32 to vector<7x96xf32>
    %93 = arith.maximumf %91, %92 : vector<7x96xf32>
    %94 = vector.broadcast %89 : vector<1x96xf32> to vector<7x96xf32>
    %95 = arith.addf %88, %94 : vector<7x96xf32>
    %cst_90 = arith.constant 0.000000e+00 : f32
    %96 = vector.broadcast %cst_90 : f32 to vector<7x96xf32>
    %97 = arith.maximumf %95, %96 : vector<7x96xf32>
    %98 = arith.maximumf %93, %97 : vector<7x96xf32>
    %c0_91 = arith.constant 0 : index
    %c0_92 = arith.constant 0 : index
    %c0_93 = arith.constant 0 : index
    %99 = vector.load %arg10[%c0_91, %c0_92, %c0_93] : memref<2x3x7xf32, #tpu.memory_space<vmem>>, vector<1x3x7xf32>
    %100 = vector.shape_cast %99 : vector<1x3x7xf32> to vector<3x7xf32>
    %cst_94 = arith.constant dense<0.000000e+00> : vector<3x96xf32>
    %101 = tpu.matmul %100, %98, %cst_94 {dimension_numbers = #tpu.dot_dimension_numbers<[1], [0], [0], [1], [0, 0, 1, 1], [], []>} : vector<3x7xf32>, vector<7x96xf32>, vector<3x96xf32> -> vector<3x96xf32>
    %c1_95 = arith.constant 1 : index
    %c0_96 = arith.constant 0 : index
    %c0_97 = arith.constant 0 : index
    %102 = vector.load %arg10[%c1_95, %c0_96, %c0_97] : memref<2x3x7xf32, #tpu.memory_space<vmem>>, vector<1x3x7xf32>
    %103 = vector.shape_cast %102 : vector<1x3x7xf32> to vector<3x7xf32>
    %cst_98 = arith.constant dense<0.000000e+00> : vector<3x96xf32>
    %104 = tpu.matmul %103, %98, %cst_98 {dimension_numbers = #tpu.dot_dimension_numbers<[1], [0], [0], [1], [0, 0, 1, 1], [], []>} : vector<3x7xf32>, vector<7x96xf32>, vector<3x96xf32> -> vector<3x96xf32>
    %105 = arith.maximumf %101, %104 : vector<3x96xf32>
    %cst_99 = arith.constant 0.000000e+00 : f32
    %106 = vector.broadcast %cst_99 : f32 to vector<1x64xf32>
    %c0_100 = arith.constant 0 : index
    %c0_101 = arith.constant 0 : index
    %c0_102 = arith.constant 0 : index
    %107 = vector.load %arg12[%c0_100, %c0_101, %c0_102] : memref<3x1x3xf32, #tpu.memory_space<vmem>>, vector<1x1x3xf32>
    %108 = vector.shape_cast %107 : vector<1x1x3xf32> to vector<1x3xf32>
    %cst_103 = arith.constant dense<0.000000e+00> : vector<1x96xf32>
    %109 = tpu.matmul %108, %105, %cst_103 {dimension_numbers = #tpu.dot_dimension_numbers<[1], [0], [0], [1], [0, 0, 1, 1], [], []>} : vector<1x3xf32>, vector<3x96xf32>, vector<1x96xf32> -> vector<1x96xf32>
    %c0_104 = arith.constant 0 : index
    %c0_105 = arith.constant 0 : index
    %c0_106 = arith.constant 0 : index
    %110 = vector.load %arg13[%c0_104, %c0_105, %c0_106] : memref<3x96x64xf32, #tpu.memory_space<vmem>>, vector<1x96x64xf32>
    %111 = vector.shape_cast %110 : vector<1x96x64xf32> to vector<96x64xf32>
    %cst_107 = arith.constant dense<0.000000e+00> : vector<1x64xf32>
    %112 = tpu.matmul %109, %111, %cst_107 {dimension_numbers = #tpu.dot_dimension_numbers<[1], [0], [0], [1], [0, 0, 1, 1], [], []>} : vector<1x96xf32>, vector<96x64xf32>, vector<1x64xf32> -> vector<1x64xf32>
    %113 = arith.addf %106, %112 : vector<1x64xf32>
    %c1_108 = arith.constant 1 : index
    %c0_109 = arith.constant 0 : index
    %c0_110 = arith.constant 0 : index
    %114 = vector.load %arg12[%c1_108, %c0_109, %c0_110] : memref<3x1x3xf32, #tpu.memory_space<vmem>>, vector<1x1x3xf32>
    %115 = vector.shape_cast %114 : vector<1x1x3xf32> to vector<1x3xf32>
    %cst_111 = arith.constant dense<0.000000e+00> : vector<1x96xf32>
    %116 = tpu.matmul %115, %105, %cst_111 {dimension_numbers = #tpu.dot_dimension_numbers<[1], [0], [0], [1], [0, 0, 1, 1], [], []>} : vector<1x3xf32>, vector<3x96xf32>, vector<1x96xf32> -> vector<1x96xf32>
    %c1_112 = arith.constant 1 : index
    %c0_113 = arith.constant 0 : index
    %c0_114 = arith.constant 0 : index
    %117 = vector.load %arg13[%c1_112, %c0_113, %c0_114] : memref<3x96x64xf32, #tpu.memory_space<vmem>>, vector<1x96x64xf32>
    %118 = vector.shape_cast %117 : vector<1x96x64xf32> to vector<96x64xf32>
    %cst_115 = arith.constant dense<0.000000e+00> : vector<1x64xf32>
    %119 = tpu.matmul %116, %118, %cst_115 {dimension_numbers = #tpu.dot_dimension_numbers<[1], [0], [0], [1], [0, 0, 1, 1], [], []>} : vector<1x96xf32>, vector<96x64xf32>, vector<1x64xf32> -> vector<1x64xf32>
    %120 = arith.addf %113, %119 : vector<1x64xf32>
    %c2_116 = arith.constant 2 : index
    %c0_117 = arith.constant 0 : index
    %c0_118 = arith.constant 0 : index
    %121 = vector.load %arg12[%c2_116, %c0_117, %c0_118] : memref<3x1x3xf32, #tpu.memory_space<vmem>>, vector<1x1x3xf32>
    %122 = vector.shape_cast %121 : vector<1x1x3xf32> to vector<1x3xf32>
    %cst_119 = arith.constant dense<0.000000e+00> : vector<1x96xf32>
    %123 = tpu.matmul %122, %105, %cst_119 {dimension_numbers = #tpu.dot_dimension_numbers<[1], [0], [0], [1], [0, 0, 1, 1], [], []>} : vector<1x3xf32>, vector<3x96xf32>, vector<1x96xf32> -> vector<1x96xf32>
    %c2_120 = arith.constant 2 : index
    %c0_121 = arith.constant 0 : index
    %c0_122 = arith.constant 0 : index
    %124 = vector.load %arg13[%c2_120, %c0_121, %c0_122] : memref<3x96x64xf32, #tpu.memory_space<vmem>>, vector<1x96x64xf32>
    %125 = vector.shape_cast %124 : vector<1x96x64xf32> to vector<96x64xf32>
    %cst_123 = arith.constant dense<0.000000e+00> : vector<1x64xf32>
    %126 = tpu.matmul %123, %125, %cst_123 {dimension_numbers = #tpu.dot_dimension_numbers<[1], [0], [0], [1], [0, 0, 1, 1], [], []>} : vector<1x96xf32>, vector<96x64xf32>, vector<1x64xf32> -> vector<1x64xf32>
    %127 = arith.addf %120, %126 : vector<1x64xf32>
    %c0_124 = arith.constant 0 : index
    %c0_125 = arith.constant 0 : index
    %128 = vector.load %arg14[%c0_124, %c0_125] : memref<1x64xf32, #tpu.memory_space<vmem>>, vector<1x64xf32>
    %129 = arith.addf %127, %128 : vector<1x64xf32>
    %cst_126 = arith.constant 0.000000e+00 : f32
    %130 = vector.broadcast %cst_126 : f32 to vector<1x64xf32>
    %131 = arith.maximumf %129, %130 : vector<1x64xf32>
    %c0_127 = arith.constant 0 : index
    %c0_128 = arith.constant 0 : index
    %132 = vector.load %arg15[%c0_127, %c0_128] : memref<64x128xf32, #tpu.memory_space<vmem>>, vector<64x128xf32>
    %cst_129 = arith.constant dense<0.000000e+00> : vector<1x128xf32>
    %133 = tpu.matmul %131, %132, %cst_129 {dimension_numbers = #tpu.dot_dimension_numbers<[1], [0], [0], [1], [0, 0, 1, 1], [], []>} : vector<1x64xf32>, vector<64x128xf32>, vector<1x128xf32> -> vector<1x128xf32>
    %c0_130 = arith.constant 0 : index
    %c0_131 = arith.constant 0 : index
    %134 = vector.load %arg16[%c0_130, %c0_131] : memref<1x128xf32, #tpu.memory_space<vmem>>, vector<1x128xf32>
    %135 = arith.addf %133, %134 : vector<1x128xf32>
    %cst_132 = arith.constant 0.000000e+00 : f32
    %136 = vector.broadcast %cst_132 : f32 to vector<1x128xf32>
    %137 = arith.maximumf %135, %136 : vector<1x128xf32>
    %c0_133 = arith.constant 0 : index
    %c0_134 = arith.constant 0 : index
    %138 = vector.load %arg17[%c0_133, %c0_134] : memref<128x4xf32, #tpu.memory_space<vmem>>, vector<128x4xf32>
    %cst_135 = arith.constant dense<0.000000e+00> : vector<1x4xf32>
    %139 = tpu.matmul %137, %138, %cst_135 {dimension_numbers = #tpu.dot_dimension_numbers<[1], [0], [0], [1], [0, 0, 1, 1], [], []>} : vector<1x128xf32>, vector<128x4xf32>, vector<1x4xf32> -> vector<1x4xf32>
    %c0_136 = arith.constant 0 : index
    %c0_137 = arith.constant 0 : index
    %140 = vector.load %arg18[%c0_136, %c0_137] : memref<1x4xf32, #tpu.memory_space<vmem>>, vector<1x4xf32>
    %141 = arith.addf %139, %140 : vector<1x4xf32>
    %cst_138 = arith.constant dense<0xFF800000> : vector<1xf32>
    %142 = vector.multi_reduction <maximumf>, %141, %cst_138 [1] : vector<1x4xf32> to vector<1xf32>
    %143 = vector.shape_cast %142 : vector<1xf32> to vector<1x1xf32>
    %144 = vector.broadcast %143 : vector<1x1xf32> to vector<1x4xf32>
    %145 = arith.subf %141, %144 : vector<1x4xf32>
    %146 = math.exp %145 : vector<1x4xf32>
    %cst_139 = arith.constant dense<0.000000e+00> : vector<1xf32>
    %147 = vector.multi_reduction <add>, %146, %cst_139 [1] : vector<1x4xf32> to vector<1xf32>
    %148 = vector.shape_cast %147 : vector<1xf32> to vector<1x1xf32>
    %149 = tpu.reciprocal %148 {approx = true} : vector<1x1xf32> -> vector<1x1xf32>
    %150 = vector.broadcast %149 : vector<1x1xf32> to vector<1x4xf32>
    %151 = arith.mulf %146, %150 : vector<1x4xf32>
    %c0_140 = arith.constant 0 : index
    %c0_141 = arith.constant 0 : index
    %c0_142 = arith.constant 0 : index
    %152 = vector.load %arg19[%c0_140, %c0_141, %c0_142] : memref<1x1x4xf32, #tpu.memory_space<vmem>>, vector<1x1x4xf32>
    %153 = vector.shape_cast %152 : vector<1x1x4xf32> to vector<1x4xf32>
    %154 = vector.shape_cast %151 : vector<1x4xf32> to vector<1x1x4xf32>
    tpu.vector_store %arg19[%c0_140, %c0_141, %c0_142], %154 {strides = array<i32>} : memref<1x1x4xf32, #tpu.memory_space<vmem>>, vector<1x1x4xf32>,
    return
  }
  func.func @transform_0(%arg0: i32) -> (i32, i32, i32) {
    %c0_i32 = arith.constant 0 : i32
    %c0_i32_0 = arith.constant 0 : i32
    %c0_i32_1 = arith.constant 0 : i32
    return %arg0, %c0_i32, %c0_i32_0 : i32, i32, i32
  }
  func.func @transform_1(%arg0: i32) -> (i32, i32, i32) {
    %c0_i32 = arith.constant 0 : i32
    %c0_i32_0 = arith.constant 0 : i32
    %c0_i32_1 = arith.constant 0 : i32
    %c0_i32_2 = arith.constant 0 : i32
    return %c0_i32, %c0_i32_0, %c0_i32_1 : i32, i32, i32
  }
  func.func @transform_2(%arg0: i32) -> (i32, i32, i32) {
    %c0_i32 = arith.constant 0 : i32
    %c0_i32_0 = arith.constant 0 : i32
    %c0_i32_1 = arith.constant 0 : i32
    %c0_i32_2 = arith.constant 0 : i32
    return %c0_i32, %c0_i32_0, %c0_i32_1 : i32, i32, i32
  }
  func.func @transform_3(%arg0: i32) -> (i32, i32, i32) {
    %c0_i32 = arith.constant 0 : i32
    %c0_i32_0 = arith.constant 0 : i32
    %c0_i32_1 = arith.constant 0 : i32
    %c0_i32_2 = arith.constant 0 : i32
    return %c0_i32, %c0_i32_0, %c0_i32_1 : i32, i32, i32
  }
  func.func @transform_4(%arg0: i32) -> (i32, i32, i32) {
    %c0_i32 = arith.constant 0 : i32
    %c0_i32_0 = arith.constant 0 : i32
    %c0_i32_1 = arith.constant 0 : i32
    %c0_i32_2 = arith.constant 0 : i32
    return %c0_i32, %c0_i32_0, %c0_i32_1 : i32, i32, i32
  }
  func.func @transform_5(%arg0: i32) -> (i32, i32) {
    %c0_i32 = arith.constant 0 : i32
    %c0_i32_0 = arith.constant 0 : i32
    %c0_i32_1 = arith.constant 0 : i32
    return %c0_i32, %c0_i32_0 : i32, i32
  }
  func.func @transform_6(%arg0: i32) -> (i32, i32, i32) {
    %c0_i32 = arith.constant 0 : i32
    %c0_i32_0 = arith.constant 0 : i32
    %c0_i32_1 = arith.constant 0 : i32
    %c0_i32_2 = arith.constant 0 : i32
    return %c0_i32, %c0_i32_0, %c0_i32_1 : i32, i32, i32
  }
  func.func @transform_7(%arg0: i32) -> (i32, i32, i32) {
    %c0_i32 = arith.constant 0 : i32
    %c0_i32_0 = arith.constant 0 : i32
    %c0_i32_1 = arith.constant 0 : i32
    %c0_i32_2 = arith.constant 0 : i32
    return %c0_i32, %c0_i32_0, %c0_i32_1 : i32, i32, i32
  }
  func.func @transform_8(%arg0: i32) -> (i32, i32, i32) {
    %c0_i32 = arith.constant 0 : i32
    %c0_i32_0 = arith.constant 0 : i32
    %c0_i32_1 = arith.constant 0 : i32
    %c0_i32_2 = arith.constant 0 : i32
    return %c0_i32, %c0_i32_0, %c0_i32_1 : i32, i32, i32
  }
  func.func @transform_9(%arg0: i32) -> (i32, i32, i32) {
    %c0_i32 = arith.constant 0 : i32
    %c0_i32_0 = arith.constant 0 : i32
    %c0_i32_1 = arith.constant 0 : i32
    %c0_i32_2 = arith.constant 0 : i32
    return %c0_i32, %c0_i32_0, %c0_i32_1 : i32, i32, i32
  }
  func.func @transform_10(%arg0: i32) -> (i32, i32) {
    %c0_i32 = arith.constant 0 : i32
    %c0_i32_0 = arith.constant 0 : i32
    %c0_i32_1 = arith.constant 0 : i32
    return %c0_i32, %c0_i32_0 : i32, i32
  }
  func.func @transform_11(%arg0: i32) -> (i32, i32, i32) {
    %c0_i32 = arith.constant 0 : i32
    %c0_i32_0 = arith.constant 0 : i32
    %c0_i32_1 = arith.constant 0 : i32
    %c0_i32_2 = arith.constant 0 : i32
    return %c0_i32, %c0_i32_0, %c0_i32_1 : i32, i32, i32
  }
  func.func @transform_12(%arg0: i32) -> (i32, i32, i32) {
    %c0_i32 = arith.constant 0 : i32
    %c0_i32_0 = arith.constant 0 : i32
    %c0_i32_1 = arith.constant 0 : i32
    %c0_i32_2 = arith.constant 0 : i32
    return %c0_i32, %c0_i32_0, %c0_i32_1 : i32, i32, i32
  }
  func.func @transform_13(%arg0: i32) -> (i32, i32) {
    %c0_i32 = arith.constant 0 : i32
    %c0_i32_0 = arith.constant 0 : i32
    %c0_i32_1 = arith.constant 0 : i32
    return %c0_i32, %c0_i32_0 : i32, i32
  }
  func.func @transform_14(%arg0: i32) -> (i32, i32) {
    %c0_i32 = arith.constant 0 : i32
    %c0_i32_0 = arith.constant 0 : i32
    %c0_i32_1 = arith.constant 0 : i32
    return %c0_i32, %c0_i32_0 : i32, i32
  }
  func.func @transform_15(%arg0: i32) -> (i32, i32) {
    %c0_i32 = arith.constant 0 : i32
    %c0_i32_0 = arith.constant 0 : i32
    %c0_i32_1 = arith.constant 0 : i32
    return %c0_i32, %c0_i32_0 : i32, i32
  }
  func.func @transform_16(%arg0: i32) -> (i32, i32) {
    %c0_i32 = arith.constant 0 : i32
    %c0_i32_0 = arith.constant 0 : i32
    %c0_i32_1 = arith.constant 0 : i32
    return %c0_i32, %c0_i32_0 : i32, i32
  }
  func.func @transform_17(%arg0: i32) -> (i32, i32) {
    %c0_i32 = arith.constant 0 : i32
    %c0_i32_0 = arith.constant 0 : i32
    %c0_i32_1 = arith.constant 0 : i32
    return %c0_i32, %c0_i32_0 : i32, i32
  }
  func.func @transform_18(%arg0: i32) -> (i32, i32, i32) {
    %c0_i32 = arith.constant 0 : i32
    %c0_i32_0 = arith.constant 0 : i32
    %c0_i32_1 = arith.constant 0 : i32
    return %arg0, %c0_i32, %c0_i32_0 : i32, i32, i32
  }
}

</mosaic_0001>

<llo_original>
// kernel: cnn_forward.1
$region0: #{cnn_forward.1}
  #allocation0 [shape = 'u32[]', space=smem, size = 0x4, offset = 0x4, fixed_abs, tag = 'smem constant byte address 0x4 - core index']
  #allocation1 [shape = 'u32[144,128]{1,0:T(1,128)}', space=vmem, size = 0x12000, scoped, tag = 'internal scratch']
  %s0 = inlined_call_operand.vmem [shape: f32[2,64,64], index: 0, kind: input, shape index: {}]
  %s1 = inlined_call_operand.vmem [shape: f32[3,31,64], index: 1, kind: input, shape index: {}]
  %s2 = inlined_call_operand.vmem [shape: f32[3,64,240], index: 2, kind: input, shape index: {}]
  %s3 = inlined_call_operand.vmem [shape: f32[3,64,240], index: 3, kind: input, shape index: {}]
  %s4 = inlined_call_operand.vmem [shape: f32[2,15,31], index: 4, kind: input, shape index: {}]
  %s5 = inlined_call_operand.vmem [shape: f32[1,240], index: 5, kind: input, shape index: {}]
  %s6 = inlined_call_operand.vmem [shape: f32[3,7,15], index: 6, kind: input, shape index: {}]
  %s7 = inlined_call_operand.vmem [shape: f32[3,240,96], index: 7, kind: input, shape index: {}]
  %s8 = inlined_call_operand.vmem [shape: f32[3,240,96], index: 8, kind: input, shape index: {}]
  %s9 = inlined_call_operand.vmem [shape: f32[2,3,7], index: 9, kind: input, shape index: {}]
  %s10 = inlined_call_operand.vmem [shape: f32[1,96], index: 10, kind: input, shape index: {}]
  %s11 = inlined_call_operand.vmem [shape: f32[3,1,3], index: 11, kind: input, shape index: {}]
  %s12 = inlined_call_operand.vmem [shape: f32[3,96,64], index: 12, kind: input, shape index: {}]
  %s13 = inlined_call_operand.vmem [shape: f32[1,64], index: 13, kind: input, shape index: {}]
  %s14 = inlined_call_operand.vmem [shape: f32[64,128], index: 14, kind: input, shape index: {}]
  %s15 = inlined_call_operand.vmem [shape: f32[1,128], index: 15, kind: input, shape index: {}]
  %s16 = inlined_call_operand.vmem [shape: f32[128,4], index: 16, kind: input, shape index: {}]
  %s17 = inlined_call_operand.vmem [shape: f32[1,4], index: 17, kind: input, shape index: {}]
  %s18 = inlined_call_operand.hbm [shape: f32[2,1,4], index: 18, kind: output, shape index: {}]
  %s19 = sld [smem:[#allocation0]]
  $region105: #{cnn_forward.1} parent=0
    _
  %s21 = ssub.s32 1, %s19
  %s22 = scalar_select 0, %s21, %s19
  $region1: #{cnn_forward.1} parent=0
    #allocation2 [shape = 'u8[1024]{0}', space=vmem, size = 0x400, scoped, tag = 'output window, operand 0']
    #allocation3 [shape = 's32[2]{0}', space=sflag, size = 0x8, scoped, tag = 'scoped memory for cnn_forward.1']
    %23 = vsyncpa [#allocation3], 0
    %s24 = scalar_lea.sflag [#allocation3], 1
    %25 = vsyncpa %s24, 0
    loop: start=0, step=1, limit=4
    $region2: #{cnn_forward.1} parent=1 // loop_pre_header
      _
    $region3: #{cnn_forward.1} parent=1 // loop_header
      %s27 = sphi 0, %s31
      %p28 = scmp.ge.s32.totalorder %s27, 4
      %s37 = sphi 0, %s39
      %s40 = sphi 0, %s37
      %s41 = sphi 0, %s40
      %s57 = sphi 0, %s41
      %s61 = sphi 0, %s61
      %s63 = sphi 0, %s61
      %s64 = sphi 0, %s63
      %s78 = sphi 0, %s64
      %s82 = sphi 0, %s82
      %s84 = sphi 0, %s82
      %s85 = sphi 0, %s84
      %s99 = sphi 0, %s85
      %s103 = sphi 0, %s103
      %s105 = sphi 0, %s103
      %s106 = sphi 0, %s105
      %s120 = sphi 0, %s106
      %s124 = sphi 0, %s124
      %s126 = sphi 0, %s124
      %s127 = sphi 0, %s126
      %s141 = sphi 0, %s127
      %s145 = sphi 0, %s145
      %s147 = sphi 0, %s145
      %s148 = sphi 0, %s147
      %s162 = sphi 0, %s148
      %s166 = sphi 0, %s166
      %s168 = sphi 0, %s166
      %s169 = sphi 0, %s168
      %s183 = sphi 0, %s169
      %s187 = sphi 0, %s187
      %s189 = sphi 0, %s187
      %s190 = sphi 0, %s189
      %s204 = sphi 0, %s190
      %s208 = sphi 0, %s208
      %s210 = sphi 0, %s208
      %s211 = sphi 0, %s210
      %s225 = sphi 0, %s211
      %s229 = sphi 0, %s229
      %s231 = sphi 0, %s229
      %s232 = sphi 0, %s231
      %s246 = sphi 0, %s232
      %s250 = sphi 0, %s250
      %s252 = sphi 0, %s250
      %s253 = sphi 0, %s252
      %s267 = sphi 0, %s253
      %s271 = sphi 0, %s271
      %s273 = sphi 0, %s271
      %s274 = sphi 0, %s273
      %s288 = sphi 0, %s274
      %s292 = sphi 0, %s292
      %s294 = sphi 0, %s292
      %s295 = sphi 0, %s294
      %s309 = sphi 0, %s295
      %s313 = sphi 0, %s313
      %s315 = sphi 0, %s313
      %s316 = sphi 0, %s315
      %s330 = sphi 0, %s316
      %s334 = sphi 0, %s334
      %s336 = sphi 0, %s334
      %s337 = sphi 0, %s336
      %s351 = sphi 0, %s337
      %s355 = sphi 0, %s355
      %s357 = sphi 0, %s355
      %s358 = sphi 0, %s357
      %s372 = sphi 0, %s358
      %s376 = sphi 0, %s376
      %s378 = sphi 0, %s376
      %s379 = sphi 0, %s378
      %s393 = sphi 0, %s379
      %s397 = sphi 0, %s397
      %s399 = sphi 0, %s397
      %s400 = sphi 0, %s399
      %s414 = sphi 0, %s400
      %s420 = sphi 0, %s422
      %s423 = sphi 0, %s420
      %s424 = sphi 0, %s423
      %s440 = sphi 0, %s424
    $region4: #{cnn_forward.1} parent=1 // loop_header_branch
      %30 = sbr.rel (%p28) target = $region8
    $region5: #{cnn_forward.1} parent=1 // loop_body
      %s32 = ssub.s32 %s27, 1
      %s33 = ssub.s32 %s27, 2
      %s34 = sadd.s32 %s27, 1
      %s35 = ssub.s32 %s27, %s34
      %p36 = scmp.eq.s32.totalorder %s35, 0
      %s38 = sadd.s32 %s37, 1
      %s39 = scalar_select %p36, %s37, %s38
      %p42 = pneg %p36
      %p43 = scmp.eq.s32.totalorder %s27, 1
      %p44 = por %p42, %p43
      %p45 = scmp.ne.s32.totalorder %s37, %s40
      %p46 = scmp.eq.s32.totalorder %s27, 0
      %p47 = por %p45, %p46
      %p48 = scmp.ne.s32.totalorder %s37, %s40
      %p49 = scmp.eq.s32.totalorder %s32, 1
      %p50 = por %p48, %p49
      %p51 = scmp.ne.s32.totalorder %s40, %s41
      %p52 = scmp.eq.s32.totalorder %s32, 0
      %p53 = por %p51, %p52
      %p54 = scmp.ne.s32.totalorder %s40, %s41
      %p55 = scmp.eq.s32.totalorder %s33, 1
      %p56 = por %p54, %p55
      %p58 = scmp.ne.s32.totalorder %s41, %s57
      %p59 = scmp.eq.s32.totalorder %s33, 0
      %p60 = por %p58, %p59
      %s62 = sadd.s32 %s61, 1
      %p65 = scmp.eq.s32.totalorder %s27, 1
      %p66 = scmp.ne.s32.totalorder %s61, %s63
      %p67 = scmp.eq.s32.totalorder %s27, 0
      %p68 = por %p66, %p67
      %p69 = scmp.ne.s32.totalorder %s61, %s63
      %p70 = scmp.eq.s32.totalorder %s32, 1
      %p71 = por %p69, %p70
      %p72 = scmp.ne.s32.totalorder %s63, %s64
      %p73 = scmp.eq.s32.totalorder %s32, 0
      %p74 = por %p72, %p73
      %p75 = scmp.ne.s32.totalorder %s63, %s64
      %p76 = scmp.eq.s32.totalorder %s33, 1
      %p77 = por %p75, %p76
      %p79 = scmp.ne.s32.totalorder %s64, %s78
      %p80 = scmp.eq.s32.totalorder %s33, 0
      %p81 = por %p79, %p80
      %s83 = sadd.s32 %s82, 1
      %p86 = scmp.eq.s32.totalorder %s27, 1
      %p87 = scmp.ne.s32.totalorder %s82, %s84
      %p88 = scmp.eq.s32.totalorder %s27, 0
      %p89 = por %p87, %p88
      %p90 = scmp.ne.s32.totalorder %s82, %s84
      %p91 = scmp.eq.s32.totalorder %s32, 1
      %p92 = por %p90, %p91
      %p93 = scmp.ne.s32.totalorder %s84, %s85
      %p94 = scmp.eq.s32.totalorder %s32, 0
      %p95 = por %p93, %p94
      %p96 = scmp.ne.s32.totalorder %s84, %s85
      %p97 = scmp.eq.s32.totalorder %s33, 1
      %p98 = por %p96, %p97
      %p100 = scmp.ne.s32.totalorder %s85, %s99
      %p101 = scmp.eq.s32.totalorder %s33, 0
      %p102 = por %p100, %p101
      %s104 = sadd.s32 %s103, 1
      %p107 = scmp.eq.s32.totalorder %s27, 1
      %p108 = scmp.ne.s32.totalorder %s103, %s105
      %p109 = scmp.eq.s32.totalorder %s27, 0
      %p110 = por %p108, %p109
      %p111 = scmp.ne.s32.totalorder %s103, %s105
      %p112 = scmp.eq.s32.totalorder %s32, 1
      %p113 = por %p111, %p112
      %p114 = scmp.ne.s32.totalorder %s105, %s106
      %p115 = scmp.eq.s32.totalorder %s32, 0
      %p116 = por %p114, %p115
      %p117 = scmp.ne.s32.totalorder %s105, %s106
      %p118 = scmp.eq.s32.totalorder %s33, 1
      %p119 = por %p117, %p118
      %p121 = scmp.ne.s32.totalorder %s106, %s120
      %p122 = scmp.eq.s32.totalorder %s33, 0
      %p123 = por %p121, %p122
      %s125 = sadd.s32 %s124, 1
      %p128 = scmp.eq.s32.totalorder %s27, 1
      %p129 = scmp.ne.s32.totalorder %s124, %s126
      %p130 = scmp.eq.s32.totalorder %s27, 0
      %p131 = por %p129, %p130
      %p132 = scmp.ne.s32.totalorder %s124, %s126
      %p133 = scmp.eq.s32.totalorder %s32, 1
      %p134 = por %p132, %p133
      %p135 = scmp.ne.s32.totalorder %s126, %s127
      %p136 = scmp.eq.s32.totalorder %s32, 0
      %p137 = por %p135, %p136
      %p138 = scmp.ne.s32.totalorder %s126, %s127
      %p139 = scmp.eq.s32.totalorder %s33, 1
      %p140 = por %p138, %p139
      %p142 = scmp.ne.s32.totalorder %s127, %s141
      %p143 = scmp.eq.s32.totalorder %s33, 0
      %p144 = por %p142, %p143
      %s146 = sadd.s32 %s145, 1
      %p149 = scmp.eq.s32.totalorder %s27, 1
      %p150 = scmp.ne.s32.totalorder %s145, %s147
      %p151 = scmp.eq.s32.totalorder %s27, 0
      %p152 = por %p150, %p151
      %p153 = scmp.ne.s32.totalorder %s145, %s147
      %p154 = scmp.eq.s32.totalorder %s32, 1
      %p155 = por %p153, %p154
      %p156 = scmp.ne.s32.totalorder %s147, %s148
      %p157 = scmp.eq.s32.totalorder %s32, 0
      %p158 = por %p156, %p157
      %p159 = scmp.ne.s32.totalorder %s147, %s148
      %p160 = scmp.eq.s32.totalorder %s33, 1
      %p161 = por %p159, %p160
      %p163 = scmp.ne.s32.totalorder %s148, %s162
      %p164 = scmp.eq.s32.totalorder %s33, 0
      %p165 = por %p163, %p164
      %s167 = sadd.s32 %s166, 1
      %p170 = scmp.eq.s32.totalorder %s27, 1
      %p171 = scmp.ne.s32.totalorder %s166, %s168
      %p172 = scmp.eq.s32.totalorder %s27, 0
      %p173 = por %p171, %p172
      %p174 = scmp.ne.s32.totalorder %s166, %s168
      %p175 = scmp.eq.s32.totalorder %s32, 1
      %p176 = por %p174, %p175
      %p177 = scmp.ne.s32.totalorder %s168, %s169
      %p178 = scmp.eq.s32.totalorder %s32, 0
      %p179 = por %p177, %p178
      %p180 = scmp.ne.s32.totalorder %s168, %s169
      %p181 = scmp.eq.s32.totalorder %s33, 1
      %p182 = por %p180, %p181
      %p184 = scmp.ne.s32.totalorder %s169, %s183
      %p185 = scmp.eq.s32.totalorder %s33, 0
      %p186 = por %p184, %p185
      %s188 = sadd.s32 %s187, 1
      %p191 = scmp.eq.s32.totalorder %s27, 1
      %p192 = scmp.ne.s32.totalorder %s187, %s189
      %p193 = scmp.eq.s32.totalorder %s27, 0
      %p194 = por %p192, %p193
      %p195 = scmp.ne.s32.totalorder %s187, %s189
      %p196 = scmp.eq.s32.totalorder %s32, 1
      %p197 = por %p195, %p196
      %p198 = scmp.ne.s32.totalorder %s189, %s190
      %p199 = scmp.eq.s32.totalorder %s32, 0
      %p200 = por %p198, %p199
      %p201 = scmp.ne.s32.totalorder %s189, %s190
      %p202 = scmp.eq.s32.totalorder %s33, 1
      %p203 = por %p201, %p202
      %p205 = scmp.ne.s32.totalorder %s190, %s204
      %p206 = scmp.eq.s32.totalorder %s33, 0
      %p207 = por %p205, %p206
      %s209 = sadd.s32 %s208, 1
      %p212 = scmp.eq.s32.totalorder %s27, 1
      %p213 = scmp.ne.s32.totalorder %s208, %s210
      %p214 = scmp.eq.s32.totalorder %s27, 0
      %p215 = por %p213, %p214
      %p216 = scmp.ne.s32.totalorder %s208, %s210
      %p217 = scmp.eq.s32.totalorder %s32, 1
      %p218 = por %p216, %p217
      %p219 = scmp.ne.s32.totalorder %s210, %s211
      %p220 = scmp.eq.s32.totalorder %s32, 0
      %p221 = por %p219, %p220
      %p222 = scmp.ne.s32.totalorder %s210, %s211
      %p223 = scmp.eq.s32.totalorder %s33, 1
      %p224 = por %p222, %p223
      %p226 = scmp.ne.s32.totalorder %s211, %s225
      %p227 = scmp.eq.s32.totalorder %s33, 0
      %p228 = por %p226, %p227
      %s230 = sadd.s32 %s229, 1
      %p233 = scmp.eq.s32.totalorder %s27, 1
      %p234 = scmp.ne.s32.totalorder %s229, %s231
      %p235 = scmp.eq.s32.totalorder %s27, 0
      %p236 = por %p234, %p235
      %p237 = scmp.ne.s32.totalorder %s229, %s231
      %p238 = scmp.eq.s32.totalorder %s32, 1
      %p239 = por %p237, %p238
      %p240 = scmp.ne.s32.totalorder %s231, %s232
      %p241 = scmp.eq.s32.totalorder %s32, 0
      %p242 = por %p240, %p241
      %p243 = scmp.ne.s32.totalorder %s231, %s232
      %p244 = scmp.eq.s32.totalorder %s33, 1
      %p245 = por %p243, %p244
      %p247 = scmp.ne.s32.totalorder %s232, %s246
      %p248 = scmp.eq.s32.totalorder %s33, 0
      %p249 = por %p247, %p248
      %s251 = sadd.s32 %s250, 1
      %p254 = scmp.eq.s32.totalorder %s27, 1
      %p255 = scmp.ne.s32.totalorder %s250, %s252
      %p256 = scmp.eq.s32.totalorder %s27, 0
      %p257 = por %p255, %p256
      %p258 = scmp.ne.s32.totalorder %s250, %s252
      %p259 = scmp.eq.s32.totalorder %s32, 1
      %p260 = por %p258, %p259
      %p261 = scmp.ne.s32.totalorder %s252, %s253
      %p262 = scmp.eq.s32.totalorder %s32, 0
      %p263 = por %p261, %p262
      %p264 = scmp.ne.s32.totalorder %s252, %s253
      %p265 = scmp.eq.s32.totalorder %s33, 1
      %p266 = por %p264, %p265
      %p268 = scmp.ne.s32.totalorder %s253, %s267
      %p269 = scmp.eq.s32.totalorder %s33, 0
      %p270 = por %p268, %p269
      %s272 = sadd.s32 %s271, 1
      %p275 = scmp.eq.s32.totalorder %s27, 1
      %p276 = scmp.ne.s32.totalorder %s271, %s273
      %p277 = scmp.eq.s32.totalorder %s27, 0
      %p278 = por %p276, %p277
      %p279 = scmp.ne.s32.totalorder %s271, %s273
      %p280 = scmp.eq.s32.totalorder %s32, 1
      %p281 = por %p279, %p280
      %p282 = scmp.ne.s32.totalorder %s273, %s274
      %p283 = scmp.eq.s32.totalorder %s32, 0
      %p284 = por %p282, %p283
      %p285 = scmp.ne.s32.totalorder %s273, %s274
      %p286 = scmp.eq.s32.totalorder %s33, 1
      %p287 = por %p285, %p286
      %p289 = scmp.ne.s32.totalorder %s274, %s288
      %p290 = scmp.eq.s32.totalorder %s33, 0
      %p291 = por %p289, %p290
      %s293 = sadd.s32 %s292, 1
      %p296 = scmp.eq.s32.totalorder %s27, 1
      %p297 = scmp.ne.s32.totalorder %s292, %s294
      %p298 = scmp.eq.s32.totalorder %s27, 0
      %p299 = por %p297, %p298
      %p300 = scmp.ne.s32.totalorder %s292, %s294
      %p301 = scmp.eq.s32.totalorder %s32, 1
      %p302 = por %p300, %p301
      %p303 = scmp.ne.s32.totalorder %s294, %s295
      %p304 = scmp.eq.s32.totalorder %s32, 0
      %p305 = por %p303, %p304
      %p306 = scmp.ne.s32.totalorder %s294, %s295
      %p307 = scmp.eq.s32.totalorder %s33, 1
      %p308 = por %p306, %p307
      %p310 = scmp.ne.s32.totalorder %s295, %s309
      %p311 = scmp.eq.s32.totalorder %s33, 0
      %p312 = por %p310, %p311
      %s314 = sadd.s32 %s313, 1
      %p317 = scmp.eq.s32.totalorder %s27, 1
      %p318 = scmp.ne.s32.totalorder %s313, %s315
      %p319 = scmp.eq.s32.totalorder %s27, 0
      %p320 = por %p318, %p319
      %p321 = scmp.ne.s32.totalorder %s313, %s315
      %p322 = scmp.eq.s32.totalorder %s32, 1
      %p323 = por %p321, %p322
      %p324 = scmp.ne.s32.totalorder %s315, %s316
      %p325 = scmp.eq.s32.totalorder %s32, 0
      %p326 = por %p324, %p325
      %p327 = scmp.ne.s32.totalorder %s315, %s316
      %p328 = scmp.eq.s32.totalorder %s33, 1
      %p329 = por %p327, %p328
      %p331 = scmp.ne.s32.totalorder %s316, %s330
      %p332 = scmp.eq.s32.totalorder %s33, 0
      %p333 = por %p331, %p332
      %s335 = sadd.s32 %s334, 1
      %p338 = scmp.eq.s32.totalorder %s27, 1
      %p339 = scmp.ne.s32.totalorder %s334, %s336
      %p340 = scmp.eq.s32.totalorder %s27, 0
      %p341 = por %p339, %p340
      %p342 = scmp.ne.s32.totalorder %s334, %s336
      %p343 = scmp.eq.s32.totalorder %s32, 1
      %p344 = por %p342, %p343
      %p345 = scmp.ne.s32.totalorder %s336, %s337
      %p346 = scmp.eq.s32.totalorder %s32, 0
      %p347 = por %p345, %p346
      %p348 = scmp.ne.s32.totalorder %s336, %s337
      %p349 = scmp.eq.s32.totalorder %s33, 1
      %p350 = por %p348, %p349
      %p352 = scmp.ne.s32.totalorder %s337, %s351
      %p353 = scmp.eq.s32.totalorder %s33, 0
      %p354 = por %p352, %p353
      %s356 = sadd.s32 %s355, 1
      %p359 = scmp.eq.s32.totalorder %s27, 1
      %p360 = scmp.ne.s32.totalorder %s355, %s357
      %p361 = scmp.eq.s32.totalorder %s27, 0
      %p362 = por %p360, %p361
      %p363 = scmp.ne.s32.totalorder %s355, %s357
      %p364 = scmp.eq.s32.totalorder %s32, 1
      %p365 = por %p363, %p364
      %p366 = scmp.ne.s32.totalorder %s357, %s358
      %p367 = scmp.eq.s32.totalorder %s32, 0
      %p368 = por %p366, %p367
      %p369 = scmp.ne.s32.totalorder %s357, %s358
      %p370 = scmp.eq.s32.totalorder %s33, 1
      %p371 = por %p369, %p370
      %p373 = scmp.ne.s32.totalorder %s358, %s372
      %p374 = scmp.eq.s32.totalorder %s33, 0
      %p375 = por %p373, %p374
      %s377 = sadd.s32 %s376, 1
      %p380 = scmp.eq.s32.totalorder %s27, 1
      %p381 = scmp.ne.s32.totalorder %s376, %s378
      %p382 = scmp.eq.s32.totalorder %s27, 0
      %p383 = por %p381, %p382
      %p384 = scmp.ne.s32.totalorder %s376, %s378
      %p385 = scmp.eq.s32.totalorder %s32, 1
      %p386 = por %p384, %p385
      %p387 = scmp.ne.s32.totalorder %s378, %s379
      %p388 = scmp.eq.s32.totalorder %s32, 0
      %p389 = por %p387, %p388
      %p390 = scmp.ne.s32.totalorder %s378, %s379
      %p391 = scmp.eq.s32.totalorder %s33, 1
      %p392 = por %p390, %p391
      %p394 = scmp.ne.s32.totalorder %s379, %s393
      %p395 = scmp.eq.s32.totalorder %s33, 0
      %p396 = por %p394, %p395
      %s398 = sadd.s32 %s397, 1
      %p401 = scmp.eq.s32.totalorder %s27, 1
      %p402 = scmp.ne.s32.totalorder %s397, %s399
      %p403 = scmp.eq.s32.totalorder %s27, 0
      %p404 = por %p402, %p403
      %p405 = scmp.ne.s32.totalorder %s397, %s399
      %p406 = scmp.eq.s32.totalorder %s32, 1
      %p407 = por %p405, %p406
      %p408 = scmp.ne.s32.totalorder %s399, %s400
      %p409 = scmp.eq.s32.totalorder %s32, 0
      %p410 = por %p408, %p409
      %p411 = scmp.ne.s32.totalorder %s399, %s400
      %p412 = scmp.eq.s32.totalorder %s33, 1
      %p413 = por %p411, %p412
      %p415 = scmp.ne.s32.totalorder %s400, %s414
      %p416 = scmp.eq.s32.totalorder %s33, 0
      %p417 = por %p415, %p416
      %s418 = ssub.s32 %s27, %s34
      %p419 = scmp.eq.s32.totalorder %s418, 0
      %s421 = sadd.s32 %s420, 1
      %s422 = scalar_select %p419, %s420, %s421
      %p425 = pneg %p419
      %p426 = scmp.eq.s32.totalorder %s27, 1
      %p427 = por %p425, %p426
      %p428 = scmp.ne.s32.totalorder %s420, %s423
      %p429 = scmp.eq.s32.totalorder %s27, 0
      %p430 = por %p428, %p429
      %p431 = scmp.ne.s32.totalorder %s420, %s423
      %p432 = scmp.eq.s32.totalorder %s32, 1
      %p433 = por %p431, %p432
      %p434 = scmp.ne.s32.totalorder %s423, %s424
      %p435 = scmp.eq.s32.totalorder %s32, 0
      %p436 = por %p434, %p435
      %p437 = scmp.ne.s32.totalorder %s423, %s424
      %p438 = scmp.eq.s32.totalorder %s33, 1
      %p439 = por %p437, %p438
      %p441 = scmp.ne.s32.totalorder %s424, %s440
      %p442 = scmp.eq.s32.totalorder %s33, 0
      %p443 = por %p441, %p442
      %p444 = scmp.le.s32.totalorder 1, %s27
      %p445 = scmp.lt.s32.totalorder %s27, 3
      %p446 = pnand %p444, %p445
      %p447 = pneg %p446
      // Predicated region
      $region9: #{cnn_forward.1} parent=5 // pred_check
        _
      $region10: #{cnn_forward.1} parent=5 // pred_check_branch
        %449 = sbr.rel (%p446) target = $region12
      $region11: #{cnn_forward.1} parent=5 // pred_region
        %s450 = ssub.s32 %s27, 1
        // Predicated region
        $region13: #{cnn_forward.1} parent=11 // pred_check
          %p451 = pneg %p74
        $region14: #{cnn_forward.1} parent=11 // pred_check_branch
          %453 = sbr.rel (%p451) target = $region16
        $region15: #{cnn_forward.1} parent=11 // pred_region
          _
        $region16: #{cnn_forward.1} parent=11 // pred_fallthru
          _
        // Predicated region
        $region17: #{cnn_forward.1} parent=11 // pred_check
          %p454 = pneg %p95
        $region18: #{cnn_forward.1} parent=11 // pred_check_branch
          %456 = sbr.rel (%p454) target = $region20
        $region19: #{cnn_forward.1} parent=11 // pred_region
          _
        $region20: #{cnn_forward.1} parent=11 // pred_fallthru
          _
        // Predicated region
        $region21: #{cnn_forward.1} parent=11 // pred_check
          %p457 = pneg %p116
        $region22: #{cnn_forward.1} parent=11 // pred_check_branch
          %459 = sbr.rel (%p457) target = $region24
        $region23: #{cnn_forward.1} parent=11 // pred_region
          _
        $region24: #{cnn_forward.1} parent=11 // pred_fallthru
          _
        // Predicated region
        $region25: #{cnn_forward.1} parent=11 // pred_check
          %p460 = pneg %p137
        $region26: #{cnn_forward.1} parent=11 // pred_check_branch
          %462 = sbr.rel (%p460) target = $region28
        $region27: #{cnn_forward.1} parent=11 // pred_region
          _
        $region28: #{cnn_forward.1} parent=11 // pred_fallthru
          _
        // Predicated region
        $region29: #{cnn_forward.1} parent=11 // pred_check
          %p463 = pneg %p158
        $region30: #{cnn_forward.1} parent=11 // pred_check_branch
          %465 = sbr.rel (%p463) target = $region32
        $region31: #{cnn_forward.1} parent=11 // pred_region
          _
        $region32: #{cnn_forward.1} parent=11 // pred_fallthru
          _
        // Predicated region
        $region33: #{cnn_forward.1} parent=11 // pred_check
          %p466 = pneg %p179
        $region34: #{cnn_forward.1} parent=11 // pred_check_branch
          %468 = sbr.rel (%p466) target = $region36
        $region35: #{cnn_forward.1} parent=11 // pred_region
          _
        $region36: #{cnn_forward.1} parent=11 // pred_fallthru
          _
        // Predicated region
        $region37: #{cnn_forward.1} parent=11 // pred_check
          %p469 = pneg %p200
        $region38: #{cnn_forward.1} parent=11 // pred_check_branch
          %471 = sbr.rel (%p469) target = $region40
        $region39: #{cnn_forward.1} parent=11 // pred_region
          _
        $region40: #{cnn_forward.1} parent=11 // pred_fallthru
          _
        // Predicated region
        $region41: #{cnn_forward.1} parent=11 // pred_check
          %p472 = pneg %p221
        $region42: #{cnn_forward.1} parent=11 // pred_check_branch
          %474 = sbr.rel (%p472) target = $region44
        $region43: #{cnn_forward.1} parent=11 // pred_region
          _
        $region44: #{cnn_forward.1} parent=11 // pred_fallthru
          _
        // Predicated region
        $region45: #{cnn_forward.1} parent=11 // pred_check
          %p475 = pneg %p242
        $region46: #{cnn_forward.1} parent=11 // pred_check_branch
          %477 = sbr.rel (%p475) target = $region48
        $region47: #{cnn_forward.1} parent=11 // pred_region
          _
        $region48: #{cnn_forward.1} parent=11 // pred_fallthru
          _
        // Predicated region
        $region49: #{cnn_forward.1} parent=11 // pred_check
          %p478 = pneg %p263
        $region50: #{cnn_forward.1} parent=11 // pred_check_branch
          %480 = sbr.rel (%p478) target = $region52
        $region51: #{cnn_forward.1} parent=11 // pred_region
          _
        $region52: #{cnn_forward.1} parent=11 // pred_fallthru
          _
        // Predicated region
        $region53: #{cnn_forward.1} parent=11 // pred_check
          %p481 = pneg %p284
        $region54: #{cnn_forward.1} parent=11 // pred_check_branch
          %483 = sbr.rel (%p481) target = $region56
        $region55: #{cnn_forward.1} parent=11 // pred_region
          _
        $region56: #{cnn_forward.1} parent=11 // pred_fallthru
          _
        // Predicated region
        $region57: #{cnn_forward.1} parent=11 // pred_check
          %p484 = pneg %p305
        $region58: #{cnn_forward.1} parent=11 // pred_check_branch
          %486 = sbr.rel (%p484) target = $region60
        $region59: #{cnn_forward.1} parent=11 // pred_region
          _
        $region60: #{cnn_forward.1} parent=11 // pred_fallthru
          _
        // Predicated region
        $region61: #{cnn_forward.1} parent=11 // pred_check
          %p487 = pneg %p326
        $region62: #{cnn_forward.1} parent=11 // pred_check_branch
          %489 = sbr.rel (%p487) target = $region64
        $region63: #{cnn_forward.1} parent=11 // pred_region
          _
        $region64: #{cnn_forward.1} parent=11 // pred_fallthru
          _
        // Predicated region
        $region65: #{cnn_forward.1} parent=11 // pred_check
          %p490 = pneg %p347
        $region66: #{cnn_forward.1} parent=11 // pred_check_branch
          %492 = sbr.rel (%p490) target = $region68
        $region67: #{cnn_forward.1} parent=11 // pred_region
          _
        $region68: #{cnn_forward.1} parent=11 // pred_fallthru
          _
        // Predicated region
        $region69: #{cnn_forward.1} parent=11 // pred_check
          %p493 = pneg %p368
        $region70: #{cnn_forward.1} parent=11 // pred_check_branch
          %495 = sbr.rel (%p493) target = $region72
        $region71: #{cnn_forward.1} parent=11 // pred_region
          _
        $region72: #{cnn_forward.1} parent=11 // pred_fallthru
          _
        // Predicated region
        $region73: #{cnn_forward.1} parent=11 // pred_check
          %p496 = pneg %p389
        $region74: #{cnn_forward.1} parent=11 // pred_check_branch
          %498 = sbr.rel (%p496) target = $region76
        $region75: #{cnn_forward.1} parent=11 // pred_region
          _
        $region76: #{cnn_forward.1} parent=11 // pred_fallthru
          _
        // Predicated region
        $region77: #{cnn_forward.1} parent=11 // pred_check
          %p499 = pneg %p410
        $region78: #{cnn_forward.1} parent=11 // pred_check_branch
          %501 = sbr.rel (%p499) target = $region80
        $region79: #{cnn_forward.1} parent=11 // pred_region
          _
        $region80: #{cnn_forward.1} parent=11 // pred_fallthru
          _
      $region12: #{cnn_forward.1} parent=5 // pred_fallthru
        _
      %p502 = scmp.lt.s32.totalorder %s27, 2
      // Predicated region
      $region81: #{cnn_forward.1} parent=5 // pred_check
        %p503 = pneg %p502
      $region82: #{cnn_forward.1} parent=5 // pred_check_branch
        %505 = sbr.rel (%p503) target = $region84
      $region83: #{cnn_forward.1} parent=5 // pred_region
        // Predicated region
        $region85: #{cnn_forward.1} parent=83 // pred_check
          %p506 = pneg %p47
        $region86: #{cnn_forward.1} parent=83 // pred_check_branch
          %508 = sbr.rel (%p506) target = $region88
        $region87: #{cnn_forward.1} parent=83 // pred_region
          %p509 = scmp.lt.s32.totalorder %s27, 1
          %s510 = scalar_select %p509, %s27, 1
          %s511 = smul.addr %s510, 8
          %s512 = smul.addr %s511, 8
          %s513 = scalar_lea.vmem %s0, %s512
        $region88: #{cnn_forward.1} parent=83 // pred_fallthru
          _
      $region84: #{cnn_forward.1} parent=5 // pred_fallthru
        _
      %p514 = scmp.le.s32.totalorder 1, %s27
      %p515 = scmp.lt.s32.totalorder %s27, 3
      %p516 = pnand %p514, %p515
      %p517 = pneg %p516
      // Predicated region
      $region89: #{cnn_forward.1} parent=5 // pred_check
        _
      $region90: #{cnn_forward.1} parent=5 // pred_check_branch
        %519 = sbr.rel (%p516) target = $region92
      $region91: #{cnn_forward.1} parent=5 // pred_region
        %s520 = ssub.s32 %s27, 1
        %p521 = scmp.lt.s32.totalorder %s32, 1
        %s522 = scalar_select %p521, %s32, 1
        %s523 = smul.addr %s522, 8
        %s524 = smul.addr %s523, 8
        %s525 = scalar_lea.vmem %s0, %s524
        %p526 = pneg %p53
        %p527 = pneg %p50
        %p528 = pneg %p74
        %p529 = pneg %p71
        %p530 = pneg %p95
        %p531 = pneg %p92
        %p532 = pneg %p116
        %p533 = pneg %p113
        %p534 = pneg %p137
        %p535 = pneg %p134
        %p536 = pneg %p158
        %p537 = pneg %p155
        %p538 = pneg %p179
        %p539 = pneg %p176
        %p540 = pneg %p200
        %p541 = pneg %p197
        %p542 = pneg %p221
        %p543 = pneg %p218
        %p544 = pneg %p242
        %p545 = pneg %p239
        %p546 = pneg %p263
        %p547 = pneg %p260
        %p548 = pneg %p284
        %p549 = pneg %p281
        %p550 = pneg %p305
        %p551 = pneg %p302
        %p552 = pneg %p326
        %p553 = pneg %p323
        %p554 = pneg %p347
        %p555 = pneg %p344
        %p556 = pneg %p368
        %p557 = pneg %p365
        %p558 = pneg %p389
        %p559 = pneg %p386
        %p560 = pneg %p410
        %p561 = pneg %p407
        %p562 = pneg %p436
        %p563 = pneg %p433
        %s564 = sand.u32 %s423, 1
        %s565 = scalar_lea.sflag [#allocation3], %s564
        %s566 = sand.u32 %s423, 1
        %s567 = scalar_lea.vmem [#allocation2], %s566
        %p568 = scmp.lt.s32.totalorder %s32, 1
        %s569 = scalar_select %p568, %s32, 1
        %s570 = smul.addr %s569, 8
        %s571 = smul.addr %s570, 8
        %s572 = scalar_lea.vmem %s0, %s571
        %v573 = vld [vmem:[%s572] sm:$0xff]
        %v574 = vld [vmem:[%s572 + $0x8] sm:$0xff]
        %v575 = vld [vmem:[%s572 + $0x10] sm:$0xff]
        %v576 = vld [vmem:[%s572 + $0x18] sm:$0xff]
        %v577 = vld [vmem:[%s572 + $0x20] sm:$0xff]
        %v578 = vld [vmem:[%s572 + $0x28] sm:$0xff]
        %v579 = vld [vmem:[%s572 + $0x30] sm:$0xff]
        %v580 = vld [vmem:[%s572 + $0x38] sm:$0xff]
        %v581 = vld [vmem:[%s1] sm:$0xff]
        %v582 = vld [vmem:[%s1 + $0x8] sm:$0xff]
        %v583 = vld [vmem:[%s1 + $0x10] sm:$0xff]
        %v584 = vld [vmem:[%s1 + $0x18] sm:$0x7f]
        %vm585 = vcmask 523264
        %v587 = vsel %vm585, %v581, 0
        %v590 = vsel %vm585, %v582, 0
        %v593 = vsel %vm585, %v583, 0
        %v596 = vsel %vm585, %v584, 0
        %598 = vmatprep.subr.mxu0 0.0
        %599 = vmatpush1.msra.mxu0 %v573
        %600 = vmatprep.subr.mxu0 0.0
        %601 = vmatpush1.msra.mxu0 %v574
        %602 = vmatprep.subr.mxu0 0.0
        %603 = vmatpush1.msra.mxu0 %v575
        %604 = vmatprep.subr.mxu0 0.0
        %605 = vmatpush1.msra.mxu0 %v576
        %606 = vmatprep.subr.mxu0 0.0
        %607 = vmatpush1.msra.mxu0 %v577
        %608 = vmatprep.subr.mxu0 0.0
        %609 = vmatpush1.msra.mxu0 %v578
        %610 = vmatprep.subr.mxu0 0.0
        %611 = vmatpush1.msra.mxu0 %v579
        %612 = vmatprep.subr.mxu0 0.0
        %613 = vmatpush1.msra.mxu0 %v580
        %614 = vmatprep.subr.mxu0 0.0
        %615 = vmatpush1.msra.mxu0 0.0
        %616 = vmatprep.subr.mxu0 0.0
        %617 = vmatpush1.msra.mxu0 0.0
        %618 = vmatprep.subr.mxu0 0.0
        %619 = vmatpush1.msra.mxu0 0.0
        %620 = vmatprep.subr.mxu0 0.0
        %621 = vmatpush1.msra.mxu0 0.0
        %622 = vmatprep.subr.mxu0 0.0
        %623 = vmatpush1.msra.mxu0 0.0
        %624 = vmatprep.subr.mxu0 0.0
        %625 = vmatpush1.msra.mxu0 0.0
        %626 = vmatprep.subr.mxu0 0.0
        %627 = vmatpush1.msra.mxu0 0.0
        %628 = vmatprep.subr.mxu0 0.0
        %629 = vmatpush1.msra.mxu0 0.0
        %630 = vmatprep.subr.mxu0 0.0
        %631 = vmatpush1.msra.mxu0 0.0
        %632 = vmatprep.subr.mxu0 0.0
        %633 = vmatpush1.msra.mxu0 0.0
        %634 = vmatprep.subr.mxu0 0.0
        %635 = vmatpush1.msra.mxu0 0.0
        %636 = vmatprep.subr.mxu0 0.0
        %637 = vmatpush1.msra.mxu0 0.0
        %638 = vmatprep.subr.mxu0 0.0
        %639 = vmatpush1.msra.mxu0 0.0
        %640 = vmatprep.subr.mxu0 0.0
        %641 = vmatpush1.msra.mxu0 0.0
        %642 = vmatprep.subr.mxu0 0.0
        %643 = vmatpush1.msra.mxu0 0.0
        %644 = vmatprep.subr.mxu0 0.0
        %645 = vmatpush1.msra.mxu0 0.0
        %646 = vmatprep.subr.mxu0 0.0
        %647 = vmatpush1.msra.mxu0 0.0
        %648 = vmatprep.subr.mxu0 0.0
        %649 = vmatpush1.msra.mxu0 0.0
        %650 = vmatprep.subr.mxu0 0.0
        %651 = vmatpush1.msra.mxu0 0.0
        %652 = vmatprep.subr.mxu0 0.0
        %653 = vmatpush1.msra.mxu0 0.0
        %654 = vmatprep.subr.mxu0 0.0
        %655 = vmatpush1.msra.mxu0 0.0
        %656 = vmatprep.subr.mxu0 0.0
        %657 = vmatpush1.msra.mxu0 0.0
        %658 = vmatprep.subr.mxu0 0.0
        %659 = vmatpush1.msra.mxu0 0.0
        %660 = vmatprep.subr.mxu0 0.0
        %661 = vmatpush1.msra.mxu0 0.0
        %662 = vmatprep.mubr.f32.mxu0 0.0
        %663 = vmatmul.mubr.f32.gmra.mrb[0].mxu0 %v587
        %v664 = vpop.f32.mrb[0].mxu0
        %v665 = vadd.f32 0.0, %v664
        %v666 = vpop.f32.mrb[0].mxu0
        %667 = vmatprep.mubr.f32.mxu0 0.0
        %668 = vmatmul.mubr.f32.gmra.mrb[0].mxu0 %v590
        %v669 = vpop.f32.mrb[0].mxu0
        %v670 = vadd.f32 0.0, %v669
        %v671 = vpop.f32.mrb[0].mxu0
        %672 = vmatprep.mubr.f32.mxu0 0.0
        %673 = vmatmul.mubr.f32.gmra.mrb[0].mxu0 %v593
        %v674 = vpop.f32.mrb[0].mxu0
        %v675 = vadd.f32 0.0, %v674
        %v676 = vpop.f32.mrb[0].mxu0
        %677 = vmatprep.mubr.f32.mxu0 0.0
        %678 = vmatmul.mubr.f32.gmra.mrb[0].mxu0 %v596
        %v679 = vpop.f32.mrb[0].mxu0
        %v680 = vadd.f32 0.0, %v679
        %v681 = vpop.f32.mrb[0].mxu0
        %682 = vdwg.mxu0
        %v683 = vld [vmem:[%s2] sm:$0xff]
        %v684 = vld [vmem:[%s2 + $0x8] sm:$0xff]
        %v685 = vld [vmem:[%s2 + $0x10] sm:$0xff]
        %v686 = vld [vmem:[%s2 + $0x18] sm:$0xff]
        %v687 = vld [vmem:[%s2 + $0x20] sm:$0xff]
        %v688 = vld [vmem:[%s2 + $0x28] sm:$0xff]
        %v689 = vld [vmem:[%s2 + $0x30] sm:$0xff]
        %v690 = vld [vmem:[%s2 + $0x38] sm:$0xff]
        %v691 = vld [vmem:[%s2 + $0x40] sm:$0xff]
        %v692 = vld [vmem:[%s2 + $0x48] sm:$0xff]
        %v693 = vld [vmem:[%s2 + $0x50] sm:$0xff]
        %v694 = vld [vmem:[%s2 + $0x58] sm:$0xff]
        %v695 = vld [vmem:[%s2 + $0x60] sm:$0xff]
        %v696 = vld [vmem:[%s2 + $0x68] sm:$0xff]
        %v697 = vld [vmem:[%s2 + $0x70] sm:$0xff]
        %v698 = vld [vmem:[%s2 + $0x78] sm:$0xff]
        %v699 = vld [vmem:[%s3] sm:$0xff]
        %v700 = vld [vmem:[%s3 + $0x8] sm:$0xff]
        %v701 = vld [vmem:[%s3 + $0x10] sm:$0xff]
        %v702 = vld [vmem:[%s3 + $0x18] sm:$0xff]
        %v703 = vld [vmem:[%s3 + $0x20] sm:$0xff]
        %v704 = vld [vmem:[%s3 + $0x28] sm:$0xff]
        %v705 = vld [vmem:[%s3 + $0x30] sm:$0xff]
        %v706 = vld [vmem:[%s3 + $0x38] sm:$0xff]
        %v707 = vld [vmem:[%s3 + $0x40] sm:$0xff]
        %v708 = vld [vmem:[%s3 + $0x48] sm:$0xff]
        %v709 = vld [vmem:[%s3 + $0x50] sm:$0xff]
        %v710 = vld [vmem:[%s3 + $0x58] sm:$0xff]
        %v711 = vld [vmem:[%s3 + $0x60] sm:$0xff]
        %v712 = vld [vmem:[%s3 + $0x68] sm:$0xff]
        %v713 = vld [vmem:[%s3 + $0x70] sm:$0xff]
        %v714 = vld [vmem:[%s3 + $0x78] sm:$0xff]
        %s715 = scalar_lea.vmem %s1, 32
        %v716 = vld [vmem:[%s715] sm:$0xff]
        %v717 = vld [vmem:[%s715 + $0x8] sm:$0xff]
        %v718 = vld [vmem:[%s715 + $0x10] sm:$0xff]
        %v719 = vld [vmem:[%s715 + $0x18] sm:$0x7f]
        %v721 = vsel %vm585, %v716, 0
        %v724 = vsel %vm585, %v717, 0
        %v727 = vsel %vm585, %v718, 0
        %v730 = vsel %vm585, %v719, 0
        %732 = vmatprep.subr.mxu0 0.0
        %733 = vmatpush1.msra.mxu0 %v573
        %734 = vmatprep.subr.mxu0 0.0
        %735 = vmatpush1.msra.mxu0 %v574
        %736 = vmatprep.subr.mxu0 0.0
        %737 = vmatpush1.msra.mxu0 %v575
        %738 = vmatprep.subr.mxu0 0.0
        %739 = vmatpush1.msra.mxu0 %v576
        %740 = vmatprep.subr.mxu0 0.0
        %741 = vmatpush1.msra.mxu0 %v577
        %742 = vmatprep.subr.mxu0 0.0
        %743 = vmatpush1.msra.mxu0 %v578
        %744 = vmatprep.subr.mxu0 0.0
        %745 = vmatpush1.msra.mxu0 %v579
        %746 = vmatprep.subr.mxu0 0.0
        %747 = vmatpush1.msra.mxu0 %v580
        %748 = vmatprep.subr.mxu0 0.0
        %749 = vmatpush1.msra.mxu0 0.0
        %750 = vmatprep.subr.mxu0 0.0
        %751 = vmatpush1.msra.mxu0 0.0
        %752 = vmatprep.subr.mxu0 0.0
        %753 = vmatpush1.msra.mxu0 0.0
        %754 = vmatprep.subr.mxu0 0.0
        %755 = vmatpush1.msra.mxu0 0.0
        %756 = vmatprep.subr.mxu0 0.0
        %757 = vmatpush1.msra.mxu0 0.0
        %758 = vmatprep.subr.mxu0 0.0
        %759 = vmatpush1.msra.mxu0 0.0
        %760 = vmatprep.subr.mxu0 0.0
        %761 = vmatpush1.msra.mxu0 0.0
        %762 = vmatprep.subr.mxu0 0.0
        %763 = vmatpush1.msra.mxu0 0.0
        %764 = vmatprep.subr.mxu0 0.0
        %765 = vmatpush1.msra.mxu0 0.0
        %766 = vmatprep.subr.mxu0 0.0
        %767 = vmatpush1.msra.mxu0 0.0
        %768 = vmatprep.subr.mxu0 0.0
        %769 = vmatpush1.msra.mxu0 0.0
        %770 = vmatprep.subr.mxu0 0.0
        %771 = vmatpush1.msra.mxu0 0.0
        %772 = vmatprep.subr.mxu0 0.0
        %773 = vmatpush1.msra.mxu0 0.0
        %774 = vmatprep.subr.mxu0 0.0
        %775 = vmatpush1.msra.mxu0 0.0
        %776 = vmatprep.subr.mxu0 0.0
        %777 = vmatpush1.msra.mxu0 0.0
        %778 = vmatprep.subr.mxu0 0.0
        %779 = vmatpush1.msra.mxu0 0.0
        %780 = vmatprep.subr.mxu0 0.0
        %781 = vmatpush1.msra.mxu0 0.0
        %782 = vmatprep.subr.mxu0 0.0
        %783 = vmatpush1.msra.mxu0 0.0
        %784 = vmatprep.subr.mxu0 0.0
        %785 = vmatpush1.msra.mxu0 0.0
        %786 = vmatprep.subr.mxu0 0.0
        %787 = vmatpush1.msra.mxu0 0.0
        %788 = vmatprep.subr.mxu0 0.0
        %789 = vmatpush1.msra.mxu0 0.0
        %790 = vmatprep.subr.mxu0 0.0
        %791 = vmatpush1.msra.mxu0 0.0
        %792 = vmatprep.subr.mxu0 0.0
        %793 = vmatpush1.msra.mxu0 0.0
        %794 = vmatprep.subr.mxu0 0.0
        %795 = vmatpush1.msra.mxu0 0.0
        %796 = vmatprep.mubr.f32.mxu0 0.0
        %797 = vmatmul.mubr.f32.gmra.mrb[0].mxu0 %v721
        %v798 = vpop.f32.mrb[0].mxu0
        %v799 = vadd.f32 0.0, %v798
        %v800 = vpop.f32.mrb[0].mxu0
        %801 = vmatprep.mubr.f32.mxu0 0.0
        %802 = vmatmul.mubr.f32.gmra.mrb[0].mxu0 %v724
        %v803 = vpop.f32.mrb[0].mxu0
        %v804 = vadd.f32 0.0, %v803
        %v805 = vpop.f32.mrb[0].mxu0
        %806 = vmatprep.mubr.f32.mxu0 0.0
        %807 = vmatmul.mubr.f32.gmra.mrb[0].mxu0 %v727
        %v808 = vpop.f32.mrb[0].mxu0
        %v809 = vadd.f32 0.0, %v808
        %v810 = vpop.f32.mrb[0].mxu0
        %811 = vmatprep.mubr.f32.mxu0 0.0
        %812 = vmatmul.mubr.f32.gmra.mrb[0].mxu0 %v730
        %v813 = vpop.f32.mrb[0].mxu0
        %v814 = vadd.f32 0.0, %v813
        %v815 = vpop.f32.mrb[0].mxu0
        %816 = vdwg.mxu0
        %s817 = scalar_lea.vmem %s2, 128
        %v818 = vld [vmem:[%s817] sm:$0xff]
        %v819 = vld [vmem:[%s817 + $0x8] sm:$0xff]
        %v820 = vld [vmem:[%s817 + $0x10] sm:$0xff]
        %v821 = vld [vmem:[%s817 + $0x18] sm:$0xff]
        %v822 = vld [vmem:[%s817 + $0x20] sm:$0xff]
        %v823 = vld [vmem:[%s817 + $0x28] sm:$0xff]
        %v824 = vld [vmem:[%s817 + $0x30] sm:$0xff]
        %v825 = vld [vmem:[%s817 + $0x38] sm:$0xff]
        %v826 = vld [vmem:[%s817 + $0x40] sm:$0xff]
        %v827 = vld [vmem:[%s817 + $0x48] sm:$0xff]
        %v828 = vld [vmem:[%s817 + $0x50] sm:$0xff]
        %v829 = vld [vmem:[%s817 + $0x58] sm:$0xff]
        %v830 = vld [vmem:[%s817 + $0x60] sm:$0xff]
        %v831 = vld [vmem:[%s817 + $0x68] sm:$0xff]
        %v832 = vld [vmem:[%s817 + $0x70] sm:$0xff]
        %v833 = vld [vmem:[%s817 + $0x78] sm:$0xff]
        %v835 = vsel %vm585, %v799, 0
        %v838 = vsel %vm585, %v804, 0
        %v841 = vsel %vm585, %v809, 0
        %v844 = vsel %vm585, %v814, 0
        %846 = vmatprep.subr.mxu0 %v819
        %847 = vmatpush1.msra.mxu0 %v818
        %848 = vmatprep.subr.mxu0 %v821
        %849 = vmatpush1.msra.mxu0 %v820
        %850 = vmatprep.subr.mxu0 %v823
        %851 = vmatpush1.msra.mxu0 %v822
        %852 = vmatprep.subr.mxu0 %v825
        %853 = vmatpush1.msra.mxu0 %v824
        %854 = vmatprep.subr.mxu0 %v827
        %855 = vmatpush1.msra.mxu0 %v826
        %856 = vmatprep.subr.mxu0 %v829
        %857 = vmatpush1.msra.mxu0 %v828
        %858 = vmatprep.subr.mxu0 %v831
        %859 = vmatpush1.msra.mxu0 %v830
        %860 = vmatprep.subr.mxu0 %v833
        %861 = vmatpush1.msra.mxu0 %v832
        %862 = vmatprep.subr.mxu0 0.0
        %863 = vmatpush1.msra.mxu0 0.0
        %864 = vmatprep.subr.mxu0 0.0
        %865 = vmatpush1.msra.mxu0 0.0
        %866 = vmatprep.subr.mxu0 0.0
        %867 = vmatpush1.msra.mxu0 0.0
        %868 = vmatprep.subr.mxu0 0.0
        %869 = vmatpush1.msra.mxu0 0.0
        %870 = vmatprep.subr.mxu0 0.0
        %871 = vmatpush1.msra.mxu0 0.0
        %872 = vmatprep.subr.mxu0 0.0
        %873 = vmatpush1.msra.mxu0 0.0
        %874 = vmatprep.subr.mxu0 0.0
        %875 = vmatpush1.msra.mxu0 0.0
        %876 = vmatprep.subr.mxu0 0.0
        %877 = vmatpush1.msra.mxu0 0.0
        %878 = vmatprep.subr.mxu0 0.0
        %879 = vmatpush1.msra.mxu0 0.0
        %880 = vmatprep.subr.mxu0 0.0
        %881 = vmatpush1.msra.mxu0 0.0
        %882 = vmatprep.subr.mxu0 0.0
        %883 = vmatpush1.msra.mxu0 0.0
        %884 = vmatprep.subr.mxu0 0.0
        %885 = vmatpush1.msra.mxu0 0.0
        %886 = vmatprep.subr.mxu0 0.0
        %887 = vmatpush1.msra.mxu0 0.0
        %888 = vmatprep.subr.mxu0 0.0
        %889 = vmatpush1.msra.mxu0 0.0
        %890 = vmatprep.subr.mxu0 0.0
        %891 = vmatpush1.msra.mxu0 0.0
        %892 = vmatprep.subr.mxu0 0.0
        %893 = vmatpush1.msra.mxu0 0.0
        %894 = vmatprep.subr.mxu0 0.0
        %895 = vmatpush1.msra.mxu0 0.0
        %896 = vmatprep.subr.mxu0 0.0
        %897 = vmatpush1.msra.mxu0 0.0
        %898 = vmatprep.subr.mxu0 0.0
        %899 = vmatpush1.msra.mxu0 0.0
        %900 = vmatprep.subr.mxu0 0.0
        %901 = vmatpush1.msra.mxu0 0.0
        %902 = vmatprep.subr.mxu0 0.0
        %903 = vmatpush1.msra.mxu0 0.0
        %904 = vmatprep.subr.mxu0 0.0
        %905 = vmatpush1.msra.mxu0 0.0
        %906 = vmatprep.subr.mxu0 0.0
        %907 = vmatpush1.msra.mxu0 0.0
        %908 = vmatprep.subr.mxu0 0.0
        %909 = vmatpush1.msra.mxu0 0.0
        %910 = vmatprep.mubr.f32.mxu0 0.0
        %911 = vmatmul.mubr.f32.gmra.mrb[0].mxu0 %v835
        %v912 = vpop.f32.mrb[0].mxu0
        %v913 = vadd.f32 0.0, %v912
        %v914 = vpop.f32.mrb[0].mxu0
        %v915 = vadd.f32 0.0, %v914
        %916 = vmatprep.mubr.f32.mxu0 0.0
        %917 = vmatmul.mubr.f32.gmra.mrb[0].mxu0 %v838
        %v918 = vpop.f32.mrb[0].mxu0
        %v919 = vadd.f32 0.0, %v918
        %v920 = vpop.f32.mrb[0].mxu0
        %v921 = vadd.f32 0.0, %v920
        %922 = vmatprep.mubr.f32.mxu0 0.0
        %923 = vmatmul.mubr.f32.gmra.mrb[0].mxu0 %v841
        %v924 = vpop.f32.mrb[0].mxu0
        %v925 = vadd.f32 0.0, %v924
        %v926 = vpop.f32.mrb[0].mxu0
        %v927 = vadd.f32 0.0, %v926
        %928 = vmatprep.mubr.f32.mxu0 0.0
        %929 = vmatmul.mubr.f32.gmra.mrb[0].mxu0 %v844
        %v930 = vpop.f32.mrb[0].mxu0
        %v931 = vadd.f32 0.0, %v930
        %v932 = vpop.f32.mrb[0].mxu0
        %v933 = vadd.f32 0.0, %v932
        %934 = vdwg.mxu0
        %v936 = vsel %vm585, %v665, 0
        %v939 = vsel %vm585, %v670, 0
        %v942 = vsel %vm585, %v675, 0
        %v945 = vsel %vm585, %v680, 0
        %947 = vmatprep.subr.mxu0 %v684
        %948 = vmatpush1.msra.mxu0 %v683
        %949 = vmatprep.subr.mxu0 %v686
        %950 = vmatpush1.msra.mxu0 %v685
        %951 = vmatprep.subr.mxu0 %v688
        %952 = vmatpush1.msra.mxu0 %v687
        %953 = vmatprep.subr.mxu0 %v690
        %954 = vmatpush1.msra.mxu0 %v689
        %955 = vmatprep.subr.mxu0 %v692
        %956 = vmatpush1.msra.mxu0 %v691
        %957 = vmatprep.subr.mxu0 %v694
        %958 = vmatpush1.msra.mxu0 %v693
        %959 = vmatprep.subr.mxu0 %v696
        %960 = vmatpush1.msra.mxu0 %v695
        %961 = vmatprep.subr.mxu0 %v698
        %962 = vmatpush1.msra.mxu0 %v697
        %963 = vmatprep.subr.mxu0 0.0
        %964 = vmatpush1.msra.mxu0 0.0
        %965 = vmatprep.subr.mxu0 0.0
        %966 = vmatpush1.msra.mxu0 0.0
        %967 = vmatprep.subr.mxu0 0.0
        %968 = vmatpush1.msra.mxu0 0.0
        %969 = vmatprep.subr.mxu0 0.0
        %970 = vmatpush1.msra.mxu0 0.0
        %971 = vmatprep.subr.mxu0 0.0
        %972 = vmatpush1.msra.mxu0 0.0
        %973 = vmatprep.subr.mxu0 0.0
        %974 = vmatpush1.msra.mxu0 0.0
        %975 = vmatprep.subr.mxu0 0.0
        %976 = vmatpush1.msra.mxu0 0.0
        %977 = vmatprep.subr.mxu0 0.0
        %978 = vmatpush1.msra.mxu0 0.0
        %979 = vmatprep.subr.mxu0 0.0
        %980 = vmatpush1.msra.mxu0 0.0
        %981 = vmatprep.subr.mxu0 0.0
        %982 = vmatpush1.msra.mxu0 0.0
        %983 = vmatprep.subr.mxu0 0.0
        %984 = vmatpush1.msra.mxu0 0.0
        %985 = vmatprep.subr.mxu0 0.0
        %986 = vmatpush1.msra.mxu0 0.0
        %987 = vmatprep.subr.mxu0 0.0
        %988 = vmatpush1.msra.mxu0 0.0
        %989 = vmatprep.subr.mxu0 0.0
        %990 = vmatpush1.msra.mxu0 0.0
        %991 = vmatprep.subr.mxu0 0.0
        %992 = vmatpush1.msra.mxu0 0.0
        %993 = vmatprep.subr.mxu0 0.0
        %994 = vmatpush1.msra.mxu0 0.0
        %995 = vmatprep.subr.mxu0 0.0
        %996 = vmatpush1.msra.mxu0 0.0
        %997 = vmatprep.subr.mxu0 0.0
        %998 = vmatpush1.msra.mxu0 0.0
        %999 = vmatprep.subr.mxu0 0.0
        %1000 = vmatpush1.msra.mxu0 0.0
        %1001 = vmatprep.subr.mxu0 0.0
        %1002 = vmatpush1.msra.mxu0 0.0
        %1003 = vmatprep.subr.mxu0 0.0
        %1004 = vmatpush1.msra.mxu0 0.0
        %1005 = vmatprep.subr.mxu0 0.0
        %1006 = vmatpush1.msra.mxu0 0.0
        %1007 = vmatprep.subr.mxu0 0.0
        %1008 = vmatpush1.msra.mxu0 0.0
        %1009 = vmatprep.subr.mxu0 0.0
        %1010 = vmatpush1.msra.mxu0 0.0
        %1011 = vmatprep.mubr.f32.mxu0 0.0
        %1012 = vmatmul.mubr.f32.gmra.mrb[0].mxu0 %v936
        %v1013 = vpop.f32.mrb[0].mxu0
        %v1014 = vadd.f32 %v913, %v1013
        %v1015 = vpop.f32.mrb[0].mxu0
        %v1016 = vadd.f32 %v915, %v1015
        %1017 = vmatprep.mubr.f32.mxu0 0.0
        %1018 = vmatmul.mubr.f32.gmra.mrb[0].mxu0 %v939
        %v1019 = vpop.f32.mrb[0].mxu0
        %v1020 = vadd.f32 %v919, %v1019
        %v1021 = vpop.f32.mrb[0].mxu0
        %v1022 = vadd.f32 %v921, %v1021
        %1023 = vmatprep.mubr.f32.mxu0 0.0
        %1024 = vmatmul.mubr.f32.gmra.mrb[0].mxu0 %v942
        %v1025 = vpop.f32.mrb[0].mxu0
        %v1026 = vadd.f32 %v925, %v1025
        %v1027 = vpop.f32.mrb[0].mxu0
        %v1028 = vadd.f32 %v927, %v1027
        %1029 = vmatprep.mubr.f32.mxu0 0.0
        %1030 = vmatmul.mubr.f32.gmra.mrb[0].mxu0 %v945
        %v1031 = vpop.f32.mrb[0].mxu0
        %v1032 = vadd.f32 %v931, %v1031
        %v1033 = vpop.f32.mrb[0].mxu0
        %v1034 = vadd.f32 %v933, %v1033
        %1035 = vdwg.mxu0
        %s1036 = scalar_lea.vmem %s3, 128
        %v1037 = vld [vmem:[%s1036] sm:$0xff]
        %v1038 = vld [vmem:[%s1036 + $0x8] sm:$0xff]
        %v1039 = vld [vmem:[%s1036 + $0x10] sm:$0xff]
        %v1040 = vld [vmem:[%s1036 + $0x18] sm:$0xff]
        %v1041 = vld [vmem:[%s1036 + $0x20] sm:$0xff]
        %v1042 = vld [vmem:[%s1036 + $0x28] sm:$0xff]
        %v1043 = vld [vmem:[%s1036 + $0x30] sm:$0xff]
        %v1044 = vld [vmem:[%s1036 + $0x38] sm:$0xff]
        %v1045 = vld [vmem:[%s1036 + $0x40] sm:$0xff]
        %v1046 = vld [vmem:[%s1036 + $0x48] sm:$0xff]
        %v1047 = vld [vmem:[%s1036 + $0x50] sm:$0xff]
        %v1048 = vld [vmem:[%s1036 + $0x58] sm:$0xff]
        %v1049 = vld [vmem:[%s1036 + $0x60] sm:$0xff]
        %v1050 = vld [vmem:[%s1036 + $0x68] sm:$0xff]
        %v1051 = vld [vmem:[%s1036 + $0x70] sm:$0xff]
        %v1052 = vld [vmem:[%s1036 + $0x78] sm:$0xff]
        %1053 = vmatprep.subr.mxu0 %v1038
        %1054 = vmatpush1.msra.mxu0 %v1037
        %1055 = vmatprep.subr.mxu0 %v1040
        %1056 = vmatpush1.msra.mxu0 %v1039
        %1057 = vmatprep.subr.mxu0 %v1042
        %1058 = vmatpush1.msra.mxu0 %v1041
        %1059 = vmatprep.subr.mxu0 %v1044
        %1060 = vmatpush1.msra.mxu0 %v1043
        %1061 = vmatprep.subr.mxu0 %v1046
        %1062 = vmatpush1.msra.mxu0 %v1045
        %1063 = vmatprep.subr.mxu0 %v1048
        %1064 = vmatpush1.msra.mxu0 %v1047
        %1065 = vmatprep.subr.mxu0 %v1050
        %1066 = vmatpush1.msra.mxu0 %v1049
        %1067 = vmatprep.subr.mxu0 %v1052
        %1068 = vmatpush1.msra.mxu0 %v1051
        %1069 = vmatprep.subr.mxu0 0.0
        %1070 = vmatpush1.msra.mxu0 0.0
        %1071 = vmatprep.subr.mxu0 0.0
        %1072 = vmatpush1.msra.mxu0 0.0
        %1073 = vmatprep.subr.mxu0 0.0
        %1074 = vmatpush1.msra.mxu0 0.0
        %1075 = vmatprep.subr.mxu0 0.0
        %1076 = vmatpush1.msra.mxu0 0.0
        %1077 = vmatprep.subr.mxu0 0.0
        %1078 = vmatpush1.msra.mxu0 0.0
        %1079 = vmatprep.subr.mxu0 0.0
        %1080 = vmatpush1.msra.mxu0 0.0
        %1081 = vmatprep.subr.mxu0 0.0
        %1082 = vmatpush1.msra.mxu0 0.0
        %1083 = vmatprep.subr.mxu0 0.0
        %1084 = vmatpush1.msra.mxu0 0.0
        %1085 = vmatprep.subr.mxu0 0.0
        %1086 = vmatpush1.msra.mxu0 0.0
        %1087 = vmatprep.subr.mxu0 0.0
        %1088 = vmatpush1.msra.mxu0 0.0
        %1089 = vmatprep.subr.mxu0 0.0
        %1090 = vmatpush1.msra.mxu0 0.0
        %1091 = vmatprep.subr.mxu0 0.0
        %1092 = vmatpush1.msra.mxu0 0.0
        %1093 = vmatprep.subr.mxu0 0.0
        %1094 = vmatpush1.msra.mxu0 0.0
        %1095 = vmatprep.subr.mxu0 0.0
        %1096 = vmatpush1.msra.mxu0 0.0
        %1097 = vmatprep.subr.mxu0 0.0
        %1098 = vmatpush1.msra.mxu0 0.0
        %1099 = vmatprep.subr.mxu0 0.0
        %1100 = vmatpush1.msra.mxu0 0.0
        %1101 = vmatprep.subr.mxu0 0.0
        %1102 = vmatpush1.msra.mxu0 0.0
        %1103 = vmatprep.subr.mxu0 0.0
        %1104 = vmatpush1.msra.mxu0 0.0
        %1105 = vmatprep.subr.mxu0 0.0
        %1106 = vmatpush1.msra.mxu0 0.0
        %1107 = vmatprep.subr.mxu0 0.0
        %1108 = vmatpush1.msra.mxu0 0.0
        %1109 = vmatprep.subr.mxu0 0.0
        %1110 = vmatpush1.msra.mxu0 0.0
        %1111 = vmatprep.subr.mxu0 0.0
        %1112 = vmatpush1.msra.mxu0 0.0
        %1113 = vmatprep.subr.mxu0 0.0
        %1114 = vmatpush1.msra.mxu0 0.0
        %1115 = vmatprep.subr.mxu0 0.0
        %1116 = vmatpush1.msra.mxu0 0.0
        %1117 = vmatprep.mubr.f32.mxu0 0.0
        %1118 = vmatmul.mubr.f32.gmra.mrb[0].mxu0 %v835
        %v1119 = vpop.f32.mrb[0].mxu0
        %v1120 = vadd.f32 0.0, %v1119
        %v1121 = vpop.f32.mrb[0].mxu0
        %v1122 = vadd.f32 0.0, %v1121
        %1123 = vmatprep.mubr.f32.mxu0 0.0
        %1124 = vmatmul.mubr.f32.gmra.mrb[0].mxu0 %v838
        %v1125 = vpop.f32.mrb[0].mxu0
        %v1126 = vadd.f32 0.0, %v1125
        %v1127 = vpop.f32.mrb[0].mxu0
        %v1128 = vadd.f32 0.0, %v1127
        %1129 = vmatprep.mubr.f32.mxu0 0.0
        %1130 = vmatmul.mubr.f32.gmra.mrb[0].mxu0 %v841
        %v1131 = vpop.f32.mrb[0].mxu0
        %v1132 = vadd.f32 0.0, %v1131
        %v1133 = vpop.f32.mrb[0].mxu0
        %v1134 = vadd.f32 0.0, %v1133
        %1135 = vmatprep.mubr.f32.mxu0 0.0
        %1136 = vmatmul.mubr.f32.gmra.mrb[0].mxu0 %v844
        %v1137 = vpop.f32.mrb[0].mxu0
        %v1138 = vadd.f32 0.0, %v1137
        %v1139 = vpop.f32.mrb[0].mxu0
        %v1140 = vadd.f32 0.0, %v1139
        %1141 = vdwg.mxu0
        %1142 = vmatprep.subr.mxu0 %v700
        %1143 = vmatpush1.msra.mxu0 %v699
        %1144 = vmatprep.subr.mxu0 %v702
        %1145 = vmatpush1.msra.mxu0 %v701
        %1146 = vmatprep.subr.mxu0 %v704
        %1147 = vmatpush1.msra.mxu0 %v703
        %1148 = vmatprep.subr.mxu0 %v706
        %1149 = vmatpush1.msra.mxu0 %v705
        %1150 = vmatprep.subr.mxu0 %v708
        %1151 = vmatpush1.msra.mxu0 %v707
        %1152 = vmatprep.subr.mxu0 %v710
        %1153 = vmatpush1.msra.mxu0 %v709
        %1154 = vmatprep.subr.mxu0 %v712
        %1155 = vmatpush1.msra.mxu0 %v711
        %1156 = vmatprep.subr.mxu0 %v714
        %1157 = vmatpush1.msra.mxu0 %v713
        %1158 = vmatprep.subr.mxu0 0.0
        %1159 = vmatpush1.msra.mxu0 0.0
        %1160 = vmatprep.subr.mxu0 0.0
        %1161 = vmatpush1.msra.mxu0 0.0
        %1162 = vmatprep.subr.mxu0 0.0
        %1163 = vmatpush1.msra.mxu0 0.0
        %1164 = vmatprep.subr.mxu0 0.0
        %1165 = vmatpush1.msra.mxu0 0.0
        %1166 = vmatprep.subr.mxu0 0.0
        %1167 = vmatpush1.msra.mxu0 0.0
        %1168 = vmatprep.subr.mxu0 0.0
        %1169 = vmatpush1.msra.mxu0 0.0
        %1170 = vmatprep.subr.mxu0 0.0
        %1171 = vmatpush1.msra.mxu0 0.0
        %1172 = vmatprep.subr.mxu0 0.0
        %1173 = vmatpush1.msra.mxu0 0.0
        %1174 = vmatprep.subr.mxu0 0.0
        %1175 = vmatpush1.msra.mxu0 0.0
        %1176 = vmatprep.subr.mxu0 0.0
        %1177 = vmatpush1.msra.mxu0 0.0
        %1178 = vmatprep.subr.mxu0 0.0
        %1179 = vmatpush1.msra.mxu0 0.0
        %1180 = vmatprep.subr.mxu0 0.0
        %1181 = vmatpush1.msra.mxu0 0.0
        %1182 = vmatprep.subr.mxu0 0.0
        %1183 = vmatpush1.msra.mxu0 0.0
        %1184 = vmatprep.subr.mxu0 0.0
        %1185 = vmatpush1.msra.mxu0 0.0
        %1186 = vmatprep.subr.mxu0 0.0
        %1187 = vmatpush1.msra.mxu0 0.0
        %1188 = vmatprep.subr.mxu0 0.0
        %1189 = vmatpush1.msra.mxu0 0.0
        %1190 = vmatprep.subr.mxu0 0.0
        %1191 = vmatpush1.msra.mxu0 0.0
        %1192 = vmatprep.subr.mxu0 0.0
        %1193 = vmatpush1.msra.mxu0 0.0
        %1194 = vmatprep.subr.mxu0 0.0
        %1195 = vmatpush1.msra.mxu0 0.0
        %1196 = vmatprep.subr.mxu0 0.0
        %1197 = vmatpush1.msra.mxu0 0.0
        %1198 = vmatprep.subr.mxu0 0.0
        %1199 = vmatpush1.msra.mxu0 0.0
        %1200 = vmatprep.subr.mxu0 0.0
        %1201 = vmatpush1.msra.mxu0 0.0
        %1202 = vmatprep.subr.mxu0 0.0
        %1203 = vmatpush1.msra.mxu0 0.0
        %1204 = vmatprep.subr.mxu0 0.0
        %1205 = vmatpush1.msra.mxu0 0.0
        %1206 = vmatprep.mubr.f32.mxu0 0.0
        %1207 = vmatmul.mubr.f32.gmra.mrb[0].mxu0 %v936
        %v1208 = vpop.f32.mrb[0].mxu0
        %v1209 = vadd.f32 %v1120, %v1208
        %v1210 = vpop.f32.mrb[0].mxu0
        %v1211 = vadd.f32 %v1122, %v1210
        %1212 = vmatprep.mubr.f32.mxu0 0.0
        %1213 = vmatmul.mubr.f32.gmra.mrb[0].mxu0 %v939
        %v1214 = vpop.f32.mrb[0].mxu0
        %v1215 = vadd.f32 %v1126, %v1214
        %v1216 = vpop.f32.mrb[0].mxu0
        %v1217 = vadd.f32 %v1128, %v1216
        %1218 = vmatprep.mubr.f32.mxu0 0.0
        %1219 = vmatmul.mubr.f32.gmra.mrb[0].mxu0 %v942
        %v1220 = vpop.f32.mrb[0].mxu0
        %v1221 = vadd.f32 %v1132, %v1220
        %v1222 = vpop.f32.mrb[0].mxu0
        %v1223 = vadd.f32 %v1134, %v1222
        %1224 = vmatprep.mubr.f32.mxu0 0.0
        %1225 = vmatmul.mubr.f32.gmra.mrb[0].mxu0 %v945
        %v1226 = vpop.f32.mrb[0].mxu0
        %v1227 = vadd.f32 %v1138, %v1226
        %v1228 = vpop.f32.mrb[0].mxu0
        %v1229 = vadd.f32 %v1140, %v1228
        %1230 = vdwg.mxu0
        %s1231 = scalar_lea.vmem %s1, 64
        %v1232 = vld [vmem:[%s1231] sm:$0xff]
        %v1233 = vld [vmem:[%s1231 + $0x8] sm:$0xff]
        %v1234 = vld [vmem:[%s1231 + $0x10] sm:$0xff]
        %v1235 = vld [vmem:[%s1231 + $0x18] sm:$0x7f]
        %v1237 = vsel %vm585, %v1232, 0
        %v1240 = vsel %vm585, %v1233, 0
        %v1243 = vsel %vm585, %v1234, 0
        %v1246 = vsel %vm585, %v1235, 0
        %1248 = vmatprep.subr.mxu0 0.0
        %1249 = vmatpush1.msra.mxu0 %v573
        %1250 = vmatprep.subr.mxu0 0.0
        %1251 = vmatpush1.msra.mxu0 %v574
        %1252 = vmatprep.subr.mxu0 0.0
        %1253 = vmatpush1.msra.mxu0 %v575
        %1254 = vmatprep.subr.mxu0 0.0
        %1255 = vmatpush1.msra.mxu0 %v576
        %1256 = vmatprep.subr.mxu0 0.0
        %1257 = vmatpush1.msra.mxu0 %v577
        %1258 = vmatprep.subr.mxu0 0.0
        %1259 = vmatpush1.msra.mxu0 %v578
        %1260 = vmatprep.subr.mxu0 0.0
        %1261 = vmatpush1.msra.mxu0 %v579
        %1262 = vmatprep.subr.mxu0 0.0
        %1263 = vmatpush1.msra.mxu0 %v580
        %1264 = vmatprep.subr.mxu0 0.0
        %1265 = vmatpush1.msra.mxu0 0.0
        %1266 = vmatprep.subr.mxu0 0.0
        %1267 = vmatpush1.msra.mxu0 0.0
        %1268 = vmatprep.subr.mxu0 0.0
        %1269 = vmatpush1.msra.mxu0 0.0
        %1270 = vmatprep.subr.mxu0 0.0
        %1271 = vmatpush1.msra.mxu0 0.0
        %1272 = vmatprep.subr.mxu0 0.0
        %1273 = vmatpush1.msra.mxu0 0.0
        %1274 = vmatprep.subr.mxu0 0.0
        %1275 = vmatpush1.msra.mxu0 0.0
        %1276 = vmatprep.subr.mxu0 0.0
        %1277 = vmatpush1.msra.mxu0 0.0
        %1278 = vmatprep.subr.mxu0 0.0
        %1279 = vmatpush1.msra.mxu0 0.0
        %1280 = vmatprep.subr.mxu0 0.0
        %1281 = vmatpush1.msra.mxu0 0.0
        %1282 = vmatprep.subr.mxu0 0.0
        %1283 = vmatpush1.msra.mxu0 0.0
        %1284 = vmatprep.subr.mxu0 0.0
        %1285 = vmatpush1.msra.mxu0 0.0
        %1286 = vmatprep.subr.mxu0 0.0
        %1287 = vmatpush1.msra.mxu0 0.0
        %1288 = vmatprep.subr.mxu0 0.0
        %1289 = vmatpush1.msra.mxu0 0.0
        %1290 = vmatprep.subr.mxu0 0.0
        %1291 = vmatpush1.msra.mxu0 0.0
        %1292 = vmatprep.subr.mxu0 0.0
        %1293 = vmatpush1.msra.mxu0 0.0
        %1294 = vmatprep.subr.mxu0 0.0
        %1295 = vmatpush1.msra.mxu0 0.0
        %1296 = vmatprep.subr.mxu0 0.0
        %1297 = vmatpush1.msra.mxu0 0.0
        %1298 = vmatprep.subr.mxu0 0.0
        %1299 = vmatpush1.msra.mxu0 0.0
        %1300 = vmatprep.subr.mxu0 0.0
        %1301 = vmatpush1.msra.mxu0 0.0
        %1302 = vmatprep.subr.mxu0 0.0
        %1303 = vmatpush1.msra.mxu0 0.0
        %1304 = vmatprep.subr.mxu0 0.0
        %1305 = vmatpush1.msra.mxu0 0.0
        %1306 = vmatprep.subr.mxu0 0.0
        %1307 = vmatpush1.msra.mxu0 0.0
        %1308 = vmatprep.subr.mxu0 0.0
        %1309 = vmatpush1.msra.mxu0 0.0
        %1310 = vmatprep.subr.mxu0 0.0
        %1311 = vmatpush1.msra.mxu0 0.0
        %1312 = vmatprep.mubr.f32.mxu0 0.0
        %1313 = vmatmul.mubr.f32.gmra.mrb[0].mxu0 %v1237
        %v1314 = vpop.f32.mrb[0].mxu0
        %v1315 = vadd.f32 0.0, %v1314
        %v1316 = vpop.f32.mrb[0].mxu0
        %1317 = vmatprep.mubr.f32.mxu0 0.0
        %1318 = vmatmul.mubr.f32.gmra.mrb[0].mxu0 %v1240
        %v1319 = vpop.f32.mrb[0].mxu0
        %v1320 = vadd.f32 0.0, %v1319
        %v1321 = vpop.f32.mrb[0].mxu0
        %1322 = vmatprep.mubr.f32.mxu0 0.0
        %1323 = vmatmul.mubr.f32.gmra.mrb[0].mxu0 %v1243
        %v1324 = vpop.f32.mrb[0].mxu0
        %v1325 = vadd.f32 0.0, %v1324
        %v1326 = vpop.f32.mrb[0].mxu0
        %1327 = vmatprep.mubr.f32.mxu0 0.0
        %1328 = vmatmul.mubr.f32.gmra.mrb[0].mxu0 %v1246
        %v1329 = vpop.f32.mrb[0].mxu0
        %v1330 = vadd.f32 0.0, %v1329
        %v1331 = vpop.f32.mrb[0].mxu0
        %1332 = vdwg.mxu0
        %s1333 = scalar_lea.vmem %s2, 256
        %v1334 = vld [vmem:[%s1333] sm:$0xff]
        %v1335 = vld [vmem:[%s1333 + $0x8] sm:$0xff]
        %v1336 = vld [vmem:[%s1333 + $0x10] sm:$0xff]
        %v1337 = vld [vmem:[%s1333 + $0x18] sm:$0xff]
        %v1338 = vld [vmem:[%s1333 + $0x20] sm:$0xff]
        %v1339 = vld [vmem:[%s1333 + $0x28] sm:$0xff]
        %v1340 = vld [vmem:[%s1333 + $0x30] sm:$0xff]
        %v1341 = vld [vmem:[%s1333 + $0x38] sm:$0xff]
        %v1342 = vld [vmem:[%s1333 + $0x40] sm:$0xff]
        %v1343 = vld [vmem:[%s1333 + $0x48] sm:$0xff]
        %v1344 = vld [vmem:[%s1333 + $0x50] sm:$0xff]
        %v1345 = vld [vmem:[%s1333 + $0x58] sm:$0xff]
        %v1346 = vld [vmem:[%s1333 + $0x60] sm:$0xff]
        %v1347 = vld [vmem:[%s1333 + $0x68] sm:$0xff]
        %v1348 = vld [vmem:[%s1333 + $0x70] sm:$0xff]
        %v1349 = vld [vmem:[%s1333 + $0x78] sm:$0xff]
        %v1351 = vsel %vm585, %v1315, 0
        %v1354 = vsel %vm585, %v1320, 0
        %v1357 = vsel %vm585, %v1325, 0
        %v1360 = vsel %vm585, %v1330, 0
        %1362 = vmatprep.subr.mxu0 %v1335
        %1363 = vmatpush1.msra.mxu0 %v1334
        %1364 = vmatprep.subr.mxu0 %v1337
        %1365 = vmatpush1.msra.mxu0 %v1336
        %1366 = vmatprep.subr.mxu0 %v1339
        %1367 = vmatpush1.msra.mxu0 %v1338
        %1368 = vmatprep.subr.mxu0 %v1341
        %1369 = vmatpush1.msra.mxu0 %v1340
        %1370 = vmatprep.subr.mxu0 %v1343
        %1371 = vmatpush1.msra.mxu0 %v1342
        %1372 = vmatprep.subr.mxu0 %v1345
        %1373 = vmatpush1.msra.mxu0 %v1344
        %1374 = vmatprep.subr.mxu0 %v1347
        %1375 = vmatpush1.msra.mxu0 %v1346
        %1376 = vmatprep.subr.mxu0 %v1349
        %1377 = vmatpush1.msra.mxu0 %v1348
        %1378 = vmatprep.subr.mxu0 0.0
        %1379 = vmatpush1.msra.mxu0 0.0
        %1380 = vmatprep.subr.mxu0 0.0
        %1381 = vmatpush1.msra.mxu0 0.0
        %1382 = vmatprep.subr.mxu0 0.0
        %1383 = vmatpush1.msra.mxu0 0.0
        %1384 = vmatprep.subr.mxu0 0.0
        %1385 = vmatpush1.msra.mxu0 0.0
        %1386 = vmatprep.subr.mxu0 0.0
        %1387 = vmatpush1.msra.mxu0 0.0
        %1388 = vmatprep.subr.mxu0 0.0
        %1389 = vmatpush1.msra.mxu0 0.0
        %1390 = vmatprep.subr.mxu0 0.0
        %1391 = vmatpush1.msra.mxu0 0.0
        %1392 = vmatprep.subr.mxu0 0.0
        %1393 = vmatpush1.msra.mxu0 0.0
        %1394 = vmatprep.subr.mxu0 0.0
        %1395 = vmatpush1.msra.mxu0 0.0
        %1396 = vmatprep.subr.mxu0 0.0
        %1397 = vmatpush1.msra.mxu0 0.0
        %1398 = vmatprep.subr.mxu0 0.0
        %1399 = vmatpush1.msra.mxu0 0.0
        %1400 = vmatprep.subr.mxu0 0.0
        %1401 = vmatpush1.msra.mxu0 0.0
        %1402 = vmatprep.subr.mxu0 0.0
        %1403 = vmatpush1.msra.mxu0 0.0
        %1404 = vmatprep.subr.mxu0 0.0
        %1405 = vmatpush1.msra.mxu0 0.0
        %1406 = vmatprep.subr.mxu0 0.0
        %1407 = vmatpush1.msra.mxu0 0.0
        %1408 = vmatprep.subr.mxu0 0.0
        %1409 = vmatpush1.msra.mxu0 0.0
        %1410 = vmatprep.subr.mxu0 0.0
        %1411 = vmatpush1.msra.mxu0 0.0
        %1412 = vmatprep.subr.mxu0 0.0
        %1413 = vmatpush1.msra.mxu0 0.0
        %1414 = vmatprep.subr.mxu0 0.0
        %1415 = vmatpush1.msra.mxu0 0.0
        %1416 = vmatprep.subr.mxu0 0.0
        %1417 = vmatpush1.msra.mxu0 0.0
        %1418 = vmatprep.subr.mxu0 0.0
        %1419 = vmatpush1.msra.mxu0 0.0
        %1420 = vmatprep.subr.mxu0 0.0
        %1421 = vmatpush1.msra.mxu0 0.0
        %1422 = vmatprep.subr.mxu0 0.0
        %1423 = vmatpush1.msra.mxu0 0.0
        %1424 = vmatprep.subr.mxu0 0.0
        %1425 = vmatpush1.msra.mxu0 0.0
        %1426 = vmatprep.mubr.f32.mxu0 0.0
        %1427 = vmatmul.mubr.f32.gmra.mrb[0].mxu0 %v1351
        %v1428 = vpop.f32.mrb[0].mxu0
        %v1429 = vadd.f32 0.0, %v1428
        %v1430 = vpop.f32.mrb[0].mxu0
        %v1431 = vadd.f32 0.0, %v1430
        %1432 = vmatprep.mubr.f32.mxu0 0.0
        %1433 = vmatmul.mubr.f32.gmra.mrb[0].mxu0 %v1354
        %v1434 = vpop.f32.mrb[0].mxu0
        %v1435 = vadd.f32 0.0, %v1434
        %v1436 = vpop.f32.mrb[0].mxu0
        %v1437 = vadd.f32 0.0, %v1436
        %1438 = vmatprep.mubr.f32.mxu0 0.0
        %1439 = vmatmul.mubr.f32.gmra.mrb[0].mxu0 %v1357
        %v1440 = vpop.f32.mrb[0].mxu0
        %v1441 = vadd.f32 0.0, %v1440
        %v1442 = vpop.f32.mrb[0].mxu0
        %v1443 = vadd.f32 0.0, %v1442
        %1444 = vmatprep.mubr.f32.mxu0 0.0
        %1445 = vmatmul.mubr.f32.gmra.mrb[0].mxu0 %v1360
        %v1446 = vpop.f32.mrb[0].mxu0
        %v1447 = vadd.f32 0.0, %v1446
        %v1448 = vpop.f32.mrb[0].mxu0
        %v1449 = vadd.f32 0.0, %v1448
        %1450 = vdwg.mxu0
        %v1451 = vadd.f32 %v1014, %v1429
        %v1452 = vadd.f32 %v1016, %v1431
        %v1453 = vadd.f32 %v1020, %v1435
        %v1454 = vadd.f32 %v1022, %v1437
        %v1455 = vadd.f32 %v1026, %v1441
        %v1456 = vadd.f32 %v1028, %v1443
        %v1457 = vadd.f32 %v1032, %v1447
        %v1458 = vadd.f32 %v1034, %v1449
        %s1459 = scalar_lea.vmem %s3, 256
        %v1460 = vld [vmem:[%s1459] sm:$0xff]
        %v1461 = vld [vmem:[%s1459 + $0x8] sm:$0xff]
        %v1462 = vld [vmem:[%s1459 + $0x10] sm:$0xff]
        %v1463 = vld [vmem:[%s1459 + $0x18] sm:$0xff]
        %v1464 = vld [vmem:[%s1459 + $0x20] sm:$0xff]
        %v1465 = vld [vmem:[%s1459 + $0x28] sm:$0xff]
        %v1466 = vld [vmem:[%s1459 + $0x30] sm:$0xff]
        %v1467 = vld [vmem:[%s1459 + $0x38] sm:$0xff]
        %v1468 = vld [vmem:[%s1459 + $0x40] sm:$0xff]
        %v1469 = vld [vmem:[%s1459 + $0x48] sm:$0xff]
        %v1470 = vld [vmem:[%s1459 + $0x50] sm:$0xff]
        %v1471 = vld [vmem:[%s1459 + $0x58] sm:$0xff]
        %v1472 = vld [vmem:[%s1459 + $0x60] sm:$0xff]
        %v1473 = vld [vmem:[%s1459 + $0x68] sm:$0xff]
        %v1474 = vld [vmem:[%s1459 + $0x70] sm:$0xff]
        %v1475 = vld [vmem:[%s1459 + $0x78] sm:$0xff]
        %1476 = vmatprep.subr.mxu0 %v1461
        %1477 = vmatpush1.msra.mxu0 %v1460
        %1478 = vmatprep.subr.mxu0 %v1463
        %1479 = vmatpush1.msra.mxu0 %v1462
        %1480 = vmatprep.subr.mxu0 %v1465
        %1481 = vmatpush1.msra.mxu0 %v1464
        %1482 = vmatprep.subr.mxu0 %v1467
        %1483 = vmatpush1.msra.mxu0 %v1466
        %1484 = vmatprep.subr.mxu0 %v1469
        %1485 = vmatpush1.msra.mxu0 %v1468
        %1486 = vmatprep.subr.mxu0 %v1471
        %1487 = vmatpush1.msra.mxu0 %v1470
        %1488 = vmatprep.subr.mxu0 %v1473
        %1489 = vmatpush1.msra.mxu0 %v1472
        %1490 = vmatprep.subr.mxu0 %v1475
        %1491 = vmatpush1.msra.mxu0 %v1474
        %1492 = vmatprep.subr.mxu0 0.0
        %1493 = vmatpush1.msra.mxu0 0.0
        %1494 = vmatprep.subr.mxu0 0.0
        %1495 = vmatpush1.msra.mxu0 0.0
        %1496 = vmatprep.subr.mxu0 0.0
        %1497 = vmatpush1.msra.mxu0 0.0
        %1498 = vmatprep.subr.mxu0 0.0
        %1499 = vmatpush1.msra.mxu0 0.0
        %1500 = vmatprep.subr.mxu0 0.0
        %1501 = vmatpush1.msra.mxu0 0.0
        %1502 = vmatprep.subr.mxu0 0.0
        %1503 = vmatpush1.msra.mxu0 0.0
        %1504 = vmatprep.subr.mxu0 0.0
        %1505 = vmatpush1.msra.mxu0 0.0
        %1506 = vmatprep.subr.mxu0 0.0
        %1507 = vmatpush1.msra.mxu0 0.0
        %1508 = vmatprep.subr.mxu0 0.0
        %1509 = vmatpush1.msra.mxu0 0.0
        %1510 = vmatprep.subr.mxu0 0.0
        %1511 = vmatpush1.msra.mxu0 0.0
        %1512 = vmatprep.subr.mxu0 0.0
        %1513 = vmatpush1.msra.mxu0 0.0
        %1514 = vmatprep.subr.mxu0 0.0
        %1515 = vmatpush1.msra.mxu0 0.0
        %1516 = vmatprep.subr.mxu0 0.0
        %1517 = vmatpush1.msra.mxu0 0.0
        %1518 = vmatprep.subr.mxu0 0.0
        %1519 = vmatpush1.msra.mxu0 0.0
        %1520 = vmatprep.subr.mxu0 0.0
        %1521 = vmatpush1.msra.mxu0 0.0
        %1522 = vmatprep.subr.mxu0 0.0
        %1523 = vmatpush1.msra.mxu0 0.0
        %1524 = vmatprep.subr.mxu0 0.0
        %1525 = vmatpush1.msra.mxu0 0.0
        %1526 = vmatprep.subr.mxu0 0.0
        %1527 = vmatpush1.msra.mxu0 0.0
        %1528 = vmatprep.subr.mxu0 0.0
        %1529 = vmatpush1.msra.mxu0 0.0
        %1530 = vmatprep.subr.mxu0 0.0
        %1531 = vmatpush1.msra.mxu0 0.0
        %1532 = vmatprep.subr.mxu0 0.0
        %1533 = vmatpush1.msra.mxu0 0.0
        %1534 = vmatprep.subr.mxu0 0.0
        %1535 = vmatpush1.msra.mxu0 0.0
        %1536 = vmatprep.subr.mxu0 0.0
        %1537 = vmatpush1.msra.mxu0 0.0
        %1538 = vmatprep.subr.mxu0 0.0
        %1539 = vmatpush1.msra.mxu0 0.0
        %1540 = vmatprep.mubr.f32.mxu0 0.0
        %1541 = vmatmul.mubr.f32.gmra.mrb[0].mxu0 %v1351
        %v1542 = vpop.f32.mrb[0].mxu0
        %v1543 = vadd.f32 0.0, %v1542
        %v1544 = vpop.f32.mrb[0].mxu0
        %v1545 = vadd.f32 0.0, %v1544
        %1546 = vmatprep.mubr.f32.mxu0 0.0
        %1547 = vmatmul.mubr.f32.gmra.mrb[0].mxu0 %v1354
        %v1548 = vpop.f32.mrb[0].mxu0
        %v1549 = vadd.f32 0.0, %v1548
        %v1550 = vpop.f32.mrb[0].mxu0
        %v1551 = vadd.f32 0.0, %v1550
        %1552 = vmatprep.mubr.f32.mxu0 0.0
        %1553 = vmatmul.mubr.f32.gmra.mrb[0].mxu0 %v1357
        %v1554 = vpop.f32.mrb[0].mxu0
        %v1555 = vadd.f32 0.0, %v1554
        %v1556 = vpop.f32.mrb[0].mxu0
        %v1557 = vadd.f32 0.0, %v1556
        %1558 = vmatprep.mubr.f32.mxu0 0.0
        %1559 = vmatmul.mubr.f32.gmra.mrb[0].mxu0 %v1360
        %v1560 = vpop.f32.mrb[0].mxu0
        %v1561 = vadd.f32 0.0, %v1560
        %v1562 = vpop.f32.mrb[0].mxu0
        %v1563 = vadd.f32 0.0, %v1562
        %1564 = vdwg.mxu0
        %v1565 = vadd.f32 %v1209, %v1543
        %v1566 = vadd.f32 %v1211, %v1545
        %v1567 = vadd.f32 %v1215, %v1549
        %v1568 = vadd.f32 %v1217, %v1551
        %v1569 = vadd.f32 %v1221, %v1555
        %v1570 = vadd.f32 %v1223, %v1557
        %v1571 = vadd.f32 %v1227, %v1561
        %v1572 = vadd.f32 %v1229, %v1563
        %v1573 = vld [vmem:[%s5] sm:$0x3]
        %v1575 = vlaneseq
        %v1576 = vshrl.u32 %v1575, 7
        %v1577 = vsub.s32 0, %v1576
        %v1578 = vrot.slane %v1573, %v1577
        %v1579 = vlaneseq
        %v1580 = vshrl.u32 %v1579, 7
        %v1581 = vsub.s32 1, %v1580
        %v1582 = vrot.slane %v1573, %v1581
        %v1585 = vadd.f32 %v1451, %v1578
        %v1586 = vadd.f32 %v1452, %v1582
        %v1587 = vadd.f32 %v1453, %v1578
        %v1588 = vadd.f32 %v1454, %v1582
        %v1589 = vadd.f32 %v1455, %v1578
        %v1590 = vadd.f32 %v1456, %v1582
        %v1591 = vadd.f32 %v1457, %v1578
        %v1592 = vadd.f32 %v1458, %v1582
        %v1593 = vmax.f32 %v1585, 0.0
        %v1594 = vmax.f32 %v1586, 0.0
        %v1595 = vmax.f32 %v1587, 0.0
        %v1596 = vmax.f32 %v1588, 0.0
        %v1597 = vmax.f32 %v1589, 0.0
        %v1598 = vmax.f32 %v1590, 0.0
        %v1599 = vmax.f32 %v1591, 0.0
        %v1600 = vmax.f32 %v1592, 0.0
        %v1601 = vadd.f32 %v1565, %v1578
        %v1602 = vadd.f32 %v1566, %v1582
        %v1603 = vadd.f32 %v1567, %v1578
        %v1604 = vadd.f32 %v1568, %v1582
        %v1605 = vadd.f32 %v1569, %v1578
        %v1606 = vadd.f32 %v1570, %v1582
        %v1607 = vadd.f32 %v1571, %v1578
        %v1608 = vadd.f32 %v1572, %v1582
        %v1609 = vmax.f32 %v1601, 0.0
        %v1610 = vmax.f32 %v1602, 0.0
        %v1611 = vmax.f32 %v1603, 0.0
        %v1612 = vmax.f32 %v1604, 0.0
        %v1613 = vmax.f32 %v1605, 0.0
        %v1614 = vmax.f32 %v1606, 0.0
        %v1615 = vmax.f32 %v1607, 0.0
        %v1616 = vmax.f32 %v1608, 0.0
        %v1617 = vmax.f32 %v1593, %v1609
        %v1618 = vmax.f32 %v1594, %v1610
        %v1619 = vmax.f32 %v1595, %v1611
        %v1620 = vmax.f32 %v1596, %v1612
        %v1621 = vmax.f32 %v1597, %v1613
        %v1622 = vmax.f32 %v1598, %v1614
        %v1623 = vmax.f32 %v1599, %v1615
        %v1624 = vmax.f32 %v1600, %v1616
        %v1625 = vld [vmem:[%s4] sm:$0xff]
        %v1626 = vld [vmem:[%s4 + $0x8] sm:$0x7f]
        %vm1627 = vcmask 252928
        %v1629 = vsel %vm1627, %v1625, 0
        %v1632 = vsel %vm1627, %v1626, 0
        %vm1634 = vcmask 1046528
        %v1636 = vsel %vm1634, %v1623, 0
        %v1639 = vsel %vm1634, %v1624, 0
        %1641 = vmatprep.subr.mxu0 %v1618
        %1642 = vmatpush1.msra.mxu0 %v1617
        %1643 = vmatprep.subr.mxu0 %v1620
        %1644 = vmatpush1.msra.mxu0 %v1619
        %1645 = vmatprep.subr.mxu0 %v1622
        %1646 = vmatpush1.msra.mxu0 %v1621
        %1647 = vmatprep.subr.mxu0 %v1639
        %1648 = vmatpush1.msra.mxu0 %v1636
        %1649 = vmatprep.subr.mxu0 0.0
        %1650 = vmatpush1.msra.mxu0 0.0
        %1651 = vmatprep.subr.mxu0 0.0
        %1652 = vmatpush1.msra.mxu0 0.0
        %1653 = vmatprep.subr.mxu0 0.0
        %1654 = vmatpush1.msra.mxu0 0.0
        %1655 = vmatprep.subr.mxu0 0.0
        %1656 = vmatpush1.msra.mxu0 0.0
        %1657 = vmatprep.subr.mxu0 0.0
        %1658 = vmatpush1.msra.mxu0 0.0
        %1659 = vmatprep.subr.mxu0 0.0
        %1660 = vmatpush1.msra.mxu0 0.0
        %1661 = vmatprep.subr.mxu0 0.0
        %1662 = vmatpush1.msra.mxu0 0.0
        %1663 = vmatprep.subr.mxu0 0.0
        %1664 = vmatpush1.msra.mxu0 0.0
        %1665 = vmatprep.subr.mxu0 0.0
        %1666 = vmatpush1.msra.mxu0 0.0
        %1667 = vmatprep.subr.mxu0 0.0
        %1668 = vmatpush1.msra.mxu0 0.0
        %1669 = vmatprep.subr.mxu0 0.0
        %1670 = vmatpush1.msra.mxu0 0.0
        %1671 = vmatprep.subr.mxu0 0.0
        %1672 = vmatpush1.msra.mxu0 0.0
        %1673 = vmatprep.subr.mxu0 0.0
        %1674 = vmatpush1.msra.mxu0 0.0
        %1675 = vmatprep.subr.mxu0 0.0
        %1676 = vmatpush1.msra.mxu0 0.0
        %1677 = vmatprep.subr.mxu0 0.0
        %1678 = vmatpush1.msra.mxu0 0.0
        %1679 = vmatprep.subr.mxu0 0.0
        %1680 = vmatpush1.msra.mxu0 0.0
        %1681 = vmatprep.subr.mxu0 0.0
        %1682 = vmatpush1.msra.mxu0 0.0
        %1683 = vmatprep.subr.mxu0 0.0
        %1684 = vmatpush1.msra.mxu0 0.0
        %1685 = vmatprep.subr.mxu0 0.0
        %1686 = vmatpush1.msra.mxu0 0.0
        %1687 = vmatprep.subr.mxu0 0.0
        %1688 = vmatpush1.msra.mxu0 0.0
        %1689 = vmatprep.subr.mxu0 0.0
        %1690 = vmatpush1.msra.mxu0 0.0
        %1691 = vmatprep.subr.mxu0 0.0
        %1692 = vmatpush1.msra.mxu0 0.0
        %1693 = vmatprep.subr.mxu0 0.0
        %1694 = vmatpush1.msra.mxu0 0.0
        %1695 = vmatprep.subr.mxu0 0.0
        %1696 = vmatpush1.msra.mxu0 0.0
        %1697 = vmatprep.subr.mxu0 0.0
        %1698 = vmatpush1.msra.mxu0 0.0
        %1699 = vmatprep.subr.mxu0 0.0
        %1700 = vmatpush1.msra.mxu0 0.0
        %1701 = vmatprep.subr.mxu0 0.0
        %1702 = vmatpush1.msra.mxu0 0.0
        %1703 = vmatprep.subr.mxu0 0.0
        %1704 = vmatpush1.msra.mxu0 0.0
        %1705 = vmatprep.mubr.f32.mxu0 0.0
        %1706 = vmatmul.mubr.f32.gmra.mrb[0].mxu0 %v1629
        %v1707 = vpop.f32.mrb[0].mxu0
        %v1708 = vadd.f32 0.0, %v1707
        %v1709 = vpop.f32.mrb[0].mxu0
        %v1710 = vadd.f32 0.0, %v1709
        %1711 = vmatprep.mubr.f32.mxu0 0.0
        %1712 = vmatmul.mubr.f32.gmra.mrb[0].mxu0 %v1632
        %v1713 = vpop.f32.mrb[0].mxu0
        %v1714 = vadd.f32 0.0, %v1713
        %v1715 = vpop.f32.mrb[0].mxu0
        %v1716 = vadd.f32 0.0, %v1715
        %1717 = vdwg.mxu0
        %s1718 = scalar_lea.vmem %s4, 16
        %v1719 = vld [vmem:[%s1718] sm:$0xff]
        %v1720 = vld [vmem:[%s1718 + $0x8] sm:$0x7f]
        %v1722 = vsel %vm1627, %v1719, 0
        %v1725 = vsel %vm1627, %v1720, 0
        %1727 = vmatprep.subr.mxu0 %v1618
        %1728 = vmatpush1.msra.mxu0 %v1617
        %1729 = vmatprep.subr.mxu0 %v1620
        %1730 = vmatpush1.msra.mxu0 %v1619
        %1731 = vmatprep.subr.mxu0 %v1622
        %1732 = vmatpush1.msra.mxu0 %v1621
        %1733 = vmatprep.subr.mxu0 %v1639
        %1734 = vmatpush1.msra.mxu0 %v1636
        %1735 = vmatprep.subr.mxu0 0.0
        %1736 = vmatpush1.msra.mxu0 0.0
        %1737 = vmatprep.subr.mxu0 0.0
        %1738 = vmatpush1.msra.mxu0 0.0
        %1739 = vmatprep.subr.mxu0 0.0
        %1740 = vmatpush1.msra.mxu0 0.0
        %1741 = vmatprep.subr.mxu0 0.0
        %1742 = vmatpush1.msra.mxu0 0.0
        %1743 = vmatprep.subr.mxu0 0.0
        %1744 = vmatpush1.msra.mxu0 0.0
        %1745 = vmatprep.subr.mxu0 0.0
        %1746 = vmatpush1.msra.mxu0 0.0
        %1747 = vmatprep.subr.mxu0 0.0
        %1748 = vmatpush1.msra.mxu0 0.0
        %1749 = vmatprep.subr.mxu0 0.0
        %1750 = vmatpush1.msra.mxu0 0.0
        %1751 = vmatprep.subr.mxu0 0.0
        %1752 = vmatpush1.msra.mxu0 0.0
        %1753 = vmatprep.subr.mxu0 0.0
        %1754 = vmatpush1.msra.mxu0 0.0
        %1755 = vmatprep.subr.mxu0 0.0
        %1756 = vmatpush1.msra.mxu0 0.0
        %1757 = vmatprep.subr.mxu0 0.0
        %1758 = vmatpush1.msra.mxu0 0.0
        %1759 = vmatprep.subr.mxu0 0.0
        %1760 = vmatpush1.msra.mxu0 0.0
        %1761 = vmatprep.subr.mxu0 0.0
        %1762 = vmatpush1.msra.mxu0 0.0
        %1763 = vmatprep.subr.mxu0 0.0
        %1764 = vmatpush1.msra.mxu0 0.0
        %1765 = vmatprep.subr.mxu0 0.0
        %1766 = vmatpush1.msra.mxu0 0.0
        %1767 = vmatprep.subr.mxu0 0.0
        %1768 = vmatpush1.msra.mxu0 0.0
        %1769 = vmatprep.subr.mxu0 0.0
        %1770 = vmatpush1.msra.mxu0 0.0
        %1771 = vmatprep.subr.mxu0 0.0
        %1772 = vmatpush1.msra.mxu0 0.0
        %1773 = vmatprep.subr.mxu0 0.0
        %1774 = vmatpush1.msra.mxu0 0.0
        %1775 = vmatprep.subr.mxu0 0.0
        %1776 = vmatpush1.msra.mxu0 0.0
        %1777 = vmatprep.subr.mxu0 0.0
        %1778 = vmatpush1.msra.mxu0 0.0
        %1779 = vmatprep.subr.mxu0 0.0
        %1780 = vmatpush1.msra.mxu0 0.0
        %1781 = vmatprep.subr.mxu0 0.0
        %1782 = vmatpush1.msra.mxu0 0.0
        %1783 = vmatprep.subr.mxu0 0.0
        %1784 = vmatpush1.msra.mxu0 0.0
        %1785 = vmatprep.subr.mxu0 0.0
        %1786 = vmatpush1.msra.mxu0 0.0
        %1787 = vmatprep.subr.mxu0 0.0
        %1788 = vmatpush1.msra.mxu0 0.0
        %1789 = vmatprep.subr.mxu0 0.0
        %1790 = vmatpush1.msra.mxu0 0.0
        %1791 = vmatprep.mubr.f32.mxu0 0.0
        %1792 = vmatmul.mubr.f32.gmra.mrb[0].mxu0 %v1722
        %v1793 = vpop.f32.mrb[0].mxu0
        %v1794 = vadd.f32 0.0, %v1793
        %v1795 = vpop.f32.mrb[0].mxu0
        %v1796 = vadd.f32 0.0, %v1795
        %1797 = vmatprep.mubr.f32.mxu0 0.0
        %1798 = vmatmul.mubr.f32.gmra.mrb[0].mxu0 %v1725
        %v1799 = vpop.f32.mrb[0].mxu0
        %v1800 = vadd.f32 0.0, %v1799
        %v1801 = vpop.f32.mrb[0].mxu0
        %v1802 = vadd.f32 0.0, %v1801
        %1803 = vdwg.mxu0
        %v1804 = vmax.f32 %v1708, %v1794
        %v1805 = vmax.f32 %v1710, %v1796
        %v1806 = vmax.f32 %v1714, %v1800
        %v1807 = vmax.f32 %v1716, %v1802
        %v1808 = vld [vmem:[%s6] sm:$0x7f]
        %vm1809 = vcmask 121856
        %v1811 = vsel %vm1809, %v1808, 0
        %v1814 = vsel %vm1634, %v1806, 0
        %v1817 = vsel %vm1634, %v1807, 0
        %1819 = vmatprep.subr.mxu0 %v1805
        %1820 = vmatpush1.msra.mxu0 %v1804
        %1821 = vmatprep.subr.mxu0 %v1817
        %1822 = vmatpush1.msra.mxu0 %v1814
        %1823 = vmatprep.subr.mxu0 0.0
        %1824 = vmatpush1.msra.mxu0 0.0
        %1825 = vmatprep.subr.mxu0 0.0
        %1826 = vmatpush1.msra.mxu0 0.0
        %1827 = vmatprep.subr.mxu0 0.0
        %1828 = vmatpush1.msra.mxu0 0.0
        %1829 = vmatprep.subr.mxu0 0.0
        %1830 = vmatpush1.msra.mxu0 0.0
        %1831 = vmatprep.subr.mxu0 0.0
        %1832 = vmatpush1.msra.mxu0 0.0
        %1833 = vmatprep.subr.mxu0 0.0
        %1834 = vmatpush1.msra.mxu0 0.0
        %1835 = vmatprep.subr.mxu0 0.0
        %1836 = vmatpush1.msra.mxu0 0.0
        %1837 = vmatprep.subr.mxu0 0.0
        %1838 = vmatpush1.msra.mxu0 0.0
        %1839 = vmatprep.subr.mxu0 0.0
        %1840 = vmatpush1.msra.mxu0 0.0
        %1841 = vmatprep.subr.mxu0 0.0
        %1842 = vmatpush1.msra.mxu0 0.0
        %1843 = vmatprep.subr.mxu0 0.0
        %1844 = vmatpush1.msra.mxu0 0.0
        %1845 = vmatprep.subr.mxu0 0.0
        %1846 = vmatpush1.msra.mxu0 0.0
        %1847 = vmatprep.subr.mxu0 0.0
        %1848 = vmatpush1.msra.mxu0 0.0
        %1849 = vmatprep.subr.mxu0 0.0
        %1850 = vmatpush1.msra.mxu0 0.0
        %1851 = vmatprep.subr.mxu0 0.0
        %1852 = vmatpush1.msra.mxu0 0.0
        %1853 = vmatprep.subr.mxu0 0.0
        %1854 = vmatpush1.msra.mxu0 0.0
        %1855 = vmatprep.subr.mxu0 0.0
        %1856 = vmatpush1.msra.mxu0 0.0
        %1857 = vmatprep.subr.mxu0 0.0
        %1858 = vmatpush1.msra.mxu0 0.0
        %1859 = vmatprep.subr.mxu0 0.0
        %1860 = vmatpush1.msra.mxu0 0.0
        %1861 = vmatprep.subr.mxu0 0.0
        %1862 = vmatpush1.msra.mxu0 0.0
        %1863 = vmatprep.subr.mxu0 0.0
        %1864 = vmatpush1.msra.mxu0 0.0
        %1865 = vmatprep.subr.mxu0 0.0
        %1866 = vmatpush1.msra.mxu0 0.0
        %1867 = vmatprep.subr.mxu0 0.0
        %1868 = vmatpush1.msra.mxu0 0.0
        %1869 = vmatprep.subr.mxu0 0.0
        %1870 = vmatpush1.msra.mxu0 0.0
        %1871 = vmatprep.subr.mxu0 0.0
        %1872 = vmatpush1.msra.mxu0 0.0
        %1873 = vmatprep.subr.mxu0 0.0
        %1874 = vmatpush1.msra.mxu0 0.0
        %1875 = vmatprep.subr.mxu0 0.0
        %1876 = vmatpush1.msra.mxu0 0.0
        %1877 = vmatprep.subr.mxu0 0.0
        %1878 = vmatpush1.msra.mxu0 0.0
        %1879 = vmatprep.subr.mxu0 0.0
        %1880 = vmatpush1.msra.mxu0 0.0
        %1881 = vmatprep.subr.mxu0 0.0
        %1882 = vmatpush1.msra.mxu0 0.0
        %1883 = vmatprep.mubr.f32.mxu0 0.0
        %1884 = vmatmul.mubr.f32.gmra.mrb[0].mxu0 %v1811
        %v1885 = vpop.f32.mrb[0].mxu0
        %v1886 = vadd.f32 0.0, %v1885
        %v1887 = vpop.f32.mrb[0].mxu0
        %v1888 = vadd.f32 0.0, %v1887
        %1889 = vdwg.mxu0
        %v1890 = vld [vmem:[%s7] sm:$0xff]
        %v1891 = vld [vmem:[%s7 + $0x8] sm:$0xff]
        %v1892 = vld [vmem:[%s7 + $0x10] sm:$0xff]
        %v1893 = vld [vmem:[%s7 + $0x18] sm:$0xff]
        %v1894 = vld [vmem:[%s7 + $0x20] sm:$0xff]
        %v1895 = vld [vmem:[%s7 + $0x28] sm:$0xff]
        %v1896 = vld [vmem:[%s7 + $0x30] sm:$0xff]
        %v1897 = vld [vmem:[%s7 + $0x38] sm:$0xff]
        %v1898 = vld [vmem:[%s7 + $0x40] sm:$0xff]
        %v1899 = vld [vmem:[%s7 + $0x48] sm:$0xff]
        %v1900 = vld [vmem:[%s7 + $0x50] sm:$0xff]
        %v1901 = vld [vmem:[%s7 + $0x58] sm:$0xff]
        %v1902 = vld [vmem:[%s7 + $0x60] sm:$0xff]
        %v1903 = vld [vmem:[%s7 + $0x68] sm:$0xff]
        %v1904 = vld [vmem:[%s7 + $0x70] sm:$0xff]
        %v1905 = vld [vmem:[%s7 + $0x78] sm:$0xff]
        %v1906 = vld [vmem:[%s7 + $0x80] sm:$0xff]
        %v1907 = vld [vmem:[%s7 + $0x88] sm:$0xff]
        %v1908 = vld [vmem:[%s7 + $0x90] sm:$0xff]
        %v1909 = vld [vmem:[%s7 + $0x98] sm:$0xff]
        %v1910 = vld [vmem:[%s7 + $0xa0] sm:$0xff]
        %v1911 = vld [vmem:[%s7 + $0xa8] sm:$0xff]
        %v1912 = vld [vmem:[%s7 + $0xb0] sm:$0xff]
        %v1913 = vld [vmem:[%s7 + $0xb8] sm:$0xff]
        %v1914 = vld [vmem:[%s7 + $0xc0] sm:$0xff]
        %v1915 = vld [vmem:[%s7 + $0xc8] sm:$0xff]
        %v1916 = vld [vmem:[%s7 + $0xd0] sm:$0xff]
        %v1917 = vld [vmem:[%s7 + $0xd8] sm:$0xff]
        %v1918 = vld [vmem:[%s7 + $0xe0] sm:$0xff]
        %v1919 = vld [vmem:[%s7 + $0xe8] sm:$0xff]
        %v1920 = vld [vmem:[%s8] sm:$0xff]
        %v1921 = vld [vmem:[%s8 + $0x8] sm:$0xff]
        %v1922 = vld [vmem:[%s8 + $0x10] sm:$0xff]
        %v1923 = vld [vmem:[%s8 + $0x18] sm:$0xff]
        %v1924 = vld [vmem:[%s8 + $0x20] sm:$0xff]
        %v1925 = vld [vmem:[%s8 + $0x28] sm:$0xff]
        %v1926 = vld [vmem:[%s8 + $0x30] sm:$0xff]
        %v1927 = vld [vmem:[%s8 + $0x38] sm:$0xff]
        %v1928 = vld [vmem:[%s8 + $0x40] sm:$0xff]
        %v1929 = vld [vmem:[%s8 + $0x48] sm:$0xff]
        %v1930 = vld [vmem:[%s8 + $0x50] sm:$0xff]
        %v1931 = vld [vmem:[%s8 + $0x58] sm:$0xff]
        %v1932 = vld [vmem:[%s8 + $0x60] sm:$0xff]
        %v1933 = vld [vmem:[%s8 + $0x68] sm:$0xff]
        %v1934 = vld [vmem:[%s8 + $0x70] sm:$0xff]
        %v1935 = vld [vmem:[%s8 + $0x78] sm:$0xff]
        %v1936 = vld [vmem:[%s8 + $0x80] sm:$0xff]
        %v1937 = vld [vmem:[%s8 + $0x88] sm:$0xff]
        %v1938 = vld [vmem:[%s8 + $0x90] sm:$0xff]
        %v1939 = vld [vmem:[%s8 + $0x98] sm:$0xff]
        %v1940 = vld [vmem:[%s8 + $0xa0] sm:$0xff]
        %v1941 = vld [vmem:[%s8 + $0xa8] sm:$0xff]
        %v1942 = vld [vmem:[%s8 + $0xb0] sm:$0xff]
        %v1943 = vld [vmem:[%s8 + $0xb8] sm:$0xff]
        %v1944 = vld [vmem:[%s8 + $0xc0] sm:$0xff]
        %v1945 = vld [vmem:[%s8 + $0xc8] sm:$0xff]
        %v1946 = vld [vmem:[%s8 + $0xd0] sm:$0xff]
        %v1947 = vld [vmem:[%s8 + $0xd8] sm:$0xff]
        %v1948 = vld [vmem:[%s8 + $0xe0] sm:$0xff]
        %v1949 = vld [vmem:[%s8 + $0xe8] sm:$0xff]
        %s1950 = scalar_lea.vmem %s6, 8
        %v1951 = vld [vmem:[%s1950] sm:$0x7f]
        %v1953 = vsel %vm1809, %v1951, 0
        %1955 = vmatprep.subr.mxu0 %v1805
        %1956 = vmatpush1.msra.mxu0 %v1804
        %1957 = vmatprep.subr.mxu0 %v1817
        %1958 = vmatpush1.msra.mxu0 %v1814
        %1959 = vmatprep.subr.mxu0 0.0
        %1960 = vmatpush1.msra.mxu0 0.0
        %1961 = vmatprep.subr.mxu0 0.0
        %1962 = vmatpush1.msra.mxu0 0.0
        %1963 = vmatprep.subr.mxu0 0.0
        %1964 = vmatpush1.msra.mxu0 0.0
        %1965 = vmatprep.subr.mxu0 0.0
        %1966 = vmatpush1.msra.mxu0 0.0
        %1967 = vmatprep.subr.mxu0 0.0
        %1968 = vmatpush1.msra.mxu0 0.0
        %1969 = vmatprep.subr.mxu0 0.0
        %1970 = vmatpush1.msra.mxu0 0.0
        %1971 = vmatprep.subr.mxu0 0.0
        %1972 = vmatpush1.msra.mxu0 0.0
        %1973 = vmatprep.subr.mxu0 0.0
        %1974 = vmatpush1.msra.mxu0 0.0
        %1975 = vmatprep.subr.mxu0 0.0
        %1976 = vmatpush1.msra.mxu0 0.0
        %1977 = vmatprep.subr.mxu0 0.0
        %1978 = vmatpush1.msra.mxu0 0.0
        %1979 = vmatprep.subr.mxu0 0.0
        %1980 = vmatpush1.msra.mxu0 0.0
        %1981 = vmatprep.subr.mxu0 0.0
        %1982 = vmatpush1.msra.mxu0 0.0
        %1983 = vmatprep.subr.mxu0 0.0
        %1984 = vmatpush1.msra.mxu0 0.0
        %1985 = vmatprep.subr.mxu0 0.0
        %1986 = vmatpush1.msra.mxu0 0.0
        %1987 = vmatprep.subr.mxu0 0.0
        %1988 = vmatpush1.msra.mxu0 0.0
        %1989 = vmatprep.subr.mxu0 0.0
        %1990 = vmatpush1.msra.mxu0 0.0
        %1991 = vmatprep.subr.mxu0 0.0
        %1992 = vmatpush1.msra.mxu0 0.0
        %1993 = vmatprep.subr.mxu0 0.0
        %1994 = vmatpush1.msra.mxu0 0.0
        %1995 = vmatprep.subr.mxu0 0.0
        %1996 = vmatpush1.msra.mxu0 0.0
        %1997 = vmatprep.subr.mxu0 0.0
        %1998 = vmatpush1.msra.mxu0 0.0
        %1999 = vmatprep.subr.mxu0 0.0
        %2000 = vmatpush1.msra.mxu0 0.0
        %2001 = vmatprep.subr.mxu0 0.0
        %2002 = vmatpush1.msra.mxu0 0.0
        %2003 = vmatprep.subr.mxu0 0.0
        %2004 = vmatpush1.msra.mxu0 0.0
        %2005 = vmatprep.subr.mxu0 0.0
        %2006 = vmatpush1.msra.mxu0 0.0
        %2007 = vmatprep.subr.mxu0 0.0
        %2008 = vmatpush1.msra.mxu0 0.0
        %2009 = vmatprep.subr.mxu0 0.0
        %2010 = vmatpush1.msra.mxu0 0.0
        %2011 = vmatprep.subr.mxu0 0.0
        %2012 = vmatpush1.msra.mxu0 0.0
        %2013 = vmatprep.subr.mxu0 0.0
        %2014 = vmatpush1.msra.mxu0 0.0
        %2015 = vmatprep.subr.mxu0 0.0
        %2016 = vmatpush1.msra.mxu0 0.0
        %2017 = vmatprep.subr.mxu0 0.0
        %2018 = vmatpush1.msra.mxu0 0.0
        %2019 = vmatprep.mubr.f32.mxu0 0.0
        %2020 = vmatmul.mubr.f32.gmra.mrb[0].mxu0 %v1953
        %v2021 = vpop.f32.mrb[0].mxu0
        %v2022 = vadd.f32 0.0, %v2021
        %v2023 = vpop.f32.mrb[0].mxu0
        %v2024 = vadd.f32 0.0, %v2023
        %2025 = vdwg.mxu0
        %s2026 = scalar_lea.vmem %s7, 240
        %v2027 = vld [vmem:[%s2026] sm:$0xff]
        %v2028 = vld [vmem:[%s2026 + $0x8] sm:$0xff]
        %v2029 = vld [vmem:[%s2026 + $0x10] sm:$0xff]
        %v2030 = vld [vmem:[%s2026 + $0x18] sm:$0xff]
        %v2031 = vld [vmem:[%s2026 + $0x20] sm:$0xff]
        %v2032 = vld [vmem:[%s2026 + $0x28] sm:$0xff]
        %v2033 = vld [vmem:[%s2026 + $0x30] sm:$0xff]
        %v2034 = vld [vmem:[%s2026 + $0x38] sm:$0xff]
        %v2035 = vld [vmem:[%s2026 + $0x40] sm:$0xff]
        %v2036 = vld [vmem:[%s2026 + $0x48] sm:$0xff]
        %v2037 = vld [vmem:[%s2026 + $0x50] sm:$0xff]
        %v2038 = vld [vmem:[%s2026 + $0x58] sm:$0xff]
        %v2039 = vld [vmem:[%s2026 + $0x60] sm:$0xff]
        %v2040 = vld [vmem:[%s2026 + $0x68] sm:$0xff]
        %v2041 = vld [vmem:[%s2026 + $0x70] sm:$0xff]
        %v2042 = vld [vmem:[%s2026 + $0x78] sm:$0xff]
        %v2043 = vld [vmem:[%s2026 + $0x80] sm:$0xff]
        %v2044 = vld [vmem:[%s2026 + $0x88] sm:$0xff]
        %v2045 = vld [vmem:[%s2026 + $0x90] sm:$0xff]
        %v2046 = vld [vmem:[%s2026 + $0x98] sm:$0xff]
        %v2047 = vld [vmem:[%s2026 + $0xa0] sm:$0xff]
        %v2048 = vld [vmem:[%s2026 + $0xa8] sm:$0xff]
        %v2049 = vld [vmem:[%s2026 + $0xb0] sm:$0xff]
        %v2050 = vld [vmem:[%s2026 + $0xb8] sm:$0xff]
        %v2051 = vld [vmem:[%s2026 + $0xc0] sm:$0xff]
        %v2052 = vld [vmem:[%s2026 + $0xc8] sm:$0xff]
        %v2053 = vld [vmem:[%s2026 + $0xd0] sm:$0xff]
        %v2054 = vld [vmem:[%s2026 + $0xd8] sm:$0xff]
        %v2055 = vld [vmem:[%s2026 + $0xe0] sm:$0xff]
        %v2056 = vld [vmem:[%s2026 + $0xe8] sm:$0xff]
        %vm2057 = vcmask 916480
        %v2059 = vsel %vm2057, %v2024, 0
        %2061 = vmatprep.subr.mxu0 0.0
        %2062 = vmatpush1.msra.mxu0 %v2027
        %2063 = vmatprep.subr.mxu0 0.0
        %2064 = vmatpush1.msra.mxu0 %v2028
        %2065 = vmatprep.subr.mxu0 0.0
        %2066 = vmatpush1.msra.mxu0 %v2029
        %2067 = vmatprep.subr.mxu0 0.0
        %2068 = vmatpush1.msra.mxu0 %v2030
        %2069 = vmatprep.subr.mxu0 0.0
        %2070 = vmatpush1.msra.mxu0 %v2031
        %2071 = vmatprep.subr.mxu0 0.0
        %2072 = vmatpush1.msra.mxu0 %v2032
        %2073 = vmatprep.subr.mxu0 0.0
        %2074 = vmatpush1.msra.mxu0 %v2033
        %2075 = vmatprep.subr.mxu0 0.0
        %2076 = vmatpush1.msra.mxu0 %v2034
        %2077 = vmatprep.subr.mxu0 0.0
        %2078 = vmatpush1.msra.mxu0 %v2035
        %2079 = vmatprep.subr.mxu0 0.0
        %2080 = vmatpush1.msra.mxu0 %v2036
        %2081 = vmatprep.subr.mxu0 0.0
        %2082 = vmatpush1.msra.mxu0 %v2037
        %2083 = vmatprep.subr.mxu0 0.0
        %2084 = vmatpush1.msra.mxu0 %v2038
        %2085 = vmatprep.subr.mxu0 0.0
        %2086 = vmatpush1.msra.mxu0 %v2039
        %2087 = vmatprep.subr.mxu0 0.0
        %2088 = vmatpush1.msra.mxu0 %v2040
        %2089 = vmatprep.subr.mxu0 0.0
        %2090 = vmatpush1.msra.mxu0 %v2041
        %2091 = vmatprep.subr.mxu0 0.0
        %2092 = vmatpush1.msra.mxu0 %v2042
        %2093 = vmatprep.subr.mxu0 0.0
        %2094 = vmatpush1.msra.mxu0 %v2043
        %2095 = vmatprep.subr.mxu0 0.0
        %2096 = vmatpush1.msra.mxu0 %v2044
        %2097 = vmatprep.subr.mxu0 0.0
        %2098 = vmatpush1.msra.mxu0 %v2045
        %2099 = vmatprep.subr.mxu0 0.0
        %2100 = vmatpush1.msra.mxu0 %v2046
        %2101 = vmatprep.subr.mxu0 0.0
        %2102 = vmatpush1.msra.mxu0 %v2047
        %2103 = vmatprep.subr.mxu0 0.0
        %2104 = vmatpush1.msra.mxu0 %v2048
        %2105 = vmatprep.subr.mxu0 0.0
        %2106 = vmatpush1.msra.mxu0 %v2049
        %2107 = vmatprep.subr.mxu0 0.0
        %2108 = vmatpush1.msra.mxu0 %v2050
        %2109 = vmatprep.subr.mxu0 0.0
        %2110 = vmatpush1.msra.mxu0 %v2051
        %2111 = vmatprep.subr.mxu0 0.0
        %2112 = vmatpush1.msra.mxu0 %v2052
        %2113 = vmatprep.subr.mxu0 0.0
        %2114 = vmatpush1.msra.mxu0 %v2053
        %2115 = vmatprep.subr.mxu0 0.0
        %2116 = vmatpush1.msra.mxu0 %v2054
        %2117 = vmatprep.subr.mxu0 0.0
        %2118 = vmatpush1.msra.mxu0 %v2055
        %2119 = vmatprep.subr.mxu0 0.0
        %2120 = vmatpush1.msra.mxu0 %v2056
        %2121 = vmatprep.subr.mxu0 0.0
        %2122 = vmatpush1.msra.mxu0 0.0
        %2123 = vmatprep.subr.mxu0 0.0
        %2124 = vmatpush1.msra.mxu0 0.0
        %2125 = vmatprep.mubr.f32.mxu0 %v2059
        %2126 = vmatmul.mubr.f32.gmra.mrb[0].mxu0 %v2022
        %v2127 = vpop.f32.mrb[0].mxu0
        %v2128 = vadd.f32 0.0, %v2127
        %v2129 = vpop.f32.mrb[0].mxu0
        %2130 = vdwg.mxu0
        %v2132 = vsel %vm2057, %v1888, 0
        %2134 = vmatprep.subr.mxu0 0.0
        %2135 = vmatpush1.msra.mxu0 %v1890
        %2136 = vmatprep.subr.mxu0 0.0
        %2137 = vmatpush1.msra.mxu0 %v1891
        %2138 = vmatprep.subr.mxu0 0.0
        %2139 = vmatpush1.msra.mxu0 %v1892
        %2140 = vmatprep.subr.mxu0 0.0
        %2141 = vmatpush1.msra.mxu0 %v1893
        %2142 = vmatprep.subr.mxu0 0.0
        %2143 = vmatpush1.msra.mxu0 %v1894
        %2144 = vmatprep.subr.mxu0 0.0
        %2145 = vmatpush1.msra.mxu0 %v1895
        %2146 = vmatprep.subr.mxu0 0.0
        %2147 = vmatpush1.msra.mxu0 %v1896
        %2148 = vmatprep.subr.mxu0 0.0
        %2149 = vmatpush1.msra.mxu0 %v1897
        %2150 = vmatprep.subr.mxu0 0.0
        %2151 = vmatpush1.msra.mxu0 %v1898
        %2152 = vmatprep.subr.mxu0 0.0
        %2153 = vmatpush1.msra.mxu0 %v1899
        %2154 = vmatprep.subr.mxu0 0.0
        %2155 = vmatpush1.msra.mxu0 %v1900
        %2156 = vmatprep.subr.mxu0 0.0
        %2157 = vmatpush1.msra.mxu0 %v1901
        %2158 = vmatprep.subr.mxu0 0.0
        %2159 = vmatpush1.msra.mxu0 %v1902
        %2160 = vmatprep.subr.mxu0 0.0
        %2161 = vmatpush1.msra.mxu0 %v1903
        %2162 = vmatprep.subr.mxu0 0.0
        %2163 = vmatpush1.msra.mxu0 %v1904
        %2164 = vmatprep.subr.mxu0 0.0
        %2165 = vmatpush1.msra.mxu0 %v1905
        %2166 = vmatprep.subr.mxu0 0.0
        %2167 = vmatpush1.msra.mxu0 %v1906
        %2168 = vmatprep.subr.mxu0 0.0
        %2169 = vmatpush1.msra.mxu0 %v1907
        %2170 = vmatprep.subr.mxu0 0.0
        %2171 = vmatpush1.msra.mxu0 %v1908
        %2172 = vmatprep.subr.mxu0 0.0
        %2173 = vmatpush1.msra.mxu0 %v1909
        %2174 = vmatprep.subr.mxu0 0.0
        %2175 = vmatpush1.msra.mxu0 %v1910
        %2176 = vmatprep.subr.mxu0 0.0
        %2177 = vmatpush1.msra.mxu0 %v1911
        %2178 = vmatprep.subr.mxu0 0.0
        %2179 = vmatpush1.msra.mxu0 %v1912
        %2180 = vmatprep.subr.mxu0 0.0
        %2181 = vmatpush1.msra.mxu0 %v1913
        %2182 = vmatprep.subr.mxu0 0.0
        %2183 = vmatpush1.msra.mxu0 %v1914
        %2184 = vmatprep.subr.mxu0 0.0
        %2185 = vmatpush1.msra.mxu0 %v1915
        %2186 = vmatprep.subr.mxu0 0.0
        %2187 = vmatpush1.msra.mxu0 %v1916
        %2188 = vmatprep.subr.mxu0 0.0
        %2189 = vmatpush1.msra.mxu0 %v1917
        %2190 = vmatprep.subr.mxu0 0.0
        %2191 = vmatpush1.msra.mxu0 %v1918
        %2192 = vmatprep.subr.mxu0 0.0
        %2193 = vmatpush1.msra.mxu0 %v1919
        %2194 = vmatprep.subr.mxu0 0.0
        %2195 = vmatpush1.msra.mxu0 0.0
        %2196 = vmatprep.subr.mxu0 0.0
        %2197 = vmatpush1.msra.mxu0 0.0
        %2198 = vmatprep.mubr.f32.mxu0 %v2132
        %2199 = vmatmul.mubr.f32.gmra.mrb[0].mxu0 %v1886
        %v2200 = vpop.f32.mrb[0].mxu0
        %v2201 = vadd.f32 %v2128, %v2200
        %v2202 = vpop.f32.mrb[0].mxu0
        %2203 = vdwg.mxu0
        %s2204 = scalar_lea.vmem %s8, 240
        %v2205 = vld [vmem:[%s2204] sm:$0xff]
        %v2206 = vld [vmem:[%s2204 + $0x8] sm:$0xff]
        %v2207 = vld [vmem:[%s2204 + $0x10] sm:$0xff]
        %v2208 = vld [vmem:[%s2204 + $0x18] sm:$0xff]
        %v2209 = vld [vmem:[%s2204 + $0x20] sm:$0xff]
        %v2210 = vld [vmem:[%s2204 + $0x28] sm:$0xff]
        %v2211 = vld [vmem:[%s2204 + $0x30] sm:$0xff]
        %v2212 = vld [vmem:[%s2204 + $0x38] sm:$0xff]
        %v2213 = vld [vmem:[%s2204 + $0x40] sm:$0xff]
        %v2214 = vld [vmem:[%s2204 + $0x48] sm:$0xff]
        %v2215 = vld [vmem:[%s2204 + $0x50] sm:$0xff]
        %v2216 = vld [vmem:[%s2204 + $0x58] sm:$0xff]
        %v2217 = vld [vmem:[%s2204 + $0x60] sm:$0xff]
        %v2218 = vld [vmem:[%s2204 + $0x68] sm:$0xff]
        %v2219 = vld [vmem:[%s2204 + $0x70] sm:$0xff]
        %v2220 = vld [vmem:[%s2204 + $0x78] sm:$0xff]
        %v2221 = vld [vmem:[%s2204 + $0x80] sm:$0xff]
        %v2222 = vld [vmem:[%s2204 + $0x88] sm:$0xff]
        %v2223 = vld [vmem:[%s2204 + $0x90] sm:$0xff]
        %v2224 = vld [vmem:[%s2204 + $0x98] sm:$0xff]
        %v2225 = vld [vmem:[%s2204 + $0xa0] sm:$0xff]
        %v2226 = vld [vmem:[%s2204 + $0xa8] sm:$0xff]
        %v2227 = vld [vmem:[%s2204 + $0xb0] sm:$0xff]
        %v2228 = vld [vmem:[%s2204 + $0xb8] sm:$0xff]
        %v2229 = vld [vmem:[%s2204 + $0xc0] sm:$0xff]
        %v2230 = vld [vmem:[%s2204 + $0xc8] sm:$0xff]
        %v2231 = vld [vmem:[%s2204 + $0xd0] sm:$0xff]
        %v2232 = vld [vmem:[%s2204 + $0xd8] sm:$0xff]
        %v2233 = vld [vmem:[%s2204 + $0xe0] sm:$0xff]
        %v2234 = vld [vmem:[%s2204 + $0xe8] sm:$0xff]
        %2235 = vmatprep.subr.mxu0 0.0
        %2236 = vmatpush1.msra.mxu0 %v2205
        %2237 = vmatprep.subr.mxu0 0.0
        %2238 = vmatpush1.msra.mxu0 %v2206
        %2239 = vmatprep.subr.mxu0 0.0
        %2240 = vmatpush1.msra.mxu0 %v2207
        %2241 = vmatprep.subr.mxu0 0.0
        %2242 = vmatpush1.msra.mxu0 %v2208
        %2243 = vmatprep.subr.mxu0 0.0
        %2244 = vmatpush1.msra.mxu0 %v2209
        %2245 = vmatprep.subr.mxu0 0.0
        %2246 = vmatpush1.msra.mxu0 %v2210
        %2247 = vmatprep.subr.mxu0 0.0
        %2248 = vmatpush1.msra.mxu0 %v2211
        %2249 = vmatprep.subr.mxu0 0.0
        %2250 = vmatpush1.msra.mxu0 %v2212
        %2251 = vmatprep.subr.mxu0 0.0
        %2252 = vmatpush1.msra.mxu0 %v2213
        %2253 = vmatprep.subr.mxu0 0.0
        %2254 = vmatpush1.msra.mxu0 %v2214
        %2255 = vmatprep.subr.mxu0 0.0
        %2256 = vmatpush1.msra.mxu0 %v2215
        %2257 = vmatprep.subr.mxu0 0.0
        %2258 = vmatpush1.msra.mxu0 %v2216
        %2259 = vmatprep.subr.mxu0 0.0
        %2260 = vmatpush1.msra.mxu0 %v2217
        %2261 = vmatprep.subr.mxu0 0.0
        %2262 = vmatpush1.msra.mxu0 %v2218
        %2263 = vmatprep.subr.mxu0 0.0
        %2264 = vmatpush1.msra.mxu0 %v2219
        %2265 = vmatprep.subr.mxu0 0.0
        %2266 = vmatpush1.msra.mxu0 %v2220
        %2267 = vmatprep.subr.mxu0 0.0
        %2268 = vmatpush1.msra.mxu0 %v2221
        %2269 = vmatprep.subr.mxu0 0.0
        %2270 = vmatpush1.msra.mxu0 %v2222
        %2271 = vmatprep.subr.mxu0 0.0
        %2272 = vmatpush1.msra.mxu0 %v2223
        %2273 = vmatprep.subr.mxu0 0.0
        %2274 = vmatpush1.msra.mxu0 %v2224
        %2275 = vmatprep.subr.mxu0 0.0
        %2276 = vmatpush1.msra.mxu0 %v2225
        %2277 = vmatprep.subr.mxu0 0.0
        %2278 = vmatpush1.msra.mxu0 %v2226
        %2279 = vmatprep.subr.mxu0 0.0
        %2280 = vmatpush1.msra.mxu0 %v2227
        %2281 = vmatprep.subr.mxu0 0.0
        %2282 = vmatpush1.msra.mxu0 %v2228
        %2283 = vmatprep.subr.mxu0 0.0
        %2284 = vmatpush1.msra.mxu0 %v2229
        %2285 = vmatprep.subr.mxu0 0.0
        %2286 = vmatpush1.msra.mxu0 %v2230
        %2287 = vmatprep.subr.mxu0 0.0
        %2288 = vmatpush1.msra.mxu0 %v2231
        %2289 = vmatprep.subr.mxu0 0.0
        %2290 = vmatpush1.msra.mxu0 %v2232
        %2291 = vmatprep.subr.mxu0 0.0
        %2292 = vmatpush1.msra.mxu0 %v2233
        %2293 = vmatprep.subr.mxu0 0.0
        %2294 = vmatpush1.msra.mxu0 %v2234
        %2295 = vmatprep.subr.mxu0 0.0
        %2296 = vmatpush1.msra.mxu0 0.0
        %2297 = vmatprep.subr.mxu0 0.0
        %2298 = vmatpush1.msra.mxu0 0.0
        %2299 = vmatprep.mubr.f32.mxu0 %v2059
        %2300 = vmatmul.mubr.f32.gmra.mrb[0].mxu0 %v2022
        %v2301 = vpop.f32.mrb[0].mxu0
        %v2302 = vadd.f32 0.0, %v2301
        %v2303 = vpop.f32.mrb[0].mxu0
        %2304 = vdwg.mxu0
        %2305 = vmatprep.subr.mxu0 0.0
        %2306 = vmatpush1.msra.mxu0 %v1920
        %2307 = vmatprep.subr.mxu0 0.0
        %2308 = vmatpush1.msra.mxu0 %v1921
        %2309 = vmatprep.subr.mxu0 0.0
        %2310 = vmatpush1.msra.mxu0 %v1922
        %2311 = vmatprep.subr.mxu0 0.0
        %2312 = vmatpush1.msra.mxu0 %v1923
        %2313 = vmatprep.subr.mxu0 0.0
        %2314 = vmatpush1.msra.mxu0 %v1924
        %2315 = vmatprep.subr.mxu0 0.0
        %2316 = vmatpush1.msra.mxu0 %v1925
        %2317 = vmatprep.subr.mxu0 0.0
        %2318 = vmatpush1.msra.mxu0 %v1926
        %2319 = vmatprep.subr.mxu0 0.0
        %2320 = vmatpush1.msra.mxu0 %v1927
        %2321 = vmatprep.subr.mxu0 0.0
        %2322 = vmatpush1.msra.mxu0 %v1928
        %2323 = vmatprep.subr.mxu0 0.0
        %2324 = vmatpush1.msra.mxu0 %v1929
        %2325 = vmatprep.subr.mxu0 0.0
        %2326 = vmatpush1.msra.mxu0 %v1930
        %2327 = vmatprep.subr.mxu0 0.0
        %2328 = vmatpush1.msra.mxu0 %v1931
        %2329 = vmatprep.subr.mxu0 0.0
        %2330 = vmatpush1.msra.mxu0 %v1932
        %2331 = vmatprep.subr.mxu0 0.0
        %2332 = vmatpush1.msra.mxu0 %v1933
        %2333 = vmatprep.subr.mxu0 0.0
        %2334 = vmatpush1.msra.mxu0 %v1934
        %2335 = vmatprep.subr.mxu0 0.0
        %2336 = vmatpush1.msra.mxu0 %v1935
        %2337 = vmatprep.subr.mxu0 0.0
        %2338 = vmatpush1.msra.mxu0 %v1936
        %2339 = vmatprep.subr.mxu0 0.0
        %2340 = vmatpush1.msra.mxu0 %v1937
        %2341 = vmatprep.subr.mxu0 0.0
        %2342 = vmatpush1.msra.mxu0 %v1938
        %2343 = vmatprep.subr.mxu0 0.0
        %2344 = vmatpush1.msra.mxu0 %v1939
        %2345 = vmatprep.subr.mxu0 0.0
        %2346 = vmatpush1.msra.mxu0 %v1940
        %2347 = vmatprep.subr.mxu0 0.0
        %2348 = vmatpush1.msra.mxu0 %v1941
        %2349 = vmatprep.subr.mxu0 0.0
        %2350 = vmatpush1.msra.mxu0 %v1942
        %2351 = vmatprep.subr.mxu0 0.0
        %2352 = vmatpush1.msra.mxu0 %v1943
        %2353 = vmatprep.subr.mxu0 0.0
        %2354 = vmatpush1.msra.mxu0 %v1944
        %2355 = vmatprep.subr.mxu0 0.0
        %2356 = vmatpush1.msra.mxu0 %v1945
        %2357 = vmatprep.subr.mxu0 0.0
        %2358 = vmatpush1.msra.mxu0 %v1946
        %2359 = vmatprep.subr.mxu0 0.0
        %2360 = vmatpush1.msra.mxu0 %v1947
        %2361 = vmatprep.subr.mxu0 0.0
        %2362 = vmatpush1.msra.mxu0 %v1948
        %2363 = vmatprep.subr.mxu0 0.0
        %2364 = vmatpush1.msra.mxu0 %v1949
        %2365 = vmatprep.subr.mxu0 0.0
        %2366 = vmatpush1.msra.mxu0 0.0
        %2367 = vmatprep.subr.mxu0 0.0
        %2368 = vmatpush1.msra.mxu0 0.0
        %2369 = vmatprep.mubr.f32.mxu0 %v2132
        %2370 = vmatmul.mubr.f32.gmra.mrb[0].mxu0 %v1886
        %v2371 = vpop.f32.mrb[0].mxu0
        %v2372 = vadd.f32 %v2302, %v2371
        %v2373 = vpop.f32.mrb[0].mxu0
        %2374 = vdwg.mxu0
        %s2375 = scalar_lea.vmem %s6, 16
        %v2376 = vld [vmem:[%s2375] sm:$0x7f]
        %v2378 = vsel %vm1809, %v2376, 0
        %2380 = vmatprep.subr.mxu0 %v1805
        %2381 = vmatpush1.msra.mxu0 %v1804
        %2382 = vmatprep.subr.mxu0 %v1817
        %2383 = vmatpush1.msra.mxu0 %v1814
        %2384 = vmatprep.subr.mxu0 0.0
        %2385 = vmatpush1.msra.mxu0 0.0
        %2386 = vmatprep.subr.mxu0 0.0
        %2387 = vmatpush1.msra.mxu0 0.0
        %2388 = vmatprep.subr.mxu0 0.0
        %2389 = vmatpush1.msra.mxu0 0.0
        %2390 = vmatprep.subr.mxu0 0.0
        %2391 = vmatpush1.msra.mxu0 0.0
        %2392 = vmatprep.subr.mxu0 0.0
        %2393 = vmatpush1.msra.mxu0 0.0
        %2394 = vmatprep.subr.mxu0 0.0
        %2395 = vmatpush1.msra.mxu0 0.0
        %2396 = vmatprep.subr.mxu0 0.0
        %2397 = vmatpush1.msra.mxu0 0.0
        %2398 = vmatprep.subr.mxu0 0.0
        %2399 = vmatpush1.msra.mxu0 0.0
        %2400 = vmatprep.subr.mxu0 0.0
        %2401 = vmatpush1.msra.mxu0 0.0
        %2402 = vmatprep.subr.mxu0 0.0
        %2403 = vmatpush1.msra.mxu0 0.0
        %2404 = vmatprep.subr.mxu0 0.0
        %2405 = vmatpush1.msra.mxu0 0.0
        %2406 = vmatprep.subr.mxu0 0.0
        %2407 = vmatpush1.msra.mxu0 0.0
        %2408 = vmatprep.subr.mxu0 0.0
        %2409 = vmatpush1.msra.mxu0 0.0
        %2410 = vmatprep.subr.mxu0 0.0
        %2411 = vmatpush1.msra.mxu0 0.0
        %2412 = vmatprep.subr.mxu0 0.0
        %2413 = vmatpush1.msra.mxu0 0.0
        %2414 = vmatprep.subr.mxu0 0.0
        %2415 = vmatpush1.msra.mxu0 0.0
        %2416 = vmatprep.subr.mxu0 0.0
        %2417 = vmatpush1.msra.mxu0 0.0
        %2418 = vmatprep.subr.mxu0 0.0
        %2419 = vmatpush1.msra.mxu0 0.0
        %2420 = vmatprep.subr.mxu0 0.0
        %2421 = vmatpush1.msra.mxu0 0.0
        %2422 = vmatprep.subr.mxu0 0.0
        %2423 = vmatpush1.msra.mxu0 0.0
        %2424 = vmatprep.subr.mxu0 0.0
        %2425 = vmatpush1.msra.mxu0 0.0
        %2426 = vmatprep.subr.mxu0 0.0
        %2427 = vmatpush1.msra.mxu0 0.0
        %2428 = vmatprep.subr.mxu0 0.0
        %2429 = vmatpush1.msra.mxu0 0.0
        %2430 = vmatprep.subr.mxu0 0.0
        %2431 = vmatpush1.msra.mxu0 0.0
        %2432 = vmatprep.subr.mxu0 0.0
        %2433 = vmatpush1.msra.mxu0 0.0
        %2434 = vmatprep.subr.mxu0 0.0
        %2435 = vmatpush1.msra.mxu0 0.0
        %2436 = vmatprep.subr.mxu0 0.0
        %2437 = vmatpush1.msra.mxu0 0.0
        %2438 = vmatprep.subr.mxu0 0.0
        %2439 = vmatpush1.msra.mxu0 0.0
        %2440 = vmatprep.subr.mxu0 0.0
        %2441 = vmatpush1.msra.mxu0 0.0
        %2442 = vmatprep.subr.mxu0 0.0
        %2443 = vmatpush1.msra.mxu0 0.0
        %2444 = vmatprep.mubr.f32.mxu0 0.0
        %2445 = vmatmul.mubr.f32.gmra.mrb[0].mxu0 %v2378
        %v2446 = vpop.f32.mrb[0].mxu0
        %v2447 = vadd.f32 0.0, %v2446
        %v2448 = vpop.f32.mrb[0].mxu0
        %v2449 = vadd.f32 0.0, %v2448
        %2450 = vdwg.mxu0
        %s2451 = scalar_lea.vmem %s7, 480
        %v2452 = vld [vmem:[%s2451] sm:$0xff]
        %v2453 = vld [vmem:[%s2451 + $0x8] sm:$0xff]
        %v2454 = vld [vmem:[%s2451 + $0x10] sm:$0xff]
        %v2455 = vld [vmem:[%s2451 + $0x18] sm:$0xff]
        %v2456 = vld [vmem:[%s2451 + $0x20] sm:$0xff]
        %v2457 = vld [vmem:[%s2451 + $0x28] sm:$0xff]
        %v2458 = vld [vmem:[%s2451 + $0x30] sm:$0xff]
        %v2459 = vld [vmem:[%s2451 + $0x38] sm:$0xff]
        %v2460 = vld [vmem:[%s2451 + $0x40] sm:$0xff]
        %v2461 = vld [vmem:[%s2451 + $0x48] sm:$0xff]
        %v2462 = vld [vmem:[%s2451 + $0x50] sm:$0xff]
        %v2463 = vld [vmem:[%s2451 + $0x58] sm:$0xff]
        %v2464 = vld [vmem:[%s2451 + $0x60] sm:$0xff]
        %v2465 = vld [vmem:[%s2451 + $0x68] sm:$0xff]
        %v2466 = vld [vmem:[%s2451 + $0x70] sm:$0xff]
        %v2467 = vld [vmem:[%s2451 + $0x78] sm:$0xff]
        %v2468 = vld [vmem:[%s2451 + $0x80] sm:$0xff]
        %v2469 = vld [vmem:[%s2451 + $0x88] sm:$0xff]
        %v2470 = vld [vmem:[%s2451 + $0x90] sm:$0xff]
        %v2471 = vld [vmem:[%s2451 + $0x98] sm:$0xff]
        %v2472 = vld [vmem:[%s2451 + $0xa0] sm:$0xff]
        %v2473 = vld [vmem:[%s2451 + $0xa8] sm:$0xff]
        %v2474 = vld [vmem:[%s2451 + $0xb0] sm:$0xff]
        %v2475 = vld [vmem:[%s2451 + $0xb8] sm:$0xff]
        %v2476 = vld [vmem:[%s2451 + $0xc0] sm:$0xff]
        %v2477 = vld [vmem:[%s2451 + $0xc8] sm:$0xff]
        %v2478 = vld [vmem:[%s2451 + $0xd0] sm:$0xff]
        %v2479 = vld [vmem:[%s2451 + $0xd8] sm:$0xff]
        %v2480 = vld [vmem:[%s2451 + $0xe0] sm:$0xff]
        %v2481 = vld [vmem:[%s2451 + $0xe8] sm:$0xff]
        %v2483 = vsel %vm2057, %v2449, 0
        %2485 = vmatprep.subr.mxu0 0.0
        %2486 = vmatpush1.msra.mxu0 %v2452
        %2487 = vmatprep.subr.mxu0 0.0
        %2488 = vmatpush1.msra.mxu0 %v2453
        %2489 = vmatprep.subr.mxu0 0.0
        %2490 = vmatpush1.msra.mxu0 %v2454
        %2491 = vmatprep.subr.mxu0 0.0
        %2492 = vmatpush1.msra.mxu0 %v2455
        %2493 = vmatprep.subr.mxu0 0.0
        %2494 = vmatpush1.msra.mxu0 %v2456
        %2495 = vmatprep.subr.mxu0 0.0
        %2496 = vmatpush1.msra.mxu0 %v2457
        %2497 = vmatprep.subr.mxu0 0.0
        %2498 = vmatpush1.msra.mxu0 %v2458
        %2499 = vmatprep.subr.mxu0 0.0
        %2500 = vmatpush1.msra.mxu0 %v2459
        %2501 = vmatprep.subr.mxu0 0.0
        %2502 = vmatpush1.msra.mxu0 %v2460
        %2503 = vmatprep.subr.mxu0 0.0
        %2504 = vmatpush1.msra.mxu0 %v2461
        %2505 = vmatprep.subr.mxu0 0.0
        %2506 = vmatpush1.msra.mxu0 %v2462
        %2507 = vmatprep.subr.mxu0 0.0
        %2508 = vmatpush1.msra.mxu0 %v2463
        %2509 = vmatprep.subr.mxu0 0.0
        %2510 = vmatpush1.msra.mxu0 %v2464
        %2511 = vmatprep.subr.mxu0 0.0
        %2512 = vmatpush1.msra.mxu0 %v2465
        %2513 = vmatprep.subr.mxu0 0.0
        %2514 = vmatpush1.msra.mxu0 %v2466
        %2515 = vmatprep.subr.mxu0 0.0
        %2516 = vmatpush1.msra.mxu0 %v2467
        %2517 = vmatprep.subr.mxu0 0.0
        %2518 = vmatpush1.msra.mxu0 %v2468
        %2519 = vmatprep.subr.mxu0 0.0
        %2520 = vmatpush1.msra.mxu0 %v2469
        %2521 = vmatprep.subr.mxu0 0.0
        %2522 = vmatpush1.msra.mxu0 %v2470
        %2523 = vmatprep.subr.mxu0 0.0
        %2524 = vmatpush1.msra.mxu0 %v2471
        %2525 = vmatprep.subr.mxu0 0.0
        %2526 = vmatpush1.msra.mxu0 %v2472
        %2527 = vmatprep.subr.mxu0 0.0
        %2528 = vmatpush1.msra.mxu0 %v2473
        %2529 = vmatprep.subr.mxu0 0.0
        %2530 = vmatpush1.msra.mxu0 %v2474
        %2531 = vmatprep.subr.mxu0 0.0
        %2532 = vmatpush1.msra.mxu0 %v2475
        %2533 = vmatprep.subr.mxu0 0.0
        %2534 = vmatpush1.msra.mxu0 %v2476
        %2535 = vmatprep.subr.mxu0 0.0
        %2536 = vmatpush1.msra.mxu0 %v2477
        %2537 = vmatprep.subr.mxu0 0.0
        %2538 = vmatpush1.msra.mxu0 %v2478
        %2539 = vmatprep.subr.mxu0 0.0
        %2540 = vmatpush1.msra.mxu0 %v2479
        %2541 = vmatprep.subr.mxu0 0.0
        %2542 = vmatpush1.msra.mxu0 %v2480
        %2543 = vmatprep.subr.mxu0 0.0
        %2544 = vmatpush1.msra.mxu0 %v2481
        %2545 = vmatprep.subr.mxu0 0.0
        %2546 = vmatpush1.msra.mxu0 0.0
        %2547 = vmatprep.subr.mxu0 0.0
        %2548 = vmatpush1.msra.mxu0 0.0
        %2549 = vmatprep.mubr.f32.mxu0 %v2483
        %2550 = vmatmul.mubr.f32.gmra.mrb[0].mxu0 %v2447
        %v2551 = vpop.f32.mrb[0].mxu0
        %v2552 = vadd.f32 0.0, %v2551
        %v2553 = vpop.f32.mrb[0].mxu0
        %2554 = vdwg.mxu0
        %v2555 = vadd.f32 %v2201, %v2552
        %s2556 = scalar_lea.vmem %s8, 480
        %v2557 = vld [vmem:[%s2556] sm:$0xff]
        %v2558 = vld [vmem:[%s2556 + $0x8] sm:$0xff]
        %v2559 = vld [vmem:[%s2556 + $0x10] sm:$0xff]
        %v2560 = vld [vmem:[%s2556 + $0x18] sm:$0xff]
        %v2561 = vld [vmem:[%s2556 + $0x20] sm:$0xff]
        %v2562 = vld [vmem:[%s2556 + $0x28] sm:$0xff]
        %v2563 = vld [vmem:[%s2556 + $0x30] sm:$0xff]
        %v2564 = vld [vmem:[%s2556 + $0x38] sm:$0xff]
        %v2565 = vld [vmem:[%s2556 + $0x40] sm:$0xff]
        %v2566 = vld [vmem:[%s2556 + $0x48] sm:$0xff]
        %v2567 = vld [vmem:[%s2556 + $0x50] sm:$0xff]
        %v2568 = vld [vmem:[%s2556 + $0x58] sm:$0xff]
        %v2569 = vld [vmem:[%s2556 + $0x60] sm:$0xff]
        %v2570 = vld [vmem:[%s2556 + $0x68] sm:$0xff]
        %v2571 = vld [vmem:[%s2556 + $0x70] sm:$0xff]
        %v2572 = vld [vmem:[%s2556 + $0x78] sm:$0xff]
        %v2573 = vld [vmem:[%s2556 + $0x80] sm:$0xff]
        %v2574 = vld [vmem:[%s2556 + $0x88] sm:$0xff]
        %v2575 = vld [vmem:[%s2556 + $0x90] sm:$0xff]
        %v2576 = vld [vmem:[%s2556 + $0x98] sm:$0xff]
        %v2577 = vld [vmem:[%s2556 + $0xa0] sm:$0xff]
        %v2578 = vld [vmem:[%s2556 + $0xa8] sm:$0xff]
        %v2579 = vld [vmem:[%s2556 + $0xb0] sm:$0xff]
        %v2580 = vld [vmem:[%s2556 + $0xb8] sm:$0xff]
        %v2581 = vld [vmem:[%s2556 + $0xc0] sm:$0xff]
        %v2582 = vld [vmem:[%s2556 + $0xc8] sm:$0xff]
        %v2583 = vld [vmem:[%s2556 + $0xd0] sm:$0xff]
        %v2584 = vld [vmem:[%s2556 + $0xd8] sm:$0xff]
        %v2585 = vld [vmem:[%s2556 + $0xe0] sm:$0xff]
        %v2586 = vld [vmem:[%s2556 + $0xe8] sm:$0xff]
        %2587 = vmatprep.subr.mxu0 0.0
        %2588 = vmatpush1.msra.mxu0 %v2557
        %2589 = vmatprep.subr.mxu0 0.0
        %2590 = vmatpush1.msra.mxu0 %v2558
        %2591 = vmatprep.subr.mxu0 0.0
        %2592 = vmatpush1.msra.mxu0 %v2559
        %2593 = vmatprep.subr.mxu0 0.0
        %2594 = vmatpush1.msra.mxu0 %v2560
        %2595 = vmatprep.subr.mxu0 0.0
        %2596 = vmatpush1.msra.mxu0 %v2561
        %2597 = vmatprep.subr.mxu0 0.0
        %2598 = vmatpush1.msra.mxu0 %v2562
        %2599 = vmatprep.subr.mxu0 0.0
        %2600 = vmatpush1.msra.mxu0 %v2563
        %2601 = vmatprep.subr.mxu0 0.0
        %2602 = vmatpush1.msra.mxu0 %v2564
        %2603 = vmatprep.subr.mxu0 0.0
        %2604 = vmatpush1.msra.mxu0 %v2565
        %2605 = vmatprep.subr.mxu0 0.0
        %2606 = vmatpush1.msra.mxu0 %v2566
        %2607 = vmatprep.subr.mxu0 0.0
        %2608 = vmatpush1.msra.mxu0 %v2567
        %2609 = vmatprep.subr.mxu0 0.0
        %2610 = vmatpush1.msra.mxu0 %v2568
        %2611 = vmatprep.subr.mxu0 0.0
        %2612 = vmatpush1.msra.mxu0 %v2569
        %2613 = vmatprep.subr.mxu0 0.0
        %2614 = vmatpush1.msra.mxu0 %v2570
        %2615 = vmatprep.subr.mxu0 0.0
        %2616 = vmatpush1.msra.mxu0 %v2571
        %2617 = vmatprep.subr.mxu0 0.0
        %2618 = vmatpush1.msra.mxu0 %v2572
        %2619 = vmatprep.subr.mxu0 0.0
        %2620 = vmatpush1.msra.mxu0 %v2573
        %2621 = vmatprep.subr.mxu0 0.0
        %2622 = vmatpush1.msra.mxu0 %v2574
        %2623 = vmatprep.subr.mxu0 0.0
        %2624 = vmatpush1.msra.mxu0 %v2575
        %2625 = vmatprep.subr.mxu0 0.0
        %2626 = vmatpush1.msra.mxu0 %v2576
        %2627 = vmatprep.subr.mxu0 0.0
        %2628 = vmatpush1.msra.mxu0 %v2577
        %2629 = vmatprep.subr.mxu0 0.0
        %2630 = vmatpush1.msra.mxu0 %v2578
        %2631 = vmatprep.subr.mxu0 0.0
        %2632 = vmatpush1.msra.mxu0 %v2579
        %2633 = vmatprep.subr.mxu0 0.0
        %2634 = vmatpush1.msra.mxu0 %v2580
        %2635 = vmatprep.subr.mxu0 0.0
        %2636 = vmatpush1.msra.mxu0 %v2581
        %2637 = vmatprep.subr.mxu0 0.0
        %2638 = vmatpush1.msra.mxu0 %v2582
        %2639 = vmatprep.subr.mxu0 0.0
        %2640 = vmatpush1.msra.mxu0 %v2583
        %2641 = vmatprep.subr.mxu0 0.0
        %2642 = vmatpush1.msra.mxu0 %v2584
        %2643 = vmatprep.subr.mxu0 0.0
        %2644 = vmatpush1.msra.mxu0 %v2585
        %2645 = vmatprep.subr.mxu0 0.0
        %2646 = vmatpush1.msra.mxu0 %v2586
        %2647 = vmatprep.subr.mxu0 0.0
        %2648 = vmatpush1.msra.mxu0 0.0
        %2649 = vmatprep.subr.mxu0 0.0
        %2650 = vmatpush1.msra.mxu0 0.0
        %2651 = vmatprep.mubr.f32.mxu0 %v2483
        %2652 = vmatmul.mubr.f32.gmra.mrb[0].mxu0 %v2447
        %v2653 = vpop.f32.mrb[0].mxu0
        %v2654 = vadd.f32 0.0, %v2653
        %v2655 = vpop.f32.mrb[0].mxu0
        %2656 = vdwg.mxu0
        %v2657 = vadd.f32 %v2372, %v2654
        %v2658 = vld [vmem:[%s10] sm:$0x1]
        %v2660 = vlaneseq
        %v2661 = vshrl.u32 %v2660, 7
        %v2662 = vsub.s32 0, %v2661
        %v2663 = vrot.slane %v2658, %v2662
        %v2665 = vadd.f32 %v2555, %v2663
        %v2666 = vmax.f32 %v2665, 0.0
        %v2667 = vadd.f32 %v2657, %v2663
        %v2668 = vmax.f32 %v2667, 0.0
        %v2669 = vmax.f32 %v2666, %v2668
        %v2670 = vld [vmem:[%s9] sm:$0x7]
        %vm2671 = vcmask 56320
        %v2673 = vsel %vm2671, %v2670, 0
        %v2676 = vsel %vm1634, %v2669, 0
        %2678 = vmatprep.subr.mxu0 0.0
        %2679 = vmatpush1.msra.mxu0 %v2676
        %2680 = vmatprep.subr.mxu0 0.0
        %2681 = vmatpush1.msra.mxu0 0.0
        %2682 = vmatprep.subr.mxu0 0.0
        %2683 = vmatpush1.msra.mxu0 0.0
        %2684 = vmatprep.subr.mxu0 0.0
        %2685 = vmatpush1.msra.mxu0 0.0
        %2686 = vmatprep.subr.mxu0 0.0
        %2687 = vmatpush1.msra.mxu0 0.0
        %2688 = vmatprep.subr.mxu0 0.0
        %2689 = vmatpush1.msra.mxu0 0.0
        %2690 = vmatprep.subr.mxu0 0.0
        %2691 = vmatpush1.msra.mxu0 0.0
        %2692 = vmatprep.subr.mxu0 0.0
        %2693 = vmatpush1.msra.mxu0 0.0
        %2694 = vmatprep.subr.mxu0 0.0
        %2695 = vmatpush1.msra.mxu0 0.0
        %2696 = vmatprep.subr.mxu0 0.0
        %2697 = vmatpush1.msra.mxu0 0.0
        %2698 = vmatprep.subr.mxu0 0.0
        %2699 = vmatpush1.msra.mxu0 0.0
        %2700 = vmatprep.subr.mxu0 0.0
        %2701 = vmatpush1.msra.mxu0 0.0
        %2702 = vmatprep.subr.mxu0 0.0
        %2703 = vmatpush1.msra.mxu0 0.0
        %2704 = vmatprep.subr.mxu0 0.0
        %2705 = vmatpush1.msra.mxu0 0.0
        %2706 = vmatprep.subr.mxu0 0.0
        %2707 = vmatpush1.msra.mxu0 0.0
        %2708 = vmatprep.subr.mxu0 0.0
        %2709 = vmatpush1.msra.mxu0 0.0
        %2710 = vmatprep.subr.mxu0 0.0
        %2711 = vmatpush1.msra.mxu0 0.0
        %2712 = vmatprep.subr.mxu0 0.0
        %2713 = vmatpush1.msra.mxu0 0.0
        %2714 = vmatprep.subr.mxu0 0.0
        %2715 = vmatpush1.msra.mxu0 0.0
        %2716 = vmatprep.subr.mxu0 0.0
        %2717 = vmatpush1.msra.mxu0 0.0
        %2718 = vmatprep.subr.mxu0 0.0
        %2719 = vmatpush1.msra.mxu0 0.0
        %2720 = vmatprep.subr.mxu0 0.0
        %2721 = vmatpush1.msra.mxu0 0.0
        %2722 = vmatprep.subr.mxu0 0.0
        %2723 = vmatpush1.msra.mxu0 0.0
        %2724 = vmatprep.subr.mxu0 0.0
        %2725 = vmatpush1.msra.mxu0 0.0
        %2726 = vmatprep.subr.mxu0 0.0
        %2727 = vmatpush1.msra.mxu0 0.0
        %2728 = vmatprep.subr.mxu0 0.0
        %2729 = vmatpush1.msra.mxu0 0.0
        %2730 = vmatprep.subr.mxu0 0.0
        %2731 = vmatpush1.msra.mxu0 0.0
        %2732 = vmatprep.subr.mxu0 0.0
        %2733 = vmatpush1.msra.mxu0 0.0
        %2734 = vmatprep.subr.mxu0 0.0
        %2735 = vmatpush1.msra.mxu0 0.0
        %2736 = vmatprep.subr.mxu0 0.0
        %2737 = vmatpush1.msra.mxu0 0.0
        %2738 = vmatprep.subr.mxu0 0.0
        %2739 = vmatpush1.msra.mxu0 0.0
        %2740 = vmatprep.subr.mxu0 0.0
        %2741 = vmatpush1.msra.mxu0 0.0
        %2742 = vmatprep.mubr.f32.mxu0 0.0
        %2743 = vmatmul.mubr.f32.gmra.mrb[0].mxu0 %v2673
        %v2744 = vpop.f32.mrb[0].mxu0
        %v2745 = vadd.f32 0.0, %v2744
        %v2746 = vpop.f32.mrb[0].mxu0
        %2747 = vdwg.mxu0
        %s2748 = scalar_lea.vmem %s9, 4
        %v2749 = vld [vmem:[%s2748] sm:$0x7]
        %v2751 = vsel %vm2671, %v2749, 0
        %2753 = vmatprep.subr.mxu0 0.0
        %2754 = vmatpush1.msra.mxu0 %v2676
        %2755 = vmatprep.subr.mxu0 0.0
        %2756 = vmatpush1.msra.mxu0 0.0
        %2757 = vmatprep.subr.mxu0 0.0
        %2758 = vmatpush1.msra.mxu0 0.0
        %2759 = vmatprep.subr.mxu0 0.0
        %2760 = vmatpush1.msra.mxu0 0.0
        %2761 = vmatprep.subr.mxu0 0.0
        %2762 = vmatpush1.msra.mxu0 0.0
        %2763 = vmatprep.subr.mxu0 0.0
        %2764 = vmatpush1.msra.mxu0 0.0
        %2765 = vmatprep.subr.mxu0 0.0
        %2766 = vmatpush1.msra.mxu0 0.0
        %2767 = vmatprep.subr.mxu0 0.0
        %2768 = vmatpush1.msra.mxu0 0.0
        %2769 = vmatprep.subr.mxu0 0.0
        %2770 = vmatpush1.msra.mxu0 0.0
        %2771 = vmatprep.subr.mxu0 0.0
        %2772 = vmatpush1.msra.mxu0 0.0
        %2773 = vmatprep.subr.mxu0 0.0
        %2774 = vmatpush1.msra.mxu0 0.0
        %2775 = vmatprep.subr.mxu0 0.0
        %2776 = vmatpush1.msra.mxu0 0.0
        %2777 = vmatprep.subr.mxu0 0.0
        %2778 = vmatpush1.msra.mxu0 0.0
        %2779 = vmatprep.subr.mxu0 0.0
        %2780 = vmatpush1.msra.mxu0 0.0
        %2781 = vmatprep.subr.mxu0 0.0
        %2782 = vmatpush1.msra.mxu0 0.0
        %2783 = vmatprep.subr.mxu0 0.0
        %2784 = vmatpush1.msra.mxu0 0.0
        %2785 = vmatprep.subr.mxu0 0.0
        %2786 = vmatpush1.msra.mxu0 0.0
        %2787 = vmatprep.subr.mxu0 0.0
        %2788 = vmatpush1.msra.mxu0 0.0
        %2789 = vmatprep.subr.mxu0 0.0
        %2790 = vmatpush1.msra.mxu0 0.0
        %2791 = vmatprep.subr.mxu0 0.0
        %2792 = vmatpush1.msra.mxu0 0.0
        %2793 = vmatprep.subr.mxu0 0.0
        %2794 = vmatpush1.msra.mxu0 0.0
        %2795 = vmatprep.subr.mxu0 0.0
        %2796 = vmatpush1.msra.mxu0 0.0
        %2797 = vmatprep.subr.mxu0 0.0
        %2798 = vmatpush1.msra.mxu0 0.0
        %2799 = vmatprep.subr.mxu0 0.0
        %2800 = vmatpush1.msra.mxu0 0.0
        %2801 = vmatprep.subr.mxu0 0.0
        %2802 = vmatpush1.msra.mxu0 0.0
        %2803 = vmatprep.subr.mxu0 0.0
        %2804 = vmatpush1.msra.mxu0 0.0
        %2805 = vmatprep.subr.mxu0 0.0
        %2806 = vmatpush1.msra.mxu0 0.0
        %2807 = vmatprep.subr.mxu0 0.0
        %2808 = vmatpush1.msra.mxu0 0.0
        %2809 = vmatprep.subr.mxu0 0.0
        %2810 = vmatpush1.msra.mxu0 0.0
        %2811 = vmatprep.subr.mxu0 0.0
        %2812 = vmatpush1.msra.mxu0 0.0
        %2813 = vmatprep.subr.mxu0 0.0
        %2814 = vmatpush1.msra.mxu0 0.0
        %2815 = vmatprep.subr.mxu0 0.0
        %2816 = vmatpush1.msra.mxu0 0.0
        %2817 = vmatprep.mubr.f32.mxu0 0.0
        %2818 = vmatmul.mubr.f32.gmra.mrb[0].mxu0 %v2751
        %v2819 = vpop.f32.mrb[0].mxu0
        %v2820 = vadd.f32 0.0, %v2819
        %v2821 = vpop.f32.mrb[0].mxu0
        %2822 = vdwg.mxu0
        %v2823 = vmax.f32 %v2745, %v2820
        %v2824 = vld [vmem:[%s11] sm:$0x1]
        %vm2825 = vcmask 23552
        %v2827 = vsel %vm2825, %v2824, 0
        %vm2829 = vcmask 1042432
        %v2831 = vsel %vm2829, %v2823, 0
        %2833 = vmatprep.subr.mxu0 0.0
        %2834 = vmatpush1.msra.mxu0 %v2831
        %2835 = vmatprep.subr.mxu0 0.0
        %2836 = vmatpush1.msra.mxu0 0.0
        %2837 = vmatprep.subr.mxu0 0.0
        %2838 = vmatpush1.msra.mxu0 0.0
        %2839 = vmatprep.subr.mxu0 0.0
        %2840 = vmatpush1.msra.mxu0 0.0
        %2841 = vmatprep.subr.mxu0 0.0
        %2842 = vmatpush1.msra.mxu0 0.0
        %2843 = vmatprep.subr.mxu0 0.0
        %2844 = vmatpush1.msra.mxu0 0.0
        %2845 = vmatprep.subr.mxu0 0.0
        %2846 = vmatpush1.msra.mxu0 0.0
        %2847 = vmatprep.subr.mxu0 0.0
        %2848 = vmatpush1.msra.mxu0 0.0
        %2849 = vmatprep.subr.mxu0 0.0
        %2850 = vmatpush1.msra.mxu0 0.0
        %2851 = vmatprep.subr.mxu0 0.0
        %2852 = vmatpush1.msra.mxu0 0.0
        %2853 = vmatprep.subr.mxu0 0.0
        %2854 = vmatpush1.msra.mxu0 0.0
        %2855 = vmatprep.subr.mxu0 0.0
        %2856 = vmatpush1.msra.mxu0 0.0
        %2857 = vmatprep.subr.mxu0 0.0
        %2858 = vmatpush1.msra.mxu0 0.0
        %2859 = vmatprep.subr.mxu0 0.0
        %2860 = vmatpush1.msra.mxu0 0.0
        %2861 = vmatprep.subr.mxu0 0.0
        %2862 = vmatpush1.msra.mxu0 0.0
        %2863 = vmatprep.subr.mxu0 0.0
        %2864 = vmatpush1.msra.mxu0 0.0
        %2865 = vmatprep.subr.mxu0 0.0
        %2866 = vmatpush1.msra.mxu0 0.0
        %2867 = vmatprep.subr.mxu0 0.0
        %2868 = vmatpush1.msra.mxu0 0.0
        %2869 = vmatprep.subr.mxu0 0.0
        %2870 = vmatpush1.msra.mxu0 0.0
        %2871 = vmatprep.subr.mxu0 0.0
        %2872 = vmatpush1.msra.mxu0 0.0
        %2873 = vmatprep.subr.mxu0 0.0
        %2874 = vmatpush1.msra.mxu0 0.0
        %2875 = vmatprep.subr.mxu0 0.0
        %2876 = vmatpush1.msra.mxu0 0.0
        %2877 = vmatprep.subr.mxu0 0.0
        %2878 = vmatpush1.msra.mxu0 0.0
        %2879 = vmatprep.subr.mxu0 0.0
        %2880 = vmatpush1.msra.mxu0 0.0
        %2881 = vmatprep.subr.mxu0 0.0
        %2882 = vmatpush1.msra.mxu0 0.0
        %2883 = vmatprep.subr.mxu0 0.0
        %2884 = vmatpush1.msra.mxu0 0.0
        %2885 = vmatprep.subr.mxu0 0.0
        %2886 = vmatpush1.msra.mxu0 0.0
        %2887 = vmatprep.subr.mxu0 0.0
        %2888 = vmatpush1.msra.mxu0 0.0
        %2889 = vmatprep.subr.mxu0 0.0
        %2890 = vmatpush1.msra.mxu0 0.0
        %2891 = vmatprep.subr.mxu0 0.0
        %2892 = vmatpush1.msra.mxu0 0.0
        %2893 = vmatprep.subr.mxu0 0.0
        %2894 = vmatpush1.msra.mxu0 0.0
        %2895 = vmatprep.subr.mxu0 0.0
        %2896 = vmatpush1.msra.mxu0 0.0
        %2897 = vmatprep.mubr.f32.mxu0 0.0
        %2898 = vmatmul.mubr.f32.gmra.mrb[0].mxu0 %v2827
        %v2899 = vpop.f32.mrb[0].mxu0
        %v2900 = vadd.f32 0.0, %v2899
        %v2901 = vpop.f32.mrb[0].mxu0
        %2902 = vdwg.mxu0
        %v2903 = vld [vmem:[%s12] sm:$0xff]
        %v2904 = vld [vmem:[%s12 + $0x8] sm:$0xff]
        %v2905 = vld [vmem:[%s12 + $0x10] sm:$0xff]
        %v2906 = vld [vmem:[%s12 + $0x18] sm:$0xff]
        %v2907 = vld [vmem:[%s12 + $0x20] sm:$0xff]
        %v2908 = vld [vmem:[%s12 + $0x28] sm:$0xff]
        %v2909 = vld [vmem:[%s12 + $0x30] sm:$0xff]
        %v2910 = vld [vmem:[%s12 + $0x38] sm:$0xff]
        %v2911 = vld [vmem:[%s12 + $0x40] sm:$0xff]
        %v2912 = vld [vmem:[%s12 + $0x48] sm:$0xff]
        %v2913 = vld [vmem:[%s12 + $0x50] sm:$0xff]
        %v2914 = vld [vmem:[%s12 + $0x58] sm:$0xff]
        %s2915 = scalar_lea.vmem %s11, 1
        %v2916 = vld [vmem:[%s2915] sm:$0x1]
        %v2918 = vsel %vm2825, %v2916, 0
        %2920 = vmatprep.subr.mxu0 0.0
        %2921 = vmatpush1.msra.mxu0 %v2831
        %2922 = vmatprep.subr.mxu0 0.0
        %2923 = vmatpush1.msra.mxu0 0.0
        %2924 = vmatprep.subr.mxu0 0.0
        %2925 = vmatpush1.msra.mxu0 0.0
        %2926 = vmatprep.subr.mxu0 0.0
        %2927 = vmatpush1.msra.mxu0 0.0
        %2928 = vmatprep.subr.mxu0 0.0
        %2929 = vmatpush1.msra.mxu0 0.0
        %2930 = vmatprep.subr.mxu0 0.0
        %2931 = vmatpush1.msra.mxu0 0.0
        %2932 = vmatprep.subr.mxu0 0.0
        %2933 = vmatpush1.msra.mxu0 0.0
        %2934 = vmatprep.subr.mxu0 0.0
        %2935 = vmatpush1.msra.mxu0 0.0
        %2936 = vmatprep.subr.mxu0 0.0
        %2937 = vmatpush1.msra.mxu0 0.0
        %2938 = vmatprep.subr.mxu0 0.0
        %2939 = vmatpush1.msra.mxu0 0.0
        %2940 = vmatprep.subr.mxu0 0.0
        %2941 = vmatpush1.msra.mxu0 0.0
        %2942 = vmatprep.subr.mxu0 0.0
        %2943 = vmatpush1.msra.mxu0 0.0
        %2944 = vmatprep.subr.mxu0 0.0
        %2945 = vmatpush1.msra.mxu0 0.0
        %2946 = vmatprep.subr.mxu0 0.0
        %2947 = vmatpush1.msra.mxu0 0.0
        %2948 = vmatprep.subr.mxu0 0.0
        %2949 = vmatpush1.msra.mxu0 0.0
        %2950 = vmatprep.subr.mxu0 0.0
        %2951 = vmatpush1.msra.mxu0 0.0
        %2952 = vmatprep.subr.mxu0 0.0
        %2953 = vmatpush1.msra.mxu0 0.0
        %2954 = vmatprep.subr.mxu0 0.0
        %2955 = vmatpush1.msra.mxu0 0.0
        %2956 = vmatprep.subr.mxu0 0.0
        %2957 = vmatpush1.msra.mxu0 0.0
        %2958 = vmatprep.subr.mxu0 0.0
        %2959 = vmatpush1.msra.mxu0 0.0
        %2960 = vmatprep.subr.mxu0 0.0
        %2961 = vmatpush1.msra.mxu0 0.0
        %2962 = vmatprep.subr.mxu0 0.0
        %2963 = vmatpush1.msra.mxu0 0.0
        %2964 = vmatprep.subr.mxu0 0.0
        %2965 = vmatpush1.msra.mxu0 0.0
        %2966 = vmatprep.subr.mxu0 0.0
        %2967 = vmatpush1.msra.mxu0 0.0
        %2968 = vmatprep.subr.mxu0 0.0
        %2969 = vmatpush1.msra.mxu0 0.0
        %2970 = vmatprep.subr.mxu0 0.0
        %2971 = vmatpush1.msra.mxu0 0.0
        %2972 = vmatprep.subr.mxu0 0.0
        %2973 = vmatpush1.msra.mxu0 0.0
        %2974 = vmatprep.subr.mxu0 0.0
        %2975 = vmatpush1.msra.mxu0 0.0
        %2976 = vmatprep.subr.mxu0 0.0
        %2977 = vmatpush1.msra.mxu0 0.0
        %2978 = vmatprep.subr.mxu0 0.0
        %2979 = vmatpush1.msra.mxu0 0.0
        %2980 = vmatprep.subr.mxu0 0.0
        %2981 = vmatpush1.msra.mxu0 0.0
        %2982 = vmatprep.subr.mxu0 0.0
        %2983 = vmatpush1.msra.mxu0 0.0
        %2984 = vmatprep.mubr.f32.mxu0 0.0
        %2985 = vmatmul.mubr.f32.gmra.mrb[0].mxu0 %v2918
        %v2986 = vpop.f32.mrb[0].mxu0
        %v2987 = vadd.f32 0.0, %v2986
        %v2988 = vpop.f32.mrb[0].mxu0
        %2989 = vdwg.mxu0
        %s2990 = scalar_lea.vmem %s12, 96
        %v2991 = vld [vmem:[%s2990] sm:$0xff]
        %v2992 = vld [vmem:[%s2990 + $0x8] sm:$0xff]
        %v2993 = vld [vmem:[%s2990 + $0x10] sm:$0xff]
        %v2994 = vld [vmem:[%s2990 + $0x18] sm:$0xff]
        %v2995 = vld [vmem:[%s2990 + $0x20] sm:$0xff]
        %v2996 = vld [vmem:[%s2990 + $0x28] sm:$0xff]
        %v2997 = vld [vmem:[%s2990 + $0x30] sm:$0xff]
        %v2998 = vld [vmem:[%s2990 + $0x38] sm:$0xff]
        %v2999 = vld [vmem:[%s2990 + $0x40] sm:$0xff]
        %v3000 = vld [vmem:[%s2990 + $0x48] sm:$0xff]
        %v3001 = vld [vmem:[%s2990 + $0x50] sm:$0xff]
        %v3002 = vld [vmem:[%s2990 + $0x58] sm:$0xff]
        %vm3003 = vcmask 785408
        %v3005 = vsel %vm3003, %v2987, 0
        %3007 = vmatprep.subr.mxu0 0.0
        %3008 = vmatpush1.msra.mxu0 %v2991
        %3009 = vmatprep.subr.mxu0 0.0
        %3010 = vmatpush1.msra.mxu0 %v2992
        %3011 = vmatprep.subr.mxu0 0.0
        %3012 = vmatpush1.msra.mxu0 %v2993
        %3013 = vmatprep.subr.mxu0 0.0
        %3014 = vmatpush1.msra.mxu0 %v2994
        %3015 = vmatprep.subr.mxu0 0.0
        %3016 = vmatpush1.msra.mxu0 %v2995
        %3017 = vmatprep.subr.mxu0 0.0
        %3018 = vmatpush1.msra.mxu0 %v2996
        %3019 = vmatprep.subr.mxu0 0.0
        %3020 = vmatpush1.msra.mxu0 %v2997
        %3021 = vmatprep.subr.mxu0 0.0
        %3022 = vmatpush1.msra.mxu0 %v2998
        %3023 = vmatprep.subr.mxu0 0.0
        %3024 = vmatpush1.msra.mxu0 %v2999
        %3025 = vmatprep.subr.mxu0 0.0
        %3026 = vmatpush1.msra.mxu0 %v3000
        %3027 = vmatprep.subr.mxu0 0.0
        %3028 = vmatpush1.msra.mxu0 %v3001
        %3029 = vmatprep.subr.mxu0 0.0
        %3030 = vmatpush1.msra.mxu0 %v3002
        %3031 = vmatprep.subr.mxu0 0.0
        %3032 = vmatpush1.msra.mxu0 0.0
        %3033 = vmatprep.subr.mxu0 0.0
        %3034 = vmatpush1.msra.mxu0 0.0
        %3035 = vmatprep.subr.mxu0 0.0
        %3036 = vmatpush1.msra.mxu0 0.0
        %3037 = vmatprep.subr.mxu0 0.0
        %3038 = vmatpush1.msra.mxu0 0.0
        %3039 = vmatprep.subr.mxu0 0.0
        %3040 = vmatpush1.msra.mxu0 0.0
        %3041 = vmatprep.subr.mxu0 0.0
        %3042 = vmatpush1.msra.mxu0 0.0
        %3043 = vmatprep.subr.mxu0 0.0
        %3044 = vmatpush1.msra.mxu0 0.0
        %3045 = vmatprep.subr.mxu0 0.0
        %3046 = vmatpush1.msra.mxu0 0.0
        %3047 = vmatprep.subr.mxu0 0.0
        %3048 = vmatpush1.msra.mxu0 0.0
        %3049 = vmatprep.subr.mxu0 0.0
        %3050 = vmatpush1.msra.mxu0 0.0
        %3051 = vmatprep.subr.mxu0 0.0
        %3052 = vmatpush1.msra.mxu0 0.0
        %3053 = vmatprep.subr.mxu0 0.0
        %3054 = vmatpush1.msra.mxu0 0.0
        %3055 = vmatprep.subr.mxu0 0.0
        %3056 = vmatpush1.msra.mxu0 0.0
        %3057 = vmatprep.subr.mxu0 0.0
        %3058 = vmatpush1.msra.mxu0 0.0
        %3059 = vmatprep.subr.mxu0 0.0
        %3060 = vmatpush1.msra.mxu0 0.0
        %3061 = vmatprep.subr.mxu0 0.0
        %3062 = vmatpush1.msra.mxu0 0.0
        %3063 = vmatprep.subr.mxu0 0.0
        %3064 = vmatpush1.msra.mxu0 0.0
        %3065 = vmatprep.subr.mxu0 0.0
        %3066 = vmatpush1.msra.mxu0 0.0
        %3067 = vmatprep.subr.mxu0 0.0
        %3068 = vmatpush1.msra.mxu0 0.0
        %3069 = vmatprep.subr.mxu0 0.0
        %3070 = vmatpush1.msra.mxu0 0.0
        %3071 = vmatprep.mubr.f32.mxu0 0.0
        %3072 = vmatmul.mubr.f32.gmra.mrb[0].mxu0 %v3005
        %v3073 = vpop.f32.mrb[0].mxu0
        %v3074 = vadd.f32 0.0, %v3073
        %v3075 = vpop.f32.mrb[0].mxu0
        %3076 = vdwg.mxu0
        %v3078 = vsel %vm3003, %v2900, 0
        %3080 = vmatprep.subr.mxu0 0.0
        %3081 = vmatpush1.msra.mxu0 %v2903
        %3082 = vmatprep.subr.mxu0 0.0
        %3083 = vmatpush1.msra.mxu0 %v2904
        %3084 = vmatprep.subr.mxu0 0.0
        %3085 = vmatpush1.msra.mxu0 %v2905
        %3086 = vmatprep.subr.mxu0 0.0
        %3087 = vmatpush1.msra.mxu0 %v2906
        %3088 = vmatprep.subr.mxu0 0.0
        %3089 = vmatpush1.msra.mxu0 %v2907
        %3090 = vmatprep.subr.mxu0 0.0
        %3091 = vmatpush1.msra.mxu0 %v2908
        %3092 = vmatprep.subr.mxu0 0.0
        %3093 = vmatpush1.msra.mxu0 %v2909
        %3094 = vmatprep.subr.mxu0 0.0
        %3095 = vmatpush1.msra.mxu0 %v2910
        %3096 = vmatprep.subr.mxu0 0.0
        %3097 = vmatpush1.msra.mxu0 %v2911
        %3098 = vmatprep.subr.mxu0 0.0
        %3099 = vmatpush1.msra.mxu0 %v2912
        %3100 = vmatprep.subr.mxu0 0.0
        %3101 = vmatpush1.msra.mxu0 %v2913
        %3102 = vmatprep.subr.mxu0 0.0
        %3103 = vmatpush1.msra.mxu0 %v2914
        %3104 = vmatprep.subr.mxu0 0.0
        %3105 = vmatpush1.msra.mxu0 0.0
        %3106 = vmatprep.subr.mxu0 0.0
        %3107 = vmatpush1.msra.mxu0 0.0
        %3108 = vmatprep.subr.mxu0 0.0
        %3109 = vmatpush1.msra.mxu0 0.0
        %3110 = vmatprep.subr.mxu0 0.0
        %3111 = vmatpush1.msra.mxu0 0.0
        %3112 = vmatprep.subr.mxu0 0.0
        %3113 = vmatpush1.msra.mxu0 0.0
        %3114 = vmatprep.subr.mxu0 0.0
        %3115 = vmatpush1.msra.mxu0 0.0
        %3116 = vmatprep.subr.mxu0 0.0
        %3117 = vmatpush1.msra.mxu0 0.0
        %3118 = vmatprep.subr.mxu0 0.0
        %3119 = vmatpush1.msra.mxu0 0.0
        %3120 = vmatprep.subr.mxu0 0.0
        %3121 = vmatpush1.msra.mxu0 0.0
        %3122 = vmatprep.subr.mxu0 0.0
        %3123 = vmatpush1.msra.mxu0 0.0
        %3124 = vmatprep.subr.mxu0 0.0
        %3125 = vmatpush1.msra.mxu0 0.0
        %3126 = vmatprep.subr.mxu0 0.0
        %3127 = vmatpush1.msra.mxu0 0.0
        %3128 = vmatprep.subr.mxu0 0.0
        %3129 = vmatpush1.msra.mxu0 0.0
        %3130 = vmatprep.subr.mxu0 0.0
        %3131 = vmatpush1.msra.mxu0 0.0
        %3132 = vmatprep.subr.mxu0 0.0
        %3133 = vmatpush1.msra.mxu0 0.0
        %3134 = vmatprep.subr.mxu0 0.0
        %3135 = vmatpush1.msra.mxu0 0.0
        %3136 = vmatprep.subr.mxu0 0.0
        %3137 = vmatpush1.msra.mxu0 0.0
        %3138 = vmatprep.subr.mxu0 0.0
        %3139 = vmatpush1.msra.mxu0 0.0
        %3140 = vmatprep.subr.mxu0 0.0
        %3141 = vmatpush1.msra.mxu0 0.0
        %3142 = vmatprep.subr.mxu0 0.0
        %3143 = vmatpush1.msra.mxu0 0.0
        %3144 = vmatprep.mubr.f32.mxu0 0.0
        %3145 = vmatmul.mubr.f32.gmra.mrb[0].mxu0 %v3078
        %v3146 = vpop.f32.mrb[0].mxu0
        %v3147 = vadd.f32 %v3074, %v3146
        %v3148 = vpop.f32.mrb[0].mxu0
        %3149 = vdwg.mxu0
        %s3150 = scalar_lea.vmem %s11, 2
        %v3151 = vld [vmem:[%s3150] sm:$0x1]
        %v3153 = vsel %vm2825, %v3151, 0
        %3155 = vmatprep.subr.mxu0 0.0
        %3156 = vmatpush1.msra.mxu0 %v2831
        %3157 = vmatprep.subr.mxu0 0.0
        %3158 = vmatpush1.msra.mxu0 0.0
        %3159 = vmatprep.subr.mxu0 0.0
        %3160 = vmatpush1.msra.mxu0 0.0
        %3161 = vmatprep.subr.mxu0 0.0
        %3162 = vmatpush1.msra.mxu0 0.0
        %3163 = vmatprep.subr.mxu0 0.0
        %3164 = vmatpush1.msra.mxu0 0.0
        %3165 = vmatprep.subr.mxu0 0.0
        %3166 = vmatpush1.msra.mxu0 0.0
        %3167 = vmatprep.subr.mxu0 0.0
        %3168 = vmatpush1.msra.mxu0 0.0
        %3169 = vmatprep.subr.mxu0 0.0
        %3170 = vmatpush1.msra.mxu0 0.0
        %3171 = vmatprep.subr.mxu0 0.0
        %3172 = vmatpush1.msra.mxu0 0.0
        %3173 = vmatprep.subr.mxu0 0.0
        %3174 = vmatpush1.msra.mxu0 0.0
        %3175 = vmatprep.subr.mxu0 0.0
        %3176 = vmatpush1.msra.mxu0 0.0
        %3177 = vmatprep.subr.mxu0 0.0
        %3178 = vmatpush1.msra.mxu0 0.0
        %3179 = vmatprep.subr.mxu0 0.0
        %3180 = vmatpush1.msra.mxu0 0.0
        %3181 = vmatprep.subr.mxu0 0.0
        %3182 = vmatpush1.msra.mxu0 0.0
        %3183 = vmatprep.subr.mxu0 0.0
        %3184 = vmatpush1.msra.mxu0 0.0
        %3185 = vmatprep.subr.mxu0 0.0
        %3186 = vmatpush1.msra.mxu0 0.0
        %3187 = vmatprep.subr.mxu0 0.0
        %3188 = vmatpush1.msra.mxu0 0.0
        %3189 = vmatprep.subr.mxu0 0.0
        %3190 = vmatpush1.msra.mxu0 0.0
        %3191 = vmatprep.subr.mxu0 0.0
        %3192 = vmatpush1.msra.mxu0 0.0
        %3193 = vmatprep.subr.mxu0 0.0
        %3194 = vmatpush1.msra.mxu0 0.0
        %3195 = vmatprep.subr.mxu0 0.0
        %3196 = vmatpush1.msra.mxu0 0.0
        %3197 = vmatprep.subr.mxu0 0.0
        %3198 = vmatpush1.msra.mxu0 0.0
        %3199 = vmatprep.subr.mxu0 0.0
        %3200 = vmatpush1.msra.mxu0 0.0
        %3201 = vmatprep.subr.mxu0 0.0
        %3202 = vmatpush1.msra.mxu0 0.0
        %3203 = vmatprep.subr.mxu0 0.0
        %3204 = vmatpush1.msra.mxu0 0.0
        %3205 = vmatprep.subr.mxu0 0.0
        %3206 = vmatpush1.msra.mxu0 0.0
        %3207 = vmatprep.subr.mxu0 0.0
        %3208 = vmatpush1.msra.mxu0 0.0
        %3209 = vmatprep.subr.mxu0 0.0
        %3210 = vmatpush1.msra.mxu0 0.0
        %3211 = vmatprep.subr.mxu0 0.0
        %3212 = vmatpush1.msra.mxu0 0.0
        %3213 = vmatprep.subr.mxu0 0.0
        %3214 = vmatpush1.msra.mxu0 0.0
        %3215 = vmatprep.subr.mxu0 0.0
        %3216 = vmatpush1.msra.mxu0 0.0
        %3217 = vmatprep.subr.mxu0 0.0
        %3218 = vmatpush1.msra.mxu0 0.0
        %3219 = vmatprep.mubr.f32.mxu0 0.0
        %3220 = vmatmul.mubr.f32.gmra.mrb[0].mxu0 %v3153
        %v3221 = vpop.f32.mrb[0].mxu0
        %v3222 = vadd.f32 0.0, %v3221
        %v3223 = vpop.f32.mrb[0].mxu0
        %3224 = vdwg.mxu0
        %s3225 = scalar_lea.vmem %s12, 192
        %v3226 = vld [vmem:[%s3225] sm:$0xff]
        %v3227 = vld [vmem:[%s3225 + $0x8] sm:$0xff]
        %v3228 = vld [vmem:[%s3225 + $0x10] sm:$0xff]
        %v3229 = vld [vmem:[%s3225 + $0x18] sm:$0xff]
        %v3230 = vld [vmem:[%s3225 + $0x20] sm:$0xff]
        %v3231 = vld [vmem:[%s3225 + $0x28] sm:$0xff]
        %v3232 = vld [vmem:[%s3225 + $0x30] sm:$0xff]
        %v3233 = vld [vmem:[%s3225 + $0x38] sm:$0xff]
        %v3234 = vld [vmem:[%s3225 + $0x40] sm:$0xff]
        %v3235 = vld [vmem:[%s3225 + $0x48] sm:$0xff]
        %v3236 = vld [vmem:[%s3225 + $0x50] sm:$0xff]
        %v3237 = vld [vmem:[%s3225 + $0x58] sm:$0xff]
        %v3239 = vsel %vm3003, %v3222, 0
        %3241 = vmatprep.subr.mxu0 0.0
        %3242 = vmatpush1.msra.mxu0 %v3226
        %3243 = vmatprep.subr.mxu0 0.0
        %3244 = vmatpush1.msra.mxu0 %v3227
        %3245 = vmatprep.subr.mxu0 0.0
        %3246 = vmatpush1.msra.mxu0 %v3228
        %3247 = vmatprep.subr.mxu0 0.0
        %3248 = vmatpush1.msra.mxu0 %v3229
        %3249 = vmatprep.subr.mxu0 0.0
        %3250 = vmatpush1.msra.mxu0 %v3230
        %3251 = vmatprep.subr.mxu0 0.0
        %3252 = vmatpush1.msra.mxu0 %v3231
        %3253 = vmatprep.subr.mxu0 0.0
        %3254 = vmatpush1.msra.mxu0 %v3232
        %3255 = vmatprep.subr.mxu0 0.0
        %3256 = vmatpush1.msra.mxu0 %v3233
        %3257 = vmatprep.subr.mxu0 0.0
        %3258 = vmatpush1.msra.mxu0 %v3234
        %3259 = vmatprep.subr.mxu0 0.0
        %3260 = vmatpush1.msra.mxu0 %v3235
        %3261 = vmatprep.subr.mxu0 0.0
        %3262 = vmatpush1.msra.mxu0 %v3236
        %3263 = vmatprep.subr.mxu0 0.0
        %3264 = vmatpush1.msra.mxu0 %v3237
        %3265 = vmatprep.subr.mxu0 0.0
        %3266 = vmatpush1.msra.mxu0 0.0
        %3267 = vmatprep.subr.mxu0 0.0
        %3268 = vmatpush1.msra.mxu0 0.0
        %3269 = vmatprep.subr.mxu0 0.0
        %3270 = vmatpush1.msra.mxu0 0.0
        %3271 = vmatprep.subr.mxu0 0.0
        %3272 = vmatpush1.msra.mxu0 0.0
        %3273 = vmatprep.subr.mxu0 0.0
        %3274 = vmatpush1.msra.mxu0 0.0
        %3275 = vmatprep.subr.mxu0 0.0
        %3276 = vmatpush1.msra.mxu0 0.0
        %3277 = vmatprep.subr.mxu0 0.0
        %3278 = vmatpush1.msra.mxu0 0.0
        %3279 = vmatprep.subr.mxu0 0.0
        %3280 = vmatpush1.msra.mxu0 0.0
        %3281 = vmatprep.subr.mxu0 0.0
        %3282 = vmatpush1.msra.mxu0 0.0
        %3283 = vmatprep.subr.mxu0 0.0
        %3284 = vmatpush1.msra.mxu0 0.0
        %3285 = vmatprep.subr.mxu0 0.0
        %3286 = vmatpush1.msra.mxu0 0.0
        %3287 = vmatprep.subr.mxu0 0.0
        %3288 = vmatpush1.msra.mxu0 0.0
        %3289 = vmatprep.subr.mxu0 0.0
        %3290 = vmatpush1.msra.mxu0 0.0
        %3291 = vmatprep.subr.mxu0 0.0
        %3292 = vmatpush1.msra.mxu0 0.0
        %3293 = vmatprep.subr.mxu0 0.0
        %3294 = vmatpush1.msra.mxu0 0.0
        %3295 = vmatprep.subr.mxu0 0.0
        %3296 = vmatpush1.msra.mxu0 0.0
        %3297 = vmatprep.subr.mxu0 0.0
        %3298 = vmatpush1.msra.mxu0 0.0
        %3299 = vmatprep.subr.mxu0 0.0
        %3300 = vmatpush1.msra.mxu0 0.0
        %3301 = vmatprep.subr.mxu0 0.0
        %3302 = vmatpush1.msra.mxu0 0.0
        %3303 = vmatprep.subr.mxu0 0.0
        %3304 = vmatpush1.msra.mxu0 0.0
        %3305 = vmatprep.mubr.f32.mxu0 0.0
        %3306 = vmatmul.mubr.f32.gmra.mrb[0].mxu0 %v3239
        %v3307 = vpop.f32.mrb[0].mxu0
        %v3308 = vadd.f32 0.0, %v3307
        %v3309 = vpop.f32.mrb[0].mxu0
        %3310 = vdwg.mxu0
        %v3311 = vadd.f32 %v3147, %v3308
        %v3312 = vld [vmem:[%s13] sm:$0x1]
        %v3313 = vadd.f32 %v3311, %v3312
        %v3314 = vmax.f32 %v3313, 0.0
        %v3315 = vld [vmem:[%s14] sm:$0xff]
        %v3316 = vld [vmem:[%s14 + $0x8] sm:$0xff]
        %v3317 = vld [vmem:[%s14 + $0x10] sm:$0xff]
        %v3318 = vld [vmem:[%s14 + $0x18] sm:$0xff]
        %v3319 = vld [vmem:[%s14 + $0x20] sm:$0xff]
        %v3320 = vld [vmem:[%s14 + $0x28] sm:$0xff]
        %v3321 = vld [vmem:[%s14 + $0x30] sm:$0xff]
        %v3322 = vld [vmem:[%s14 + $0x38] sm:$0xff]
        %v3323 = vld [vmem:[%s15] sm:$0x1]
        %v3325 = vsel %vm585, %v3314, 0
        %3327 = vmatprep.subr.mxu0 0.0
        %3328 = vmatpush1.msra.mxu0 %v3315
        %3329 = vmatprep.subr.mxu0 0.0
        %3330 = vmatpush1.msra.mxu0 %v3316
        %3331 = vmatprep.subr.mxu0 0.0
        %3332 = vmatpush1.msra.mxu0 %v3317
        %3333 = vmatprep.subr.mxu0 0.0
        %3334 = vmatpush1.msra.mxu0 %v3318
        %3335 = vmatprep.subr.mxu0 0.0
        %3336 = vmatpush1.msra.mxu0 %v3319
        %3337 = vmatprep.subr.mxu0 0.0
        %3338 = vmatpush1.msra.mxu0 %v3320
        %3339 = vmatprep.subr.mxu0 0.0
        %3340 = vmatpush1.msra.mxu0 %v3321
        %3341 = vmatprep.subr.mxu0 0.0
        %3342 = vmatpush1.msra.mxu0 %v3322
        %3343 = vmatprep.subr.mxu0 0.0
        %3344 = vmatpush1.msra.mxu0 0.0
        %3345 = vmatprep.subr.mxu0 0.0
        %3346 = vmatpush1.msra.mxu0 0.0
        %3347 = vmatprep.subr.mxu0 0.0
        %3348 = vmatpush1.msra.mxu0 0.0
        %3349 = vmatprep.subr.mxu0 0.0
        %3350 = vmatpush1.msra.mxu0 0.0
        %3351 = vmatprep.subr.mxu0 0.0
        %3352 = vmatpush1.msra.mxu0 0.0
        %3353 = vmatprep.subr.mxu0 0.0
        %3354 = vmatpush1.msra.mxu0 0.0
        %3355 = vmatprep.subr.mxu0 0.0
        %3356 = vmatpush1.msra.mxu0 0.0
        %3357 = vmatprep.subr.mxu0 0.0
        %3358 = vmatpush1.msra.mxu0 0.0
        %3359 = vmatprep.subr.mxu0 0.0
        %3360 = vmatpush1.msra.mxu0 0.0
        %3361 = vmatprep.subr.mxu0 0.0
        %3362 = vmatpush1.msra.mxu0 0.0
        %3363 = vmatprep.subr.mxu0 0.0
        %3364 = vmatpush1.msra.mxu0 0.0
        %3365 = vmatprep.subr.mxu0 0.0
        %3366 = vmatpush1.msra.mxu0 0.0
        %3367 = vmatprep.subr.mxu0 0.0
        %3368 = vmatpush1.msra.mxu0 0.0
        %3369 = vmatprep.subr.mxu0 0.0
        %3370 = vmatpush1.msra.mxu0 0.0
        %3371 = vmatprep.subr.mxu0 0.0
        %3372 = vmatpush1.msra.mxu0 0.0
        %3373 = vmatprep.subr.mxu0 0.0
        %3374 = vmatpush1.msra.mxu0 0.0
        %3375 = vmatprep.subr.mxu0 0.0
        %3376 = vmatpush1.msra.mxu0 0.0
        %3377 = vmatprep.subr.mxu0 0.0
        %3378 = vmatpush1.msra.mxu0 0.0
        %3379 = vmatprep.subr.mxu0 0.0
        %3380 = vmatpush1.msra.mxu0 0.0
        %3381 = vmatprep.subr.mxu0 0.0
        %3382 = vmatpush1.msra.mxu0 0.0
        %3383 = vmatprep.subr.mxu0 0.0
        %3384 = vmatpush1.msra.mxu0 0.0
        %3385 = vmatprep.subr.mxu0 0.0
        %3386 = vmatpush1.msra.mxu0 0.0
        %3387 = vmatprep.subr.mxu0 0.0
        %3388 = vmatpush1.msra.mxu0 0.0
        %3389 = vmatprep.subr.mxu0 0.0
        %3390 = vmatpush1.msra.mxu0 0.0
        %3391 = vmatprep.mubr.f32.mxu0 0.0
        %3392 = vmatmul.mubr.f32.gmra.mrb[0].mxu0 %v3325
        %v3393 = vpop.f32.mrb[0].mxu0
        %v3394 = vadd.f32 %v3323, %v3393
        %v3395 = vpop.f32.mrb[0].mxu0
        %3396 = vdwg.mxu0
        %v3397 = vmax.f32 %v3394, 0.0
        %v3398 = vld [vmem:[%s16] sm:$0xff]
        %v3399 = vld [vmem:[%s16 + $0x8] sm:$0xff]
        %v3400 = vld [vmem:[%s16 + $0x10] sm:$0xff]
        %v3401 = vld [vmem:[%s16 + $0x18] sm:$0xff]
        %v3402 = vld [vmem:[%s16 + $0x20] sm:$0xff]
        %v3403 = vld [vmem:[%s16 + $0x28] sm:$0xff]
        %v3404 = vld [vmem:[%s16 + $0x30] sm:$0xff]
        %v3405 = vld [vmem:[%s16 + $0x38] sm:$0xff]
        %v3406 = vld [vmem:[%s16 + $0x40] sm:$0xff]
        %v3407 = vld [vmem:[%s16 + $0x48] sm:$0xff]
        %v3408 = vld [vmem:[%s16 + $0x50] sm:$0xff]
        %v3409 = vld [vmem:[%s16 + $0x58] sm:$0xff]
        %v3410 = vld [vmem:[%s16 + $0x60] sm:$0xff]
        %v3411 = vld [vmem:[%s16 + $0x68] sm:$0xff]
        %v3412 = vld [vmem:[%s16 + $0x70] sm:$0xff]
        %v3413 = vld [vmem:[%s16 + $0x78] sm:$0xff]
        %v3414 = vld [vmem:[%s17] sm:$0x1]
        %3415 = vmatprep.subr.mxu0 0.0
        %3416 = vmatpush1.msra.mxu0 %v3398
        %3417 = vmatprep.subr.mxu0 0.0
        %3418 = vmatpush1.msra.mxu0 %v3399
        %3419 = vmatprep.subr.mxu0 0.0
        %3420 = vmatpush1.msra.mxu0 %v3400
        %3421 = vmatprep.subr.mxu0 0.0
        %3422 = vmatpush1.msra.mxu0 %v3401
        %3423 = vmatprep.subr.mxu0 0.0
        %3424 = vmatpush1.msra.mxu0 %v3402
        %3425 = vmatprep.subr.mxu0 0.0
        %3426 = vmatpush1.msra.mxu0 %v3403
        %3427 = vmatprep.subr.mxu0 0.0
        %3428 = vmatpush1.msra.mxu0 %v3404
        %3429 = vmatprep.subr.mxu0 0.0
        %3430 = vmatpush1.msra.mxu0 %v3405
        %3431 = vmatprep.subr.mxu0 0.0
        %3432 = vmatpush1.msra.mxu0 %v3406
        %3433 = vmatprep.subr.mxu0 0.0
        %3434 = vmatpush1.msra.mxu0 %v3407
        %3435 = vmatprep.subr.mxu0 0.0
        %3436 = vmatpush1.msra.mxu0 %v3408
        %3437 = vmatprep.subr.mxu0 0.0
        %3438 = vmatpush1.msra.mxu0 %v3409
        %3439 = vmatprep.subr.mxu0 0.0
        %3440 = vmatpush1.msra.mxu0 %v3410
        %3441 = vmatprep.subr.mxu0 0.0
        %3442 = vmatpush1.msra.mxu0 %v3411
        %3443 = vmatprep.subr.mxu0 0.0
        %3444 = vmatpush1.msra.mxu0 %v3412
        %3445 = vmatprep.subr.mxu0 0.0
        %3446 = vmatpush1.msra.mxu0 %v3413
        %3447 = vmatprep.subr.mxu0 0.0
        %3448 = vmatpush1.msra.mxu0 0.0
        %3449 = vmatprep.subr.mxu0 0.0
        %3450 = vmatpush1.msra.mxu0 0.0
        %3451 = vmatprep.subr.mxu0 0.0
        %3452 = vmatpush1.msra.mxu0 0.0
        %3453 = vmatprep.subr.mxu0 0.0
        %3454 = vmatpush1.msra.mxu0 0.0
        %3455 = vmatprep.subr.mxu0 0.0
        %3456 = vmatpush1.msra.mxu0 0.0
        %3457 = vmatprep.subr.mxu0 0.0
        %3458 = vmatpush1.msra.mxu0 0.0
        %3459 = vmatprep.subr.mxu0 0.0
        %3460 = vmatpush1.msra.mxu0 0.0
        %3461 = vmatprep.subr.mxu0 0.0
        %3462 = vmatpush1.msra.mxu0 0.0
        %3463 = vmatprep.subr.mxu0 0.0
        %3464 = vmatpush1.msra.mxu0 0.0
        %3465 = vmatprep.subr.mxu0 0.0
        %3466 = vmatpush1.msra.mxu0 0.0
        %3467 = vmatprep.subr.mxu0 0.0
        %3468 = vmatpush1.msra.mxu0 0.0
        %3469 = vmatprep.subr.mxu0 0.0
        %3470 = vmatpush1.msra.mxu0 0.0
        %3471 = vmatprep.subr.mxu0 0.0
        %3472 = vmatpush1.msra.mxu0 0.0
        %3473 = vmatprep.subr.mxu0 0.0
        %3474 = vmatpush1.msra.mxu0 0.0
        %3475 = vmatprep.subr.mxu0 0.0
        %3476 = vmatpush1.msra.mxu0 0.0
        %3477 = vmatprep.subr.mxu0 0.0
        %3478 = vmatpush1.msra.mxu0 0.0
        %3479 = vmatprep.mubr.f32.mxu0 0.0
        %3480 = vmatmul.mubr.f32.gmra.mrb[0].mxu0 %v3397
        %v3481 = vpop.f32.mrb[0].mxu0
        %v3482 = vadd.f32 %v3414, %v3481
        %v3483 = vpop.f32.mrb[0].mxu0
        %3484 = vdwg.mxu0
        %vm3485 = vcmask 24576
        %v3486 = vsel %vm3485, %v3482, -inf
        %3487 = vmax.xlane.f32.xlu0 %v3486
        %v3488 = vpop.xlane.xlu0 %3487
        %v3489 = vsub.f32 %v3482, %v3488
        %v3490 = vmul.f32 %v3489, 1.442695
        %v3491 = vpow.pop %v3490
        %v3492 = vsel %vm3485, %v3491, 0.0
        %3493 = vadd.xlane.f32.xlu0 %v3492
        %v3494 = vpop.xlane.xlu0 %3493
        %v3495 = vrcp.pop %v3494
        %v3496 = vmul.f32 %v3491, %v3495
        %3497 = vst.msk [vmem:[%s567] sm:$0x1] %vm3485, %v3496
        %s3498 = sand.u32 %s423, 1
        %s3499 = scalar_lea.sflag [#allocation3], %s3498
        %s3500 = sand.u32 %s423, 1
        %s3501 = scalar_lea.vmem [#allocation2], %s3500
        // Predicated region
        $region93: #{cnn_forward.1} parent=91 // pred_check
          %p3502 = pneg %p433
        $region94: #{cnn_forward.1} parent=91 // pred_check_branch
          %3504 = sbr.rel (%p3502) target = $region96
        $region95: #{cnn_forward.1} parent=91 // pred_region
          %s3506 = ssub.s32 16, 16
          %3507 = vsyncadd %s3499, %s3506
          %s3508 = smul.addr %s32, 16
          %s3509 = scalar_lea.hbm %s18, %s3508
          %s3511 = sshll.u32 %s3501, 4
          %s3512 = int_to_ptr.vmem [resolvable:$true] %s3511
          %3514 = dma.vmem_to_hbm [thread:$0]  %s3512, 16, %s3509, %s3499
        $region96: #{cnn_forward.1} parent=91 // pred_fallthru
          _
      $region92: #{cnn_forward.1} parent=5 // pred_fallthru
        _
      %p3515 = scmp.le.s32.totalorder 2, %s27
      // Predicated region
      $region97: #{cnn_forward.1} parent=5 // pred_check
        %p3516 = pneg %p3515
      $region98: #{cnn_forward.1} parent=5 // pred_check_branch
        %3518 = sbr.rel (%p3516) target = $region100
      $region99: #{cnn_forward.1} parent=5 // pred_region
        %s3519 = ssub.s32 %s27, 2
        // Predicated region
        $region101: #{cnn_forward.1} parent=99 // pred_check
          %p3520 = pneg %p439
        $region102: #{cnn_forward.1} parent=99 // pred_check_branch
          %3522 = sbr.rel (%p3520) target = $region104
        $region103: #{cnn_forward.1} parent=99 // pred_region
          %s3523 = sand.u32 %s424, 1
          %s3524 = scalar_lea.sflag [#allocation3], %s3523
          %s3525 = sand.u32 %s424, 1
          %s3526 = scalar_lea.vmem [#allocation2], %s3525
          %3527 = dma.done %s3524, 16
        $region104: #{cnn_forward.1} parent=99 // pred_fallthru
          _
      $region100: #{cnn_forward.1} parent=5 // pred_fallthru
        _
    $region6: #{cnn_forward.1} parent=1 // loop_footer
      %s31 = sadd.s32 1, %s27
    $region7: #{cnn_forward.1} parent=1 // loop_footer_branch
      %26 = sbr.rel target = $region3
    $region8: #{cnn_forward.1} parent=1 // loop_exit
      _
    %3528 = vsyncpa [#allocation3], 1
    %s3529 = scalar_lea.sflag [#allocation3], 1
    %3530 = vsyncpa %s3529, 1

</llo_original>
